<compile_context>
chip_gen: v5e
topology: v5e:2x2
jax: 0.10.0
libtpu: 0.0.40
codegen_flags: <defaults>
</compile_context>

<pallas_src>
import math

import jax
import jax.numpy as jnp
from jax import lax
from jax.experimental import pallas as pl
from jax.experimental.pallas import tpu as pltpu

# ---------------- configuration (small, consistent with the module) ----------
NUM_HEADS = 4
NODE_DIM = 32
NODE_HIDDEN = 64
EDGE_DIM = 32
EDGE_HIDDEN_1 = 64
EDGE_HIDDEN_2 = 64
NUM_EXPERTS = 8
HEAD_DIM = NODE_DIM // NUM_HEADS
SCALE = 1.0 / math.sqrt(HEAD_DIM)
LN_EPS = 1e-5


# ---------------- in-kernel helpers (operate on jnp values) -------------------
def _dot(a, b):
    return jnp.dot(a, b, preferred_element_type=jnp.float32)


def _softmax(x):
    m = jnp.max(x, axis=-1, keepdims=True)
    e = jnp.exp(x - m)
    return e * pl.reciprocal(jnp.sum(e, axis=-1, keepdims=True), approx=True)


def _ln(x, g, b):
    mu = jnp.mean(x, axis=-1, keepdims=True)
    xc = x - mu
    var = jnp.mean(xc * xc, axis=-1, keepdims=True)
    return xc * lax.rsqrt(var + LN_EPS) * g + b


def _moe(x, gw, gb, w1s, b1s, w2s, b2s, sel):
    # dense soft-gated MoE, restructured into 2 lane-dense matmuls:
    #   sum_e gate_e * (relu(x@w1_e+b1_e) @ w2_e + b2_e)
    #     == (relu(x@[w1_0|...|w1_7]) * (gate@S)) @ vstack(w2_e) + gate@[b2_e]
    gate = _softmax(_dot(x, gw) + gb)                      # (T, 8)
    h = jnp.maximum(_dot(x, w1s) + b1s, 0.0)               # (T, 8*H)
    return _dot(h * _dot(gate, sel), w2s) + _dot(gate, b2s)


# ---------------- fused layer kernel ------------------------------------------
def _fused_kernel(*refs):
    (n_ref, e_ref, g_ref,
     wqkv_n, bqkv_n, wqkv_e, bqkv_e, wo, bo,
     ln1n_g, ln1n_b, ln2n_g, ln2n_b, ln1e_g, ln1e_b, ln2e_g, ln2e_b,
     sel_ref,
     gw_n, gb_n, w1_n, b1_n, w2_n, b2_n,
     gw_1x, gw_1a, gb_1, w1_1x, w1_1a, b1_1, w2_1, b2_1,
     gw_2, gb_2, w1_2, b1_2, w2_2, b2_2,
     node_out, edge_out) = refs

    x_n = n_ref[0]                                   # (N, Dn)
    x_e = e_ref[0]                                   # (E, De)
    G = g_ref[0]                                     # (E, N)
    sel = sel_ref[...]                               # (8, 8*H) one-hot expander

    # 'avg' aggregation reciprocals, computed once and reused.
    inv_col = 1.0 / jnp.sum(G, axis=0)[:, None]              # (N, 1) node-side
    inv_row = 1.0 / jnp.sum(G, axis=1, keepdims=True)        # (E, 1) edge-side

    # ---------------- node attention ----------------
    qkv_e = _dot(x_e, wqkv_e[...]) + bqkv_e[...]             # (E, 3*Dn)
    # agg[n, c] = (sum_e G[e,n] * qkv_e[e,c]) / sum_e G[e,n]   ( == G^T @ qkv_e )
    agg_n = lax.dot_general(G, qkv_e, (((0,), (0,)), ((), ())),
                            preferred_element_type=jnp.float32) * inv_col
    qkv = _dot(x_n, wqkv_n[...]) + bqkv_n[...] + agg_n       # (N, 3*Dn)

    wo_v = wo[...]
    attn = jnp.zeros((x_n.shape[0], NODE_DIM), jnp.float32)
    for h in range(NUM_HEADS):                               # static unroll
        base = 3 * HEAD_DIM * h
        q = qkv[:, base:base + HEAD_DIM]
        k = qkv[:, base + HEAD_DIM:base + 2 * HEAD_DIM]
        v = qkv[:, base + 2 * HEAD_DIM:base + 3 * HEAD_DIM]
        s = lax.dot_general(q, k, (((1,), (1,)), ((), ())),
                            preferred_element_type=jnp.float32) * SCALE
        o_h = _dot(_softmax(s), v)                           # (N, Dh)
        # fold proj_o into the head loop -> no head concat needed
        attn = attn + _dot(o_h, wo_v[h * HEAD_DIM:(h + 1) * HEAD_DIM, :])
    attn = attn + bo[...]

    node1 = _ln(x_n + attn, ln1n_g[...], ln1n_b[...])
    ffn_n = _moe(node1, gw_n[...], gb_n[...], w1_n[...], b1_n[...],
                 w2_n[...], b2_n[...], sel)
    node2 = _ln(node1 + ffn_n, ln2n_g[...], ln2n_b[...])
    node_out[0] = node2

    # ---------------- edge update ----------------
    agg_e = _dot(G, node2) * inv_row                         # (E, Dn)
    # concat-free e1 MoE:  cat(edge, agg) @ W == edge @ W[:De] + agg @ W[De:]
    gate1 = _softmax(_dot(x_e, gw_1x[...]) + _dot(agg_e, gw_1a[...]) + gb_1[...])
    h1 = jnp.maximum(_dot(x_e, w1_1x[...]) + _dot(agg_e, w1_1a[...]) + b1_1[...],
                     0.0)                                    # (E, 8*H)
    y1 = _dot(h1 * _dot(gate1, sel), w2_1[...]) + _dot(gate1, b2_1[...])
    edge1 = _ln(x_e + y1, ln1e_g[...], ln1e_b[...])

    y2 = _moe(edge1, gw_2[...], gb_2[...], w1_2[...], b1_2[...],
              w2_2[...], b2_2[...], sel)
    edge2 = _ln(edge1 + y2, ln2e_g[...], ln2e_b[...])
    edge_out[0] = edge2


# ---------------- pallas_call wrapper ------------------------------------------
def _param_spec(shape):
    n = len(shape)
    return pl.BlockSpec(shape, lambda b: (0,) * n)


def _batch_spec(inner_shape):
    n = len(inner_shape)
    return pl.BlockSpec((1,) + tuple(inner_shape), lambda b: (b,) + (0,) * n)


def hrt_transformer_layer(node, edge, G, flat_params):
    B, N, _ = node.shape
    _, E, _ = edge.shape
    in_specs = ([_batch_spec((N, NODE_DIM)),
                 _batch_spec((E, EDGE_DIM)),
                 _batch_spec((E, N))]
                + [_param_spec(tuple(w.shape)) for w in flat_params])
    out_specs = (_batch_spec((N, NODE_DIM)), _batch_spec((E, EDGE_DIM)))
    out_shape = (jax.ShapeDtypeStruct((B, N, NODE_DIM), jnp.float32),
                 jax.ShapeDtypeStruct((B, E, EDGE_DIM), jnp.float32))
    return pl.pallas_call(
        _fused_kernel,
        out_shape=out_shape,
        grid=(B,),
        in_specs=in_specs,
        out_specs=out_specs,
        compiler_params=pltpu.CompilerParams(
            dimension_semantics=("parallel",)),     # megacore-shards B on v7x
    )(node, edge, G, *flat_params)


# ---------------- parameter init (PyTorch-style layout) ------------------------
def _linear_init(key, din, dout):
    k1, k2 = jax.random.split(key)
    lim = 1.0 / math.sqrt(din)
    w = jax.random.uniform(k1, (din, dout), jnp.float32, -lim, lim)
    b = jax.random.uniform(k2, (1, dout), jnp.float32, -lim, lim)
    return w, b


def _moe_init(key, din, hidden, dout):
    ks = jax.random.split(key, 6)
    lg, l1, l2 = 1.0 / math.sqrt(din), 1.0 / math.sqrt(din), 1.0 / math.sqrt(hidden)
    return dict(
        gw=jax.random.uniform(ks[0], (din, NUM_EXPERTS), jnp.float32, -lg, lg),
        gb=jax.random.uniform(ks[1], (1, NUM_EXPERTS), jnp.float32, -lg, lg),
        w1=jax.random.uniform(ks[2], (NUM_EXPERTS, din, hidden), jnp.float32, -l1, l1),
        b1=jax.random.uniform(ks[3], (NUM_EXPERTS, 1, hidden), jnp.float32, -l1, l1),
        w2=jax.random.uniform(ks[4], (NUM_EXPERTS, hidden, dout), jnp.float32, -l2, l2),
        b2=jax.random.uniform(ks[5], (NUM_EXPERTS, 1, dout), jnp.float32, -l2, l2),
    )


def init_params(key):
    ks = jax.random.split(key, 8)
    wqkv_n, bqkv_n = _linear_init(ks[0], NODE_DIM, 3 * NODE_DIM)
    wqkv_e, bqkv_e = _linear_init(ks[1], EDGE_DIM, 3 * NODE_DIM)
    wo, bo = _linear_init(ks[2], NODE_DIM, NODE_DIM)
    ones = lambda d: jnp.ones((1, d), jnp.float32)
    zeros = lambda d: jnp.zeros((1, d), jnp.float32)
    return dict(
        att=dict(wqkv_n=wqkv_n, bqkv_n=bqkv_n, wqkv_e=wqkv_e, bqkv_e=bqkv_e,
                 wo=wo, bo=bo),
        moe_n=_moe_init(ks[3], NODE_DIM, NODE_HIDDEN, NODE_DIM),
        moe_e1=_moe_init(ks[4], NODE_DIM + EDGE_DIM, EDGE_HIDDEN_1, EDGE_DIM),
        moe_e2=_moe_init(ks[5], EDGE_DIM, EDGE_HIDDEN_2, EDGE_DIM),
        ln1n_g=ones(NODE_DIM), ln1n_b=zeros(NODE_DIM),
        ln2n_g=ones(NODE_DIM), ln2n_b=zeros(NODE_DIM),
        ln1e_g=ones(EDGE_DIM), ln1e_b=zeros(EDGE_DIM),
        ln2e_g=ones(EDGE_DIM), ln2e_b=zeros(EDGE_DIM),
    )


def prepare_params(p):
    """Host-side repack of weights into the fused-kernel layout (done once)."""
    assert NODE_HIDDEN == EDGE_HIDDEN_1 == EDGE_HIDDEN_2
    hidden = NODE_HIDDEN

    def stack_moe(mp):
        din = mp["w1"].shape[1]
        w1s = jnp.transpose(mp["w1"], (1, 0, 2)).reshape(din, NUM_EXPERTS * hidden)
        b1s = mp["b1"].reshape(1, NUM_EXPERTS * hidden)
        w2s = mp["w2"].reshape(NUM_EXPERTS * hidden, mp["w2"].shape[-1])
        b2s = mp["b2"].reshape(NUM_EXPERTS, mp["w2"].shape[-1])
        return mp["gw"], mp["gb"], w1s, b1s, w2s, b2s

    a = p["att"]
    gw_n, gb_n, w1_n, b1_n, w2_n, b2_n = stack_moe(p["moe_n"])
    gw_1, gb_1, w1_1, b1_1, w2_1, b2_1 = stack_moe(p["moe_e1"])
    gw_2, gb_2, w1_2, b1_2, w2_2, b2_2 = stack_moe(p["moe_e2"])
    # one-hot gate expander: (gate @ sel)[t, e*H + j] == gate[t, e]
    sel = jnp.repeat(jnp.eye(NUM_EXPERTS, dtype=jnp.float32), hidden, axis=1)

    flat = [
        a["wqkv_n"], a["bqkv_n"], a["wqkv_e"], a["bqkv_e"], a["wo"], a["bo"],
        p["ln1n_g"], p["ln1n_b"], p["ln2n_g"], p["ln2n_b"],
        p["ln1e_g"], p["ln1e_b"], p["ln2e_g"], p["ln2e_b"],
        sel,
        gw_n, gb_n, w1_n, b1_n, w2_n, b2_n,
        # e1 MoE row-split: first EDGE_DIM rows act on edge, rest on aggregated nodes
        gw_1[:EDGE_DIM], gw_1[EDGE_DIM:], gb_1,
        w1_1[:EDGE_DIM], w1_1[EDGE_DIM:], b1_1, w2_1, b2_1,
        gw_2, gb_2, w1_2, b1_2, w2_2, b2_2,
    ]
    return [jnp.asarray(w) for w in flat]


# ---------------- pure-JAX reference (for verification) -----------------------
def _ref_ln(x, g, b):
    mu = x.mean(-1, keepdims=True)
    var = ((x - mu) ** 2).mean(-1, keepdims=True)
    return (x - mu) * lax.rsqrt(var + LN_EPS) * g + b


def _ref_moe(x, mp):
    gate = jax.nn.softmax(x @ mp["gw"] + mp["gb"], axis=-1)
    h = jax.nn.relu(jnp.einsum("btd,edh->beth", x, mp["w1"]) + mp["b1"][None])
    y = jnp.einsum("beth,eho->beto", h, mp["w2"]) + mp["b2"][None]
    return jnp.einsum("bte,beto->bto", gate, y)


def ref_forward(node, edge, G, p):
    B, N, Dn = node.shape
    a = p["att"]
    qkv_n = node @ a["wqkv_n"] + a["bqkv_n"]
    qkv_e = edge @ a["wqkv_e"] + a["bqkv_e"]
    div_n = jnp.sum(G, axis=1)[:, :, None]
    qkv = qkv_n + jnp.einsum("ben,bec->bnc", G, qkv_e) / div_n
    qkv = qkv.reshape(B, N, NUM_HEADS, 3 * HEAD_DIM).transpose(0, 2, 1, 3)
    q, k, v = jnp.split(qkv, 3, axis=-1)
    att = jax.nn.softmax(jnp.einsum("bhqc,bhkc->bhqk", q, k) * SCALE, axis=-1)
    o = jnp.einsum("bhqk,bhkc->bhqc", att, v).transpose(0, 2, 1, 3).reshape(B, N, Dn)
    attn_out = o @ a["wo"] + a["bo"]

    node = _ref_ln(node + attn_out, p["ln1n_g"], p["ln1n_b"])
    node = _ref_ln(node + _ref_moe(node, p["moe_n"]), p["ln2n_g"], p["ln2n_b"])

    div_e = jnp.sum(G, axis=-1)[:, :, None]
    cat = jnp.concatenate([edge, jnp.einsum("ben,bnd->bed", G, node) / div_e], axis=-1)
    edge = _ref_ln(edge + _ref_moe(cat, p["moe_e1"]), p["ln1e_g"], p["ln1e_b"])
    edge = _ref_ln(edge + _ref_moe(edge, p["moe_e2"]), p["ln2e_g"], p["ln2e_b"])
    return node, edge


# ---------------- main ---------------------------------------------------------
if __name__ == "__main__":
    key = jax.random.PRNGKey(0)
    k_node, k_edge, k_G, k_params = jax.random.split(key, 4)

    B, N, E = 2, 8, 12
    node = jax.random.normal(k_node, (B, N, NODE_DIM), jnp.float32)
    edge = jax.random.normal(k_edge, (B, E, EDGE_DIM), jnp.float32)
    # strictly positive incidence so 'avg' aggregation never divides by zero
    G = jax.random.uniform(k_G, (B, E, N), jnp.float32, 0.1, 1.0)

    params = init_params(k_params)
    flat_params = prepare_params(params)

    node_out, edge_out = hrt_transformer_layer(node, edge, G, flat_params)
    node_out = jax.block_until_ready(node_out)
    edge_out = jax.block_until_ready(edge_out)

    ref_node, ref_edge = ref_forward(node, edge, G, params)
    assert jnp.allclose(node_out, ref_node, rtol=2e-3, atol=2e-3)
    assert jnp.allclose(edge_out, ref_edge, rtol=2e-3, atol=2e-3)

    print("KERNEL_OK")
</pallas_src>

<mosaic_0001>
module attributes {stable_mosaic.version = 11 : i64} {
  func.func @_fused_kernel(%arg0: i32, %arg1: memref<1x8x32xf32, #tpu.memory_space<vmem>>, %arg2: memref<1x12x32xf32, #tpu.memory_space<vmem>>, %arg3: memref<1x12x8xf32, #tpu.memory_space<vmem>>, %arg4: memref<32x96xf32, #tpu.memory_space<vmem>>, %arg5: memref<1x96xf32, #tpu.memory_space<vmem>>, %arg6: memref<32x96xf32, #tpu.memory_space<vmem>>, %arg7: memref<1x96xf32, #tpu.memory_space<vmem>>, %arg8: memref<32x32xf32, #tpu.memory_space<vmem>>, %arg9: memref<1x32xf32, #tpu.memory_space<vmem>>, %arg10: memref<1x32xf32, #tpu.memory_space<vmem>>, %arg11: memref<1x32xf32, #tpu.memory_space<vmem>>, %arg12: memref<1x32xf32, #tpu.memory_space<vmem>>, %arg13: memref<1x32xf32, #tpu.memory_space<vmem>>, %arg14: memref<1x32xf32, #tpu.memory_space<vmem>>, %arg15: memref<1x32xf32, #tpu.memory_space<vmem>>, %arg16: memref<1x32xf32, #tpu.memory_space<vmem>>, %arg17: memref<1x32xf32, #tpu.memory_space<vmem>>, %arg18: memref<8x512xf32, #tpu.memory_space<vmem>>, %arg19: memref<32x8xf32, #tpu.memory_space<vmem>>, %arg20: memref<1x8xf32, #tpu.memory_space<vmem>>, %arg21: memref<32x512xf32, #tpu.memory_space<vmem>>, %arg22: memref<1x512xf32, #tpu.memory_space<vmem>>, %arg23: memref<512x32xf32, #tpu.memory_space<vmem>>, %arg24: memref<8x32xf32, #tpu.memory_space<vmem>>, %arg25: memref<32x8xf32, #tpu.memory_space<vmem>>, %arg26: memref<32x8xf32, #tpu.memory_space<vmem>>, %arg27: memref<1x8xf32, #tpu.memory_space<vmem>>, %arg28: memref<32x512xf32, #tpu.memory_space<vmem>>, %arg29: memref<32x512xf32, #tpu.memory_space<vmem>>, %arg30: memref<1x512xf32, #tpu.memory_space<vmem>>, %arg31: memref<512x32xf32, #tpu.memory_space<vmem>>, %arg32: memref<8x32xf32, #tpu.memory_space<vmem>>, %arg33: memref<32x8xf32, #tpu.memory_space<vmem>>, %arg34: memref<1x8xf32, #tpu.memory_space<vmem>>, %arg35: memref<32x512xf32, #tpu.memory_space<vmem>>, %arg36: memref<1x512xf32, #tpu.memory_space<vmem>>, %arg37: memref<512x32xf32, #tpu.memory_space<vmem>>, %arg38: memref<8x32xf32, #tpu.memory_space<vmem>>, %arg39: memref<1x8x32xf32, #tpu.memory_space<vmem>>, %arg40: memref<1x12x32xf32, #tpu.memory_space<vmem>>) attributes {dimension_semantics = [#tpu.dimension_semantics<parallel>], iteration_bounds = array<i64: 2>, scalar_prefetch = 0 : i64, scratch_operands = 0 : i64, tpu.core_type = #tpu.core_type<tc>, window_params = [{transform_indices = @transform_0, window_bounds = array<i64: 1, 8, 32>}, {transform_indices = @transform_1, window_bounds = array<i64: 1, 12, 32>}, {transform_indices = @transform_2, window_bounds = array<i64: 1, 12, 8>}, {pipeline_mode = #tpu.pipeline_mode<synchronous>, transform_indices = @transform_3, window_bounds = array<i64: 32, 96>}, {pipeline_mode = #tpu.pipeline_mode<synchronous>, transform_indices = @transform_4, window_bounds = array<i64: 1, 96>}, {pipeline_mode = #tpu.pipeline_mode<synchronous>, transform_indices = @transform_5, window_bounds = array<i64: 32, 96>}, {pipeline_mode = #tpu.pipeline_mode<synchronous>, transform_indices = @transform_6, window_bounds = array<i64: 1, 96>}, {pipeline_mode = #tpu.pipeline_mode<synchronous>, transform_indices = @transform_7, window_bounds = array<i64: 32, 32>}, {pipeline_mode = #tpu.pipeline_mode<synchronous>, transform_indices = @transform_8, window_bounds = array<i64: 1, 32>}, {pipeline_mode = #tpu.pipeline_mode<synchronous>, transform_indices = @transform_9, window_bounds = array<i64: 1, 32>}, {pipeline_mode = #tpu.pipeline_mode<synchronous>, transform_indices = @transform_10, window_bounds = array<i64: 1, 32>}, {pipeline_mode = #tpu.pipeline_mode<synchronous>, transform_indices = @transform_11, window_bounds = array<i64: 1, 32>}, {pipeline_mode = #tpu.pipeline_mode<synchronous>, transform_indices = @transform_12, window_bounds = array<i64: 1, 32>}, {pipeline_mode = #tpu.pipeline_mode<synchronous>, transform_indices = @transform_13, window_bounds = array<i64: 1, 32>}, {pipeline_mode = #tpu.pipeline_mode<synchronous>, transform_indices = @transform_14, window_bounds = array<i64: 1, 32>}, {pipeline_mode = #tpu.pipeline_mode<synchronous>, transform_indices = @transform_15, window_bounds = array<i64: 1, 32>}, {pipeline_mode = #tpu.pipeline_mode<synchronous>, transform_indices = @transform_16, window_bounds = array<i64: 1, 32>}, {pipeline_mode = #tpu.pipeline_mode<synchronous>, transform_indices = @transform_17, window_bounds = array<i64: 8, 512>}, {pipeline_mode = #tpu.pipeline_mode<synchronous>, transform_indices = @transform_18, window_bounds = array<i64: 32, 8>}, {pipeline_mode = #tpu.pipeline_mode<synchronous>, transform_indices = @transform_19, window_bounds = array<i64: 1, 8>}, {pipeline_mode = #tpu.pipeline_mode<synchronous>, transform_indices = @transform_20, window_bounds = array<i64: 32, 512>}, {pipeline_mode = #tpu.pipeline_mode<synchronous>, transform_indices = @transform_21, window_bounds = array<i64: 1, 512>}, {pipeline_mode = #tpu.pipeline_mode<synchronous>, transform_indices = @transform_22, window_bounds = array<i64: 512, 32>}, {pipeline_mode = #tpu.pipeline_mode<synchronous>, transform_indices = @transform_23, window_bounds = array<i64: 8, 32>}, {pipeline_mode = #tpu.pipeline_mode<synchronous>, transform_indices = @transform_24, window_bounds = array<i64: 32, 8>}, {pipeline_mode = #tpu.pipeline_mode<synchronous>, transform_indices = @transform_25, window_bounds = array<i64: 32, 8>}, {pipeline_mode = #tpu.pipeline_mode<synchronous>, transform_indices = @transform_26, window_bounds = array<i64: 1, 8>}, {pipeline_mode = #tpu.pipeline_mode<synchronous>, transform_indices = @transform_27, window_bounds = array<i64: 32, 512>}, {pipeline_mode = #tpu.pipeline_mode<synchronous>, transform_indices = @transform_28, window_bounds = array<i64: 32, 512>}, {pipeline_mode = #tpu.pipeline_mode<synchronous>, transform_indices = @transform_29, window_bounds = array<i64: 1, 512>}, {pipeline_mode = #tpu.pipeline_mode<synchronous>, transform_indices = @transform_30, window_bounds = array<i64: 512, 32>}, {pipeline_mode = #tpu.pipeline_mode<synchronous>, transform_indices = @transform_31, window_bounds = array<i64: 8, 32>}, {pipeline_mode = #tpu.pipeline_mode<synchronous>, transform_indices = @transform_32, window_bounds = array<i64: 32, 8>}, {pipeline_mode = #tpu.pipeline_mode<synchronous>, transform_indices = @transform_33, window_bounds = array<i64: 1, 8>}, {pipeline_mode = #tpu.pipeline_mode<synchronous>, transform_indices = @transform_34, window_bounds = array<i64: 32, 512>}, {pipeline_mode = #tpu.pipeline_mode<synchronous>, transform_indices = @transform_35, window_bounds = array<i64: 1, 512>}, {pipeline_mode = #tpu.pipeline_mode<synchronous>, transform_indices = @transform_36, window_bounds = array<i64: 512, 32>}, {pipeline_mode = #tpu.pipeline_mode<synchronous>, transform_indices = @transform_37, window_bounds = array<i64: 8, 32>}, {transform_indices = @transform_38, window_bounds = array<i64: 1, 8, 32>}, {transform_indices = @transform_39, window_bounds = array<i64: 1, 12, 32>}]} {
    %c0 = arith.constant 0 : index
    %c0_0 = arith.constant 0 : index
    %c0_1 = arith.constant 0 : index
    %0 = vector.load %arg1[%c0, %c0_0, %c0_1] : memref<1x8x32xf32, #tpu.memory_space<vmem>>, vector<1x8x32xf32>
    %1 = vector.shape_cast %0 : vector<1x8x32xf32> to vector<8x32xf32>
    %c0_2 = arith.constant 0 : index
    %c0_3 = arith.constant 0 : index
    %c0_4 = arith.constant 0 : index
    %2 = vector.load %arg2[%c0_2, %c0_3, %c0_4] : memref<1x12x32xf32, #tpu.memory_space<vmem>>, vector<1x12x32xf32>
    %3 = vector.shape_cast %2 : vector<1x12x32xf32> to vector<12x32xf32>
    %c0_5 = arith.constant 0 : index
    %c0_6 = arith.constant 0 : index
    %c0_7 = arith.constant 0 : index
    %4 = vector.load %arg3[%c0_5, %c0_6, %c0_7] : memref<1x12x8xf32, #tpu.memory_space<vmem>>, vector<1x12x8xf32>
    %5 = vector.shape_cast %4 : vector<1x12x8xf32> to vector<12x8xf32>
    %c0_8 = arith.constant 0 : index
    %c0_9 = arith.constant 0 : index
    %6 = vector.load %arg18[%c0_8, %c0_9] : memref<8x512xf32, #tpu.memory_space<vmem>>, vector<8x512xf32>
    %cst = arith.constant dense<0.000000e+00> : vector<8xf32>
    %7 = vector.multi_reduction <add>, %5, %cst [0] : vector<12x8xf32> to vector<8xf32>
    %8 = vector.shape_cast %7 : vector<8xf32> to vector<8x1xf32>
    %cst_10 = arith.constant 1.000000e+00 : f32
    %9 = vector.broadcast %cst_10 : f32 to vector<8x1xf32>
    %10 = arith.divf %9, %8 : vector<8x1xf32>
    %cst_11 = arith.constant dense<0.000000e+00> : vector<12xf32>
    %11 = vector.multi_reduction <add>, %5, %cst_11 [1] : vector<12x8xf32> to vector<12xf32>
    %12 = vector.shape_cast %11 : vector<12xf32> to vector<12x1xf32>
    %cst_12 = arith.constant 1.000000e+00 : f32
    %13 = vector.broadcast %cst_12 : f32 to vector<12x1xf32>
    %14 = arith.divf %13, %12 : vector<12x1xf32>
    %c0_13 = arith.constant 0 : index
    %c0_14 = arith.constant 0 : index
    %15 = vector.load %arg6[%c0_13, %c0_14] : memref<32x96xf32, #tpu.memory_space<vmem>>, vector<32x96xf32>
    %cst_15 = arith.constant dense<0.000000e+00> : vector<12x96xf32>
    %16 = tpu.matmul %3, %15, %cst_15 {dimension_numbers = #tpu.dot_dimension_numbers<[1], [0], [0], [1], [0, 0, 1, 1], [], []>} : vector<12x32xf32>, vector<32x96xf32>, vector<12x96xf32> -> vector<12x96xf32>
    %c0_16 = arith.constant 0 : index
    %c0_17 = arith.constant 0 : index
    %17 = vector.load %arg7[%c0_16, %c0_17] : memref<1x96xf32, #tpu.memory_space<vmem>>, vector<1x96xf32>
    %18 = vector.broadcast %17 : vector<1x96xf32> to vector<12x96xf32>
    %19 = arith.addf %16, %18 : vector<12x96xf32>
    %cst_18 = arith.constant dense<0.000000e+00> : vector<8x96xf32>
    %20 = tpu.matmul %5, %19, %cst_18 {dimension_numbers = #tpu.dot_dimension_numbers<[0], [0], [1], [1], [0, 1, 1, 1], [], []>} : vector<12x8xf32>, vector<12x96xf32>, vector<8x96xf32> -> vector<8x96xf32>
    %21 = vector.broadcast %10 : vector<8x1xf32> to vector<8x96xf32>
    %22 = arith.mulf %20, %21 : vector<8x96xf32>
    %c0_19 = arith.constant 0 : index
    %c0_20 = arith.constant 0 : index
    %23 = vector.load %arg4[%c0_19, %c0_20] : memref<32x96xf32, #tpu.memory_space<vmem>>, vector<32x96xf32>
    %cst_21 = arith.constant dense<0.000000e+00> : vector<8x96xf32>
    %24 = tpu.matmul %1, %23, %cst_21 {dimension_numbers = #tpu.dot_dimension_numbers<[1], [0], [0], [1], [0, 0, 1, 1], [], []>} : vector<8x32xf32>, vector<32x96xf32>, vector<8x96xf32> -> vector<8x96xf32>
    %c0_22 = arith.constant 0 : index
    %c0_23 = arith.constant 0 : index
    %25 = vector.load %arg5[%c0_22, %c0_23] : memref<1x96xf32, #tpu.memory_space<vmem>>, vector<1x96xf32>
    %26 = vector.broadcast %25 : vector<1x96xf32> to vector<8x96xf32>
    %27 = arith.addf %24, %26 : vector<8x96xf32>
    %28 = arith.addf %27, %22 : vector<8x96xf32>
    %c0_24 = arith.constant 0 : index
    %c0_25 = arith.constant 0 : index
    %29 = vector.load %arg8[%c0_24, %c0_25] : memref<32x32xf32, #tpu.memory_space<vmem>>, vector<32x32xf32>
    %cst_26 = arith.constant 0.000000e+00 : f32
    %30 = vector.broadcast %cst_26 : f32 to vector<8x32xf32>
    %31 = vector.extract_strided_slice %28 {offsets = [0, 0], sizes = [8, 8], strides = [1, 1]} : vector<8x96xf32> to vector<8x8xf32>
    %32 = vector.extract_strided_slice %28 {offsets = [0, 8], sizes = [8, 8], strides = [1, 1]} : vector<8x96xf32> to vector<8x8xf32>
    %33 = vector.extract_strided_slice %28 {offsets = [0, 16], sizes = [8, 8], strides = [1, 1]} : vector<8x96xf32> to vector<8x8xf32>
    %cst_27 = arith.constant dense<0.000000e+00> : vector<8x8xf32>
    %34 = tpu.matmul %31, %32, %cst_27 {dimension_numbers = #tpu.dot_dimension_numbers<[1], [1], [0], [0], [0, 0, 1, 0], [], []>} : vector<8x8xf32>, vector<8x8xf32>, vector<8x8xf32> -> vector<8x8xf32>
    %cst_28 = arith.constant 0.353553385 : f32
    %35 = vector.broadcast %cst_28 : f32 to vector<8x8xf32>
    %36 = arith.mulf %34, %35 : vector<8x8xf32>
    %cst_29 = arith.constant dense<0xFF800000> : vector<8xf32>
    %37 = vector.multi_reduction <maximumf>, %36, %cst_29 [1] : vector<8x8xf32> to vector<8xf32>
    %38 = vector.shape_cast %37 : vector<8xf32> to vector<8x1xf32>
    %39 = vector.broadcast %38 : vector<8x1xf32> to vector<8x8xf32>
    %40 = arith.subf %36, %39 : vector<8x8xf32>
    %41 = math.exp %40 : vector<8x8xf32>
    %cst_30 = arith.constant dense<0.000000e+00> : vector<8xf32>
    %42 = vector.multi_reduction <add>, %41, %cst_30 [1] : vector<8x8xf32> to vector<8xf32>
    %43 = vector.shape_cast %42 : vector<8xf32> to vector<8x1xf32>
    %44 = tpu.reciprocal %43 {approx = true} : vector<8x1xf32> -> vector<8x1xf32>
    %45 = vector.broadcast %44 : vector<8x1xf32> to vector<8x8xf32>
    %46 = arith.mulf %41, %45 : vector<8x8xf32>
    %cst_31 = arith.constant dense<0.000000e+00> : vector<8x8xf32>
    %47 = tpu.matmul %46, %33, %cst_31 {dimension_numbers = #tpu.dot_dimension_numbers<[1], [0], [0], [1], [0, 0, 1, 1], [], []>} : vector<8x8xf32>, vector<8x8xf32>, vector<8x8xf32> -> vector<8x8xf32>
    %48 = vector.extract_strided_slice %29 {offsets = [0, 0], sizes = [8, 32], strides = [1, 1]} : vector<32x32xf32> to vector<8x32xf32>
    %cst_32 = arith.constant dense<0.000000e+00> : vector<8x32xf32>
    %49 = tpu.matmul %47, %48, %cst_32 {dimension_numbers = #tpu.dot_dimension_numbers<[1], [0], [0], [1], [0, 0, 1, 1], [], []>} : vector<8x8xf32>, vector<8x32xf32>, vector<8x32xf32> -> vector<8x32xf32>
    %50 = arith.addf %30, %49 : vector<8x32xf32>
    %51 = vector.extract_strided_slice %28 {offsets = [0, 24], sizes = [8, 8], strides = [1, 1]} : vector<8x96xf32> to vector<8x8xf32>
    %52 = vector.extract_strided_slice %28 {offsets = [0, 32], sizes = [8, 8], strides = [1, 1]} : vector<8x96xf32> to vector<8x8xf32>
    %53 = vector.extract_strided_slice %28 {offsets = [0, 40], sizes = [8, 8], strides = [1, 1]} : vector<8x96xf32> to vector<8x8xf32>
    %cst_33 = arith.constant dense<0.000000e+00> : vector<8x8xf32>
    %54 = tpu.matmul %51, %52, %cst_33 {dimension_numbers = #tpu.dot_dimension_numbers<[1], [1], [0], [0], [0, 0, 1, 0], [], []>} : vector<8x8xf32>, vector<8x8xf32>, vector<8x8xf32> -> vector<8x8xf32>
    %cst_34 = arith.constant 0.353553385 : f32
    %55 = vector.broadcast %cst_34 : f32 to vector<8x8xf32>
    %56 = arith.mulf %54, %55 : vector<8x8xf32>
    %cst_35 = arith.constant dense<0xFF800000> : vector<8xf32>
    %57 = vector.multi_reduction <maximumf>, %56, %cst_35 [1] : vector<8x8xf32> to vector<8xf32>
    %58 = vector.shape_cast %57 : vector<8xf32> to vector<8x1xf32>
    %59 = vector.broadcast %58 : vector<8x1xf32> to vector<8x8xf32>
    %60 = arith.subf %56, %59 : vector<8x8xf32>
    %61 = math.exp %60 : vector<8x8xf32>
    %cst_36 = arith.constant dense<0.000000e+00> : vector<8xf32>
    %62 = vector.multi_reduction <add>, %61, %cst_36 [1] : vector<8x8xf32> to vector<8xf32>
    %63 = vector.shape_cast %62 : vector<8xf32> to vector<8x1xf32>
    %64 = tpu.reciprocal %63 {approx = true} : vector<8x1xf32> -> vector<8x1xf32>
    %65 = vector.broadcast %64 : vector<8x1xf32> to vector<8x8xf32>
    %66 = arith.mulf %61, %65 : vector<8x8xf32>
    %cst_37 = arith.constant dense<0.000000e+00> : vector<8x8xf32>
    %67 = tpu.matmul %66, %53, %cst_37 {dimension_numbers = #tpu.dot_dimension_numbers<[1], [0], [0], [1], [0, 0, 1, 1], [], []>} : vector<8x8xf32>, vector<8x8xf32>, vector<8x8xf32> -> vector<8x8xf32>
    %68 = vector.extract_strided_slice %29 {offsets = [8, 0], sizes = [8, 32], strides = [1, 1]} : vector<32x32xf32> to vector<8x32xf32>
    %cst_38 = arith.constant dense<0.000000e+00> : vector<8x32xf32>
    %69 = tpu.matmul %67, %68, %cst_38 {dimension_numbers = #tpu.dot_dimension_numbers<[1], [0], [0], [1], [0, 0, 1, 1], [], []>} : vector<8x8xf32>, vector<8x32xf32>, vector<8x32xf32> -> vector<8x32xf32>
    %70 = arith.addf %50, %69 : vector<8x32xf32>
    %71 = vector.extract_strided_slice %28 {offsets = [0, 48], sizes = [8, 8], strides = [1, 1]} : vector<8x96xf32> to vector<8x8xf32>
    %72 = vector.extract_strided_slice %28 {offsets = [0, 56], sizes = [8, 8], strides = [1, 1]} : vector<8x96xf32> to vector<8x8xf32>
    %73 = vector.extract_strided_slice %28 {offsets = [0, 64], sizes = [8, 8], strides = [1, 1]} : vector<8x96xf32> to vector<8x8xf32>
    %cst_39 = arith.constant dense<0.000000e+00> : vector<8x8xf32>
    %74 = tpu.matmul %71, %72, %cst_39 {dimension_numbers = #tpu.dot_dimension_numbers<[1], [1], [0], [0], [0, 0, 1, 0], [], []>} : vector<8x8xf32>, vector<8x8xf32>, vector<8x8xf32> -> vector<8x8xf32>
    %cst_40 = arith.constant 0.353553385 : f32
    %75 = vector.broadcast %cst_40 : f32 to vector<8x8xf32>
    %76 = arith.mulf %74, %75 : vector<8x8xf32>
    %cst_41 = arith.constant dense<0xFF800000> : vector<8xf32>
    %77 = vector.multi_reduction <maximumf>, %76, %cst_41 [1] : vector<8x8xf32> to vector<8xf32>
    %78 = vector.shape_cast %77 : vector<8xf32> to vector<8x1xf32>
    %79 = vector.broadcast %78 : vector<8x1xf32> to vector<8x8xf32>
    %80 = arith.subf %76, %79 : vector<8x8xf32>
    %81 = math.exp %80 : vector<8x8xf32>
    %cst_42 = arith.constant dense<0.000000e+00> : vector<8xf32>
    %82 = vector.multi_reduction <add>, %81, %cst_42 [1] : vector<8x8xf32> to vector<8xf32>
    %83 = vector.shape_cast %82 : vector<8xf32> to vector<8x1xf32>
    %84 = tpu.reciprocal %83 {approx = true} : vector<8x1xf32> -> vector<8x1xf32>
    %85 = vector.broadcast %84 : vector<8x1xf32> to vector<8x8xf32>
    %86 = arith.mulf %81, %85 : vector<8x8xf32>
    %cst_43 = arith.constant dense<0.000000e+00> : vector<8x8xf32>
    %87 = tpu.matmul %86, %73, %cst_43 {dimension_numbers = #tpu.dot_dimension_numbers<[1], [0], [0], [1], [0, 0, 1, 1], [], []>} : vector<8x8xf32>, vector<8x8xf32>, vector<8x8xf32> -> vector<8x8xf32>
    %88 = vector.extract_strided_slice %29 {offsets = [16, 0], sizes = [8, 32], strides = [1, 1]} : vector<32x32xf32> to vector<8x32xf32>
    %cst_44 = arith.constant dense<0.000000e+00> : vector<8x32xf32>
    %89 = tpu.matmul %87, %88, %cst_44 {dimension_numbers = #tpu.dot_dimension_numbers<[1], [0], [0], [1], [0, 0, 1, 1], [], []>} : vector<8x8xf32>, vector<8x32xf32>, vector<8x32xf32> -> vector<8x32xf32>
    %90 = arith.addf %70, %89 : vector<8x32xf32>
    %91 = vector.extract_strided_slice %28 {offsets = [0, 72], sizes = [8, 8], strides = [1, 1]} : vector<8x96xf32> to vector<8x8xf32>
    %92 = vector.extract_strided_slice %28 {offsets = [0, 80], sizes = [8, 8], strides = [1, 1]} : vector<8x96xf32> to vector<8x8xf32>
    %93 = vector.extract_strided_slice %28 {offsets = [0, 88], sizes = [8, 8], strides = [1, 1]} : vector<8x96xf32> to vector<8x8xf32>
    %cst_45 = arith.constant dense<0.000000e+00> : vector<8x8xf32>
    %94 = tpu.matmul %91, %92, %cst_45 {dimension_numbers = #tpu.dot_dimension_numbers<[1], [1], [0], [0], [0, 0, 1, 0], [], []>} : vector<8x8xf32>, vector<8x8xf32>, vector<8x8xf32> -> vector<8x8xf32>
    %cst_46 = arith.constant 0.353553385 : f32
    %95 = vector.broadcast %cst_46 : f32 to vector<8x8xf32>
    %96 = arith.mulf %94, %95 : vector<8x8xf32>
    %cst_47 = arith.constant dense<0xFF800000> : vector<8xf32>
    %97 = vector.multi_reduction <maximumf>, %96, %cst_47 [1] : vector<8x8xf32> to vector<8xf32>
    %98 = vector.shape_cast %97 : vector<8xf32> to vector<8x1xf32>
    %99 = vector.broadcast %98 : vector<8x1xf32> to vector<8x8xf32>
    %100 = arith.subf %96, %99 : vector<8x8xf32>
    %101 = math.exp %100 : vector<8x8xf32>
    %cst_48 = arith.constant dense<0.000000e+00> : vector<8xf32>
    %102 = vector.multi_reduction <add>, %101, %cst_48 [1] : vector<8x8xf32> to vector<8xf32>
    %103 = vector.shape_cast %102 : vector<8xf32> to vector<8x1xf32>
    %104 = tpu.reciprocal %103 {approx = true} : vector<8x1xf32> -> vector<8x1xf32>
    %105 = vector.broadcast %104 : vector<8x1xf32> to vector<8x8xf32>
    %106 = arith.mulf %101, %105 : vector<8x8xf32>
    %cst_49 = arith.constant dense<0.000000e+00> : vector<8x8xf32>
    %107 = tpu.matmul %106, %93, %cst_49 {dimension_numbers = #tpu.dot_dimension_numbers<[1], [0], [0], [1], [0, 0, 1, 1], [], []>} : vector<8x8xf32>, vector<8x8xf32>, vector<8x8xf32> -> vector<8x8xf32>
    %108 = vector.extract_strided_slice %29 {offsets = [24, 0], sizes = [8, 32], strides = [1, 1]} : vector<32x32xf32> to vector<8x32xf32>
    %cst_50 = arith.constant dense<0.000000e+00> : vector<8x32xf32>
    %109 = tpu.matmul %107, %108, %cst_50 {dimension_numbers = #tpu.dot_dimension_numbers<[1], [0], [0], [1], [0, 0, 1, 1], [], []>} : vector<8x8xf32>, vector<8x32xf32>, vector<8x32xf32> -> vector<8x32xf32>
    %110 = arith.addf %90, %109 : vector<8x32xf32>
    %c0_51 = arith.constant 0 : index
    %c0_52 = arith.constant 0 : index
    %111 = vector.load %arg9[%c0_51, %c0_52] : memref<1x32xf32, #tpu.memory_space<vmem>>, vector<1x32xf32>
    %112 = vector.broadcast %111 : vector<1x32xf32> to vector<8x32xf32>
    %113 = arith.addf %110, %112 : vector<8x32xf32>
    %114 = arith.addf %1, %113 : vector<8x32xf32>
    %c0_53 = arith.constant 0 : index
    %c0_54 = arith.constant 0 : index
    %115 = vector.load %arg10[%c0_53, %c0_54] : memref<1x32xf32, #tpu.memory_space<vmem>>, vector<1x32xf32>
    %c0_55 = arith.constant 0 : index
    %c0_56 = arith.constant 0 : index
    %116 = vector.load %arg11[%c0_55, %c0_56] : memref<1x32xf32, #tpu.memory_space<vmem>>, vector<1x32xf32>
    %cst_57 = arith.constant dense<0.000000e+00> : vector<8xf32>
    %117 = vector.multi_reduction <add>, %114, %cst_57 [1] : vector<8x32xf32> to vector<8xf32>
    %118 = vector.shape_cast %117 : vector<8xf32> to vector<8x1xf32>
    %cst_58 = arith.constant 3.200000e+01 : f32
    %119 = vector.broadcast %cst_58 : f32 to vector<8x1xf32>
    %120 = arith.divf %118, %119 : vector<8x1xf32>
    %121 = vector.broadcast %120 : vector<8x1xf32> to vector<8x32xf32>
    %122 = arith.subf %114, %121 : vector<8x32xf32>
    %123 = arith.mulf %122, %122 : vector<8x32xf32>
    %cst_59 = arith.constant dense<0.000000e+00> : vector<8xf32>
    %124 = vector.multi_reduction <add>, %123, %cst_59 [1] : vector<8x32xf32> to vector<8xf32>
    %125 = vector.shape_cast %124 : vector<8xf32> to vector<8x1xf32>
    %cst_60 = arith.constant 3.200000e+01 : f32
    %126 = vector.broadcast %cst_60 : f32 to vector<8x1xf32>
    %127 = arith.divf %125, %126 : vector<8x1xf32>
    %cst_61 = arith.constant 9.99999974E-6 : f32
    %128 = vector.broadcast %cst_61 : f32 to vector<8x1xf32>
    %129 = arith.addf %127, %128 : vector<8x1xf32>
    %130 = math.rsqrt %129 : vector<8x1xf32>
    %131 = vector.broadcast %130 : vector<8x1xf32> to vector<8x32xf32>
    %132 = arith.mulf %122, %131 : vector<8x32xf32>
    %133 = vector.broadcast %115 : vector<1x32xf32> to vector<8x32xf32>
    %134 = arith.mulf %132, %133 : vector<8x32xf32>
    %135 = vector.broadcast %116 : vector<1x32xf32> to vector<8x32xf32>
    %136 = arith.addf %134, %135 : vector<8x32xf32>
    %c0_62 = arith.constant 0 : index
    %c0_63 = arith.constant 0 : index
    %137 = vector.load %arg19[%c0_62, %c0_63] : memref<32x8xf32, #tpu.memory_space<vmem>>, vector<32x8xf32>
    %c0_64 = arith.constant 0 : index
    %c0_65 = arith.constant 0 : index
    %138 = vector.load %arg20[%c0_64, %c0_65] : memref<1x8xf32, #tpu.memory_space<vmem>>, vector<1x8xf32>
    %c0_66 = arith.constant 0 : index
    %c0_67 = arith.constant 0 : index
    %139 = vector.load %arg21[%c0_66, %c0_67] : memref<32x512xf32, #tpu.memory_space<vmem>>, vector<32x512xf32>
    %c0_68 = arith.constant 0 : index
    %c0_69 = arith.constant 0 : index
    %140 = vector.load %arg22[%c0_68, %c0_69] : memref<1x512xf32, #tpu.memory_space<vmem>>, vector<1x512xf32>
    %c0_70 = arith.constant 0 : index
    %c0_71 = arith.constant 0 : index
    %141 = vector.load %arg23[%c0_70, %c0_71] : memref<512x32xf32, #tpu.memory_space<vmem>>, vector<512x32xf32>
    %c0_72 = arith.constant 0 : index
    %c0_73 = arith.constant 0 : index
    %142 = vector.load %arg24[%c0_72, %c0_73] : memref<8x32xf32, #tpu.memory_space<vmem>>, vector<8x32xf32>
    %cst_74 = arith.constant dense<0.000000e+00> : vector<8x8xf32>
    %143 = tpu.matmul %136, %137, %cst_74 {dimension_numbers = #tpu.dot_dimension_numbers<[1], [0], [0], [1], [0, 0, 1, 1], [], []>} : vector<8x32xf32>, vector<32x8xf32>, vector<8x8xf32> -> vector<8x8xf32>
    %144 = vector.broadcast %138 : vector<1x8xf32> to vector<8x8xf32>
    %145 = arith.addf %143, %144 : vector<8x8xf32>
    %cst_75 = arith.constant dense<0xFF800000> : vector<8xf32>
    %146 = vector.multi_reduction <maximumf>, %145, %cst_75 [1] : vector<8x8xf32> to vector<8xf32>
    %147 = vector.shape_cast %146 : vector<8xf32> to vector<8x1xf32>
    %148 = vector.broadcast %147 : vector<8x1xf32> to vector<8x8xf32>
    %149 = arith.subf %145, %148 : vector<8x8xf32>
    %150 = math.exp %149 : vector<8x8xf32>
    %cst_76 = arith.constant dense<0.000000e+00> : vector<8xf32>
    %151 = vector.multi_reduction <add>, %150, %cst_76 [1] : vector<8x8xf32> to vector<8xf32>
    %152 = vector.shape_cast %151 : vector<8xf32> to vector<8x1xf32>
    %153 = tpu.reciprocal %152 {approx = true} : vector<8x1xf32> -> vector<8x1xf32>
    %154 = vector.broadcast %153 : vector<8x1xf32> to vector<8x8xf32>
    %155 = arith.mulf %150, %154 : vector<8x8xf32>
    %cst_77 = arith.constant dense<0.000000e+00> : vector<8x512xf32>
    %156 = tpu.matmul %136, %139, %cst_77 {dimension_numbers = #tpu.dot_dimension_numbers<[1], [0], [0], [1], [0, 0, 1, 1], [], []>} : vector<8x32xf32>, vector<32x512xf32>, vector<8x512xf32> -> vector<8x512xf32>
    %157 = vector.broadcast %140 : vector<1x512xf32> to vector<8x512xf32>
    %158 = arith.addf %156, %157 : vector<8x512xf32>
    %cst_78 = arith.constant 0.000000e+00 : f32
    %159 = vector.broadcast %cst_78 : f32 to vector<8x512xf32>
    %160 = arith.maximumf %158, %159 : vector<8x512xf32>
    %cst_79 = arith.constant dense<0.000000e+00> : vector<8x512xf32>
    %161 = tpu.matmul %155, %6, %cst_79 {dimension_numbers = #tpu.dot_dimension_numbers<[1], [0], [0], [1], [0, 0, 1, 1], [], []>} : vector<8x8xf32>, vector<8x512xf32>, vector<8x512xf32> -> vector<8x512xf32>
    %162 = arith.mulf %160, %161 : vector<8x512xf32>
    %cst_80 = arith.constant dense<0.000000e+00> : vector<8x32xf32>
    %163 = tpu.matmul %162, %141, %cst_80 {dimension_numbers = #tpu.dot_dimension_numbers<[1], [0], [0], [1], [0, 0, 1, 1], [], []>} : vector<8x512xf32>, vector<512x32xf32>, vector<8x32xf32> -> vector<8x32xf32>
    %cst_81 = arith.constant dense<0.000000e+00> : vector<8x32xf32>
    %164 = tpu.matmul %155, %142, %cst_81 {dimension_numbers = #tpu.dot_dimension_numbers<[1], [0], [0], [1], [0, 0, 1, 1], [], []>} : vector<8x8xf32>, vector<8x32xf32>, vector<8x32xf32> -> vector<8x32xf32>
    %165 = arith.addf %163, %164 : vector<8x32xf32>
    %166 = arith.addf %136, %165 : vector<8x32xf32>
    %c0_82 = arith.constant 0 : index
    %c0_83 = arith.constant 0 : index
    %167 = vector.load %arg12[%c0_82, %c0_83] : memref<1x32xf32, #tpu.memory_space<vmem>>, vector<1x32xf32>
    %c0_84 = arith.constant 0 : index
    %c0_85 = arith.constant 0 : index
    %168 = vector.load %arg13[%c0_84, %c0_85] : memref<1x32xf32, #tpu.memory_space<vmem>>, vector<1x32xf32>
    %cst_86 = arith.constant dense<0.000000e+00> : vector<8xf32>
    %169 = vector.multi_reduction <add>, %166, %cst_86 [1] : vector<8x32xf32> to vector<8xf32>
    %170 = vector.shape_cast %169 : vector<8xf32> to vector<8x1xf32>
    %cst_87 = arith.constant 3.200000e+01 : f32
    %171 = vector.broadcast %cst_87 : f32 to vector<8x1xf32>
    %172 = arith.divf %170, %171 : vector<8x1xf32>
    %173 = vector.broadcast %172 : vector<8x1xf32> to vector<8x32xf32>
    %174 = arith.subf %166, %173 : vector<8x32xf32>
    %175 = arith.mulf %174, %174 : vector<8x32xf32>
    %cst_88 = arith.constant dense<0.000000e+00> : vector<8xf32>
    %176 = vector.multi_reduction <add>, %175, %cst_88 [1] : vector<8x32xf32> to vector<8xf32>
    %177 = vector.shape_cast %176 : vector<8xf32> to vector<8x1xf32>
    %cst_89 = arith.constant 3.200000e+01 : f32
    %178 = vector.broadcast %cst_89 : f32 to vector<8x1xf32>
    %179 = arith.divf %177, %178 : vector<8x1xf32>
    %cst_90 = arith.constant 9.99999974E-6 : f32
    %180 = vector.broadcast %cst_90 : f32 to vector<8x1xf32>
    %181 = arith.addf %179, %180 : vector<8x1xf32>
    %182 = math.rsqrt %181 : vector<8x1xf32>
    %183 = vector.broadcast %182 : vector<8x1xf32> to vector<8x32xf32>
    %184 = arith.mulf %174, %183 : vector<8x32xf32>
    %185 = vector.broadcast %167 : vector<1x32xf32> to vector<8x32xf32>
    %186 = arith.mulf %184, %185 : vector<8x32xf32>
    %187 = vector.broadcast %168 : vector<1x32xf32> to vector<8x32xf32>
    %188 = arith.addf %186, %187 : vector<8x32xf32>
    %c0_91 = arith.constant 0 : index
    %c0_92 = arith.constant 0 : index
    %c0_93 = arith.constant 0 : index
    %189 = vector.load %arg39[%c0_91, %c0_92, %c0_93] : memref<1x8x32xf32, #tpu.memory_space<vmem>>, vector<1x8x32xf32>
    %190 = vector.shape_cast %189 : vector<1x8x32xf32> to vector<8x32xf32>
    %191 = vector.shape_cast %188 : vector<8x32xf32> to vector<1x8x32xf32>
    tpu.vector_store %arg39[%c0_91, %c0_92, %c0_93], %191 {strides = array<i32>} : memref<1x8x32xf32, #tpu.memory_space<vmem>>, vector<1x8x32xf32>,
    %cst_94 = arith.constant dense<0.000000e+00> : vector<12x32xf32>
    %192 = tpu.matmul %5, %188, %cst_94 {dimension_numbers = #tpu.dot_dimension_numbers<[1], [0], [0], [1], [0, 0, 1, 1], [], []>} : vector<12x8xf32>, vector<8x32xf32>, vector<12x32xf32> -> vector<12x32xf32>
    %193 = vector.broadcast %14 : vector<12x1xf32> to vector<12x32xf32>
    %194 = arith.mulf %192, %193 : vector<12x32xf32>
    %c0_95 = arith.constant 0 : index
    %c0_96 = arith.constant 0 : index
    %195 = vector.load %arg25[%c0_95, %c0_96] : memref<32x8xf32, #tpu.memory_space<vmem>>, vector<32x8xf32>
    %cst_97 = arith.constant dense<0.000000e+00> : vector<12x8xf32>
    %196 = tpu.matmul %3, %195, %cst_97 {dimension_numbers = #tpu.dot_dimension_numbers<[1], [0], [0], [1], [0, 0, 1, 1], [], []>} : vector<12x32xf32>, vector<32x8xf32>, vector<12x8xf32> -> vector<12x8xf32>
    %c0_98 = arith.constant 0 : index
    %c0_99 = arith.constant 0 : index
    %197 = vector.load %arg26[%c0_98, %c0_99] : memref<32x8xf32, #tpu.memory_space<vmem>>, vector<32x8xf32>
    %cst_100 = arith.constant dense<0.000000e+00> : vector<12x8xf32>
    %198 = tpu.matmul %194, %197, %cst_100 {dimension_numbers = #tpu.dot_dimension_numbers<[1], [0], [0], [1], [0, 0, 1, 1], [], []>} : vector<12x32xf32>, vector<32x8xf32>, vector<12x8xf32> -> vector<12x8xf32>
    %199 = arith.addf %196, %198 : vector<12x8xf32>
    %c0_101 = arith.constant 0 : index
    %c0_102 = arith.constant 0 : index
    %200 = vector.load %arg27[%c0_101, %c0_102] : memref<1x8xf32, #tpu.memory_space<vmem>>, vector<1x8xf32>
    %201 = vector.broadcast %200 : vector<1x8xf32> to vector<12x8xf32>
    %202 = arith.addf %199, %201 : vector<12x8xf32>
    %cst_103 = arith.constant dense<0xFF800000> : vector<12xf32>
    %203 = vector.multi_reduction <maximumf>, %202, %cst_103 [1] : vector<12x8xf32> to vector<12xf32>
    %204 = vector.shape_cast %203 : vector<12xf32> to vector<12x1xf32>
    %205 = vector.broadcast %204 : vector<12x1xf32> to vector<12x8xf32>
    %206 = arith.subf %202, %205 : vector<12x8xf32>
    %207 = math.exp %206 : vector<12x8xf32>
    %cst_104 = arith.constant dense<0.000000e+00> : vector<12xf32>
    %208 = vector.multi_reduction <add>, %207, %cst_104 [1] : vector<12x8xf32> to vector<12xf32>
    %209 = vector.shape_cast %208 : vector<12xf32> to vector<12x1xf32>
    %210 = tpu.reciprocal %209 {approx = true} : vector<12x1xf32> -> vector<12x1xf32>
    %211 = vector.broadcast %210 : vector<12x1xf32> to vector<12x8xf32>
    %212 = arith.mulf %207, %211 : vector<12x8xf32>
    %c0_105 = arith.constant 0 : index
    %c0_106 = arith.constant 0 : index
    %213 = vector.load %arg28[%c0_105, %c0_106] : memref<32x512xf32, #tpu.memory_space<vmem>>, vector<32x512xf32>
    %cst_107 = arith.constant dense<0.000000e+00> : vector<12x512xf32>
    %214 = tpu.matmul %3, %213, %cst_107 {dimension_numbers = #tpu.dot_dimension_numbers<[1], [0], [0], [1], [0, 0, 1, 1], [], []>} : vector<12x32xf32>, vector<32x512xf32>, vector<12x512xf32> -> vector<12x512xf32>
    %c0_108 = arith.constant 0 : index
    %c0_109 = arith.constant 0 : index
    %215 = vector.load %arg29[%c0_108, %c0_109] : memref<32x512xf32, #tpu.memory_space<vmem>>, vector<32x512xf32>
    %cst_110 = arith.constant dense<0.000000e+00> : vector<12x512xf32>
    %216 = tpu.matmul %194, %215, %cst_110 {dimension_numbers = #tpu.dot_dimension_numbers<[1], [0], [0], [1], [0, 0, 1, 1], [], []>} : vector<12x32xf32>, vector<32x512xf32>, vector<12x512xf32> -> vector<12x512xf32>
    %217 = arith.addf %214, %216 : vector<12x512xf32>
    %c0_111 = arith.constant 0 : index
    %c0_112 = arith.constant 0 : index
    %218 = vector.load %arg30[%c0_111, %c0_112] : memref<1x512xf32, #tpu.memory_space<vmem>>, vector<1x512xf32>
    %219 = vector.broadcast %218 : vector<1x512xf32> to vector<12x512xf32>
    %220 = arith.addf %217, %219 : vector<12x512xf32>
    %cst_113 = arith.constant 0.000000e+00 : f32
    %221 = vector.broadcast %cst_113 : f32 to vector<12x512xf32>
    %222 = arith.maximumf %220, %221 : vector<12x512xf32>
    %cst_114 = arith.constant dense<0.000000e+00> : vector<12x512xf32>
    %223 = tpu.matmul %212, %6, %cst_114 {dimension_numbers = #tpu.dot_dimension_numbers<[1], [0], [0], [1], [0, 0, 1, 1], [], []>} : vector<12x8xf32>, vector<8x512xf32>, vector<12x512xf32> -> vector<12x512xf32>
    %224 = arith.mulf %222, %223 : vector<12x512xf32>
    %c0_115 = arith.constant 0 : index
    %c0_116 = arith.constant 0 : index
    %225 = vector.load %arg31[%c0_115, %c0_116] : memref<512x32xf32, #tpu.memory_space<vmem>>, vector<512x32xf32>
    %cst_117 = arith.constant dense<0.000000e+00> : vector<12x32xf32>
    %226 = tpu.matmul %224, %225, %cst_117 {dimension_numbers = #tpu.dot_dimension_numbers<[1], [0], [0], [1], [0, 0, 1, 1], [], []>} : vector<12x512xf32>, vector<512x32xf32>, vector<12x32xf32> -> vector<12x32xf32>
    %c0_118 = arith.constant 0 : index
    %c0_119 = arith.constant 0 : index
    %227 = vector.load %arg32[%c0_118, %c0_119] : memref<8x32xf32, #tpu.memory_space<vmem>>, vector<8x32xf32>
    %cst_120 = arith.constant dense<0.000000e+00> : vector<12x32xf32>
    %228 = tpu.matmul %212, %227, %cst_120 {dimension_numbers = #tpu.dot_dimension_numbers<[1], [0], [0], [1], [0, 0, 1, 1], [], []>} : vector<12x8xf32>, vector<8x32xf32>, vector<12x32xf32> -> vector<12x32xf32>
    %229 = arith.addf %226, %228 : vector<12x32xf32>
    %230 = arith.addf %3, %229 : vector<12x32xf32>
    %c0_121 = arith.constant 0 : index
    %c0_122 = arith.constant 0 : index
    %231 = vector.load %arg14[%c0_121, %c0_122] : memref<1x32xf32, #tpu.memory_space<vmem>>, vector<1x32xf32>
    %c0_123 = arith.constant 0 : index
    %c0_124 = arith.constant 0 : index
    %232 = vector.load %arg15[%c0_123, %c0_124] : memref<1x32xf32, #tpu.memory_space<vmem>>, vector<1x32xf32>
    %cst_125 = arith.constant dense<0.000000e+00> : vector<12xf32>
    %233 = vector.multi_reduction <add>, %230, %cst_125 [1] : vector<12x32xf32> to vector<12xf32>
    %234 = vector.shape_cast %233 : vector<12xf32> to vector<12x1xf32>
    %cst_126 = arith.constant 3.200000e+01 : f32
    %235 = vector.broadcast %cst_126 : f32 to vector<12x1xf32>
    %236 = arith.divf %234, %235 : vector<12x1xf32>
    %237 = vector.broadcast %236 : vector<12x1xf32> to vector<12x32xf32>
    %238 = arith.subf %230, %237 : vector<12x32xf32>
    %239 = arith.mulf %238, %238 : vector<12x32xf32>
    %cst_127 = arith.constant dense<0.000000e+00> : vector<12xf32>
    %240 = vector.multi_reduction <add>, %239, %cst_127 [1] : vector<12x32xf32> to vector<12xf32>
    %241 = vector.shape_cast %240 : vector<12xf32> to vector<12x1xf32>
    %cst_128 = arith.constant 3.200000e+01 : f32
    %242 = vector.broadcast %cst_128 : f32 to vector<12x1xf32>
    %243 = arith.divf %241, %242 : vector<12x1xf32>
    %cst_129 = arith.constant 9.99999974E-6 : f32
    %244 = vector.broadcast %cst_129 : f32 to vector<12x1xf32>
    %245 = arith.addf %243, %244 : vector<12x1xf32>
    %246 = math.rsqrt %245 : vector<12x1xf32>
    %247 = vector.broadcast %246 : vector<12x1xf32> to vector<12x32xf32>
    %248 = arith.mulf %238, %247 : vector<12x32xf32>
    %249 = vector.broadcast %231 : vector<1x32xf32> to vector<12x32xf32>
    %250 = arith.mulf %248, %249 : vector<12x32xf32>
    %251 = vector.broadcast %232 : vector<1x32xf32> to vector<12x32xf32>
    %252 = arith.addf %250, %251 : vector<12x32xf32>
    %c0_130 = arith.constant 0 : index
    %c0_131 = arith.constant 0 : index
    %253 = vector.load %arg33[%c0_130, %c0_131] : memref<32x8xf32, #tpu.memory_space<vmem>>, vector<32x8xf32>
    %c0_132 = arith.constant 0 : index
    %c0_133 = arith.constant 0 : index
    %254 = vector.load %arg34[%c0_132, %c0_133] : memref<1x8xf32, #tpu.memory_space<vmem>>, vector<1x8xf32>
    %c0_134 = arith.constant 0 : index
    %c0_135 = arith.constant 0 : index
    %255 = vector.load %arg35[%c0_134, %c0_135] : memref<32x512xf32, #tpu.memory_space<vmem>>, vector<32x512xf32>
    %c0_136 = arith.constant 0 : index
    %c0_137 = arith.constant 0 : index
    %256 = vector.load %arg36[%c0_136, %c0_137] : memref<1x512xf32, #tpu.memory_space<vmem>>, vector<1x512xf32>
    %c0_138 = arith.constant 0 : index
    %c0_139 = arith.constant 0 : index
    %257 = vector.load %arg37[%c0_138, %c0_139] : memref<512x32xf32, #tpu.memory_space<vmem>>, vector<512x32xf32>
    %c0_140 = arith.constant 0 : index
    %c0_141 = arith.constant 0 : index
    %258 = vector.load %arg38[%c0_140, %c0_141] : memref<8x32xf32, #tpu.memory_space<vmem>>, vector<8x32xf32>
    %cst_142 = arith.constant dense<0.000000e+00> : vector<12x8xf32>
    %259 = tpu.matmul %252, %253, %cst_142 {dimension_numbers = #tpu.dot_dimension_numbers<[1], [0], [0], [1], [0, 0, 1, 1], [], []>} : vector<12x32xf32>, vector<32x8xf32>, vector<12x8xf32> -> vector<12x8xf32>
    %260 = vector.broadcast %254 : vector<1x8xf32> to vector<12x8xf32>
    %261 = arith.addf %259, %260 : vector<12x8xf32>
    %cst_143 = arith.constant dense<0xFF800000> : vector<12xf32>
    %262 = vector.multi_reduction <maximumf>, %261, %cst_143 [1] : vector<12x8xf32> to vector<12xf32>
    %263 = vector.shape_cast %262 : vector<12xf32> to vector<12x1xf32>
    %264 = vector.broadcast %263 : vector<12x1xf32> to vector<12x8xf32>
    %265 = arith.subf %261, %264 : vector<12x8xf32>
    %266 = math.exp %265 : vector<12x8xf32>
    %cst_144 = arith.constant dense<0.000000e+00> : vector<12xf32>
    %267 = vector.multi_reduction <add>, %266, %cst_144 [1] : vector<12x8xf32> to vector<12xf32>
    %268 = vector.shape_cast %267 : vector<12xf32> to vector<12x1xf32>
    %269 = tpu.reciprocal %268 {approx = true} : vector<12x1xf32> -> vector<12x1xf32>
    %270 = vector.broadcast %269 : vector<12x1xf32> to vector<12x8xf32>
    %271 = arith.mulf %266, %270 : vector<12x8xf32>
    %cst_145 = arith.constant dense<0.000000e+00> : vector<12x512xf32>
    %272 = tpu.matmul %252, %255, %cst_145 {dimension_numbers = #tpu.dot_dimension_numbers<[1], [0], [0], [1], [0, 0, 1, 1], [], []>} : vector<12x32xf32>, vector<32x512xf32>, vector<12x512xf32> -> vector<12x512xf32>
    %273 = vector.broadcast %256 : vector<1x512xf32> to vector<12x512xf32>
    %274 = arith.addf %272, %273 : vector<12x512xf32>
    %cst_146 = arith.constant 0.000000e+00 : f32
    %275 = vector.broadcast %cst_146 : f32 to vector<12x512xf32>
    %276 = arith.maximumf %274, %275 : vector<12x512xf32>
    %cst_147 = arith.constant dense<0.000000e+00> : vector<12x512xf32>
    %277 = tpu.matmul %271, %6, %cst_147 {dimension_numbers = #tpu.dot_dimension_numbers<[1], [0], [0], [1], [0, 0, 1, 1], [], []>} : vector<12x8xf32>, vector<8x512xf32>, vector<12x512xf32> -> vector<12x512xf32>
    %278 = arith.mulf %276, %277 : vector<12x512xf32>
    %cst_148 = arith.constant dense<0.000000e+00> : vector<12x32xf32>
    %279 = tpu.matmul %278, %257, %cst_148 {dimension_numbers = #tpu.dot_dimension_numbers<[1], [0], [0], [1], [0, 0, 1, 1], [], []>} : vector<12x512xf32>, vector<512x32xf32>, vector<12x32xf32> -> vector<12x32xf32>
    %cst_149 = arith.constant dense<0.000000e+00> : vector<12x32xf32>
    %280 = tpu.matmul %271, %258, %cst_149 {dimension_numbers = #tpu.dot_dimension_numbers<[1], [0], [0], [1], [0, 0, 1, 1], [], []>} : vector<12x8xf32>, vector<8x32xf32>, vector<12x32xf32> -> vector<12x32xf32>
    %281 = arith.addf %279, %280 : vector<12x32xf32>
    %282 = arith.addf %252, %281 : vector<12x32xf32>
    %c0_150 = arith.constant 0 : index
    %c0_151 = arith.constant 0 : index
    %283 = vector.load %arg16[%c0_150, %c0_151] : memref<1x32xf32, #tpu.memory_space<vmem>>, vector<1x32xf32>
    %c0_152 = arith.constant 0 : index
    %c0_153 = arith.constant 0 : index
    %284 = vector.load %arg17[%c0_152, %c0_153] : memref<1x32xf32, #tpu.memory_space<vmem>>, vector<1x32xf32>
    %cst_154 = arith.constant dense<0.000000e+00> : vector<12xf32>
    %285 = vector.multi_reduction <add>, %282, %cst_154 [1] : vector<12x32xf32> to vector<12xf32>
    %286 = vector.shape_cast %285 : vector<12xf32> to vector<12x1xf32>
    %cst_155 = arith.constant 3.200000e+01 : f32
    %287 = vector.broadcast %cst_155 : f32 to vector<12x1xf32>
    %288 = arith.divf %286, %287 : vector<12x1xf32>
    %289 = vector.broadcast %288 : vector<12x1xf32> to vector<12x32xf32>
    %290 = arith.subf %282, %289 : vector<12x32xf32>
    %291 = arith.mulf %290, %290 : vector<12x32xf32>
    %cst_156 = arith.constant dense<0.000000e+00> : vector<12xf32>
    %292 = vector.multi_reduction <add>, %291, %cst_156 [1] : vector<12x32xf32> to vector<12xf32>
    %293 = vector.shape_cast %292 : vector<12xf32> to vector<12x1xf32>
    %cst_157 = arith.constant 3.200000e+01 : f32
    %294 = vector.broadcast %cst_157 : f32 to vector<12x1xf32>
    %295 = arith.divf %293, %294 : vector<12x1xf32>
    %cst_158 = arith.constant 9.99999974E-6 : f32
    %296 = vector.broadcast %cst_158 : f32 to vector<12x1xf32>
    %297 = arith.addf %295, %296 : vector<12x1xf32>
    %298 = math.rsqrt %297 : vector<12x1xf32>
    %299 = vector.broadcast %298 : vector<12x1xf32> to vector<12x32xf32>
    %300 = arith.mulf %290, %299 : vector<12x32xf32>
    %301 = vector.broadcast %283 : vector<1x32xf32> to vector<12x32xf32>
    %302 = arith.mulf %300, %301 : vector<12x32xf32>
    %303 = vector.broadcast %284 : vector<1x32xf32> to vector<12x32xf32>
    %304 = arith.addf %302, %303 : vector<12x32xf32>
    %c0_159 = arith.constant 0 : index
    %c0_160 = arith.constant 0 : index
    %c0_161 = arith.constant 0 : index
    %305 = vector.load %arg40[%c0_159, %c0_160, %c0_161] : memref<1x12x32xf32, #tpu.memory_space<vmem>>, vector<1x12x32xf32>
    %306 = vector.shape_cast %305 : vector<1x12x32xf32> to vector<12x32xf32>
    %307 = vector.shape_cast %304 : vector<12x32xf32> to vector<1x12x32xf32>
    tpu.vector_store %arg40[%c0_159, %c0_160, %c0_161], %307 {strides = array<i32>} : memref<1x12x32xf32, #tpu.memory_space<vmem>>, vector<1x12x32xf32>,
    return
  }
  func.func @transform_0(%arg0: i32) -> (i32, i32, i32) {
    %c0_i32 = arith.constant 0 : i32
    %c0_i32_0 = arith.constant 0 : i32
    %c0_i32_1 = arith.constant 0 : i32
    return %arg0, %c0_i32, %c0_i32_0 : i32, i32, i32
  }
  func.func @transform_1(%arg0: i32) -> (i32, i32, i32) {
    %c0_i32 = arith.constant 0 : i32
    %c0_i32_0 = arith.constant 0 : i32
    %c0_i32_1 = arith.constant 0 : i32
    return %arg0, %c0_i32, %c0_i32_0 : i32, i32, i32
  }
  func.func @transform_2(%arg0: i32) -> (i32, i32, i32) {
    %c0_i32 = arith.constant 0 : i32
    %c0_i32_0 = arith.constant 0 : i32
    %c0_i32_1 = arith.constant 0 : i32
    return %arg0, %c0_i32, %c0_i32_0 : i32, i32, i32
  }
  func.func @transform_3(%arg0: i32) -> (i32, i32) {
    %c0_i32 = arith.constant 0 : i32
    %c0_i32_0 = arith.constant 0 : i32
    %c0_i32_1 = arith.constant 0 : i32
    return %c0_i32, %c0_i32_0 : i32, i32
  }
  func.func @transform_4(%arg0: i32) -> (i32, i32) {
    %c0_i32 = arith.constant 0 : i32
    %c0_i32_0 = arith.constant 0 : i32
    %c0_i32_1 = arith.constant 0 : i32
    return %c0_i32, %c0_i32_0 : i32, i32
  }
  func.func @transform_5(%arg0: i32) -> (i32, i32) {
    %c0_i32 = arith.constant 0 : i32
    %c0_i32_0 = arith.constant 0 : i32
    %c0_i32_1 = arith.constant 0 : i32
    return %c0_i32, %c0_i32_0 : i32, i32
  }
  func.func @transform_6(%arg0: i32) -> (i32, i32) {
    %c0_i32 = arith.constant 0 : i32
    %c0_i32_0 = arith.constant 0 : i32
    %c0_i32_1 = arith.constant 0 : i32
    return %c0_i32, %c0_i32_0 : i32, i32
  }
  func.func @transform_7(%arg0: i32) -> (i32, i32) {
    %c0_i32 = arith.constant 0 : i32
    %c0_i32_0 = arith.constant 0 : i32
    %c0_i32_1 = arith.constant 0 : i32
    return %c0_i32, %c0_i32_0 : i32, i32
  }
  func.func @transform_8(%arg0: i32) -> (i32, i32) {
    %c0_i32 = arith.constant 0 : i32
    %c0_i32_0 = arith.constant 0 : i32
    %c0_i32_1 = arith.constant 0 : i32
    return %c0_i32, %c0_i32_0 : i32, i32
  }
  func.func @transform_9(%arg0: i32) -> (i32, i32) {
    %c0_i32 = arith.constant 0 : i32
    %c0_i32_0 = arith.constant 0 : i32
    %c0_i32_1 = arith.constant 0 : i32
    return %c0_i32, %c0_i32_0 : i32, i32
  }
  func.func @transform_10(%arg0: i32) -> (i32, i32) {
    %c0_i32 = arith.constant 0 : i32
    %c0_i32_0 = arith.constant 0 : i32
    %c0_i32_1 = arith.constant 0 : i32
    return %c0_i32, %c0_i32_0 : i32, i32
  }
  func.func @transform_11(%arg0: i32) -> (i32, i32) {
    %c0_i32 = arith.constant 0 : i32
    %c0_i32_0 = arith.constant 0 : i32
    %c0_i32_1 = arith.constant 0 : i32
    return %c0_i32, %c0_i32_0 : i32, i32
  }
  func.func @transform_12(%arg0: i32) -> (i32, i32) {
    %c0_i32 = arith.constant 0 : i32
    %c0_i32_0 = arith.constant 0 : i32
    %c0_i32_1 = arith.constant 0 : i32
    return %c0_i32, %c0_i32_0 : i32, i32
  }
  func.func @transform_13(%arg0: i32) -> (i32, i32) {
    %c0_i32 = arith.constant 0 : i32
    %c0_i32_0 = arith.constant 0 : i32
    %c0_i32_1 = arith.constant 0 : i32
    return %c0_i32, %c0_i32_0 : i32, i32
  }
  func.func @transform_14(%arg0: i32) -> (i32, i32) {
    %c0_i32 = arith.constant 0 : i32
    %c0_i32_0 = arith.constant 0 : i32
    %c0_i32_1 = arith.constant 0 : i32
    return %c0_i32, %c0_i32_0 : i32, i32
  }
  func.func @transform_15(%arg0: i32) -> (i32, i32) {
    %c0_i32 = arith.constant 0 : i32
    %c0_i32_0 = arith.constant 0 : i32
    %c0_i32_1 = arith.constant 0 : i32
    return %c0_i32, %c0_i32_0 : i32, i32
  }
  func.func @transform_16(%arg0: i32) -> (i32, i32) {
    %c0_i32 = arith.constant 0 : i32
    %c0_i32_0 = arith.constant 0 : i32
    %c0_i32_1 = arith.constant 0 : i32
    return %c0_i32, %c0_i32_0 : i32, i32
  }
  func.func @transform_17(%arg0: i32) -> (i32, i32) {
    %c0_i32 = arith.constant 0 : i32
    %c0_i32_0 = arith.constant 0 : i32
    %c0_i32_1 = arith.constant 0 : i32
    return %c0_i32, %c0_i32_0 : i32, i32
  }
  func.func @transform_18(%arg0: i32) -> (i32, i32) {
    %c0_i32 = arith.constant 0 : i32
    %c0_i32_0 = arith.constant 0 : i32
    %c0_i32_1 = arith.constant 0 : i32
    return %c0_i32, %c0_i32_0 : i32, i32
  }
  func.func @transform_19(%arg0: i32) -> (i32, i32) {
    %c0_i32 = arith.constant 0 : i32
    %c0_i32_0 = arith.constant 0 : i32
    %c0_i32_1 = arith.constant 0 : i32
    return %c0_i32, %c0_i32_0 : i32, i32
  }
  func.func @transform_20(%arg0: i32) -> (i32, i32) {
    %c0_i32 = arith.constant 0 : i32
    %c0_i32_0 = arith.constant 0 : i32
    %c0_i32_1 = arith.constant 0 : i32
    return %c0_i32, %c0_i32_0 : i32, i32
  }
  func.func @transform_21(%arg0: i32) -> (i32, i32) {
    %c0_i32 = arith.constant 0 : i32
    %c0_i32_0 = arith.constant 0 : i32
    %c0_i32_1 = arith.constant 0 : i32
    return %c0_i32, %c0_i32_0 : i32, i32
  }
  func.func @transform_22(%arg0: i32) -> (i32, i32) {
    %c0_i32 = arith.constant 0 : i32
    %c0_i32_0 = arith.constant 0 : i32
    %c0_i32_1 = arith.constant 0 : i32
    return %c0_i32, %c0_i32_0 : i32, i32
  }
  func.func @transform_23(%arg0: i32) -> (i32, i32) {
    %c0_i32 = arith.constant 0 : i32
    %c0_i32_0 = arith.constant 0 : i32
    %c0_i32_1 = arith.constant 0 : i32
    return %c0_i32, %c0_i32_0 : i32, i32
  }
  func.func @transform_24(%arg0: i32) -> (i32, i32) {
    %c0_i32 = arith.constant 0 : i32
    %c0_i32_0 = arith.constant 0 : i32
    %c0_i32_1 = arith.constant 0 : i32
    return %c0_i32, %c0_i32_0 : i32, i32
  }
  func.func @transform_25(%arg0: i32) -> (i32, i32) {
    %c0_i32 = arith.constant 0 : i32
    %c0_i32_0 = arith.constant 0 : i32
    %c0_i32_1 = arith.constant 0 : i32
    return %c0_i32, %c0_i32_0 : i32, i32
  }
  func.func @transform_26(%arg0: i32) -> (i32, i32) {
    %c0_i32 = arith.constant 0 : i32
    %c0_i32_0 = arith.constant 0 : i32
    %c0_i32_1 = arith.constant 0 : i32
    return %c0_i32, %c0_i32_0 : i32, i32
  }
  func.func @transform_27(%arg0: i32) -> (i32, i32) {
    %c0_i32 = arith.constant 0 : i32
    %c0_i32_0 = arith.constant 0 : i32
    %c0_i32_1 = arith.constant 0 : i32
    return %c0_i32, %c0_i32_0 : i32, i32
  }
  func.func @transform_28(%arg0: i32) -> (i32, i32) {
    %c0_i32 = arith.constant 0 : i32
    %c0_i32_0 = arith.constant 0 : i32
    %c0_i32_1 = arith.constant 0 : i32
    return %c0_i32, %c0_i32_0 : i32, i32
  }
  func.func @transform_29(%arg0: i32) -> (i32, i32) {
    %c0_i32 = arith.constant 0 : i32
    %c0_i32_0 = arith.constant 0 : i32
    %c0_i32_1 = arith.constant 0 : i32
    return %c0_i32, %c0_i32_0 : i32, i32
  }
  func.func @transform_30(%arg0: i32) -> (i32, i32) {
    %c0_i32 = arith.constant 0 : i32
    %c0_i32_0 = arith.constant 0 : i32
    %c0_i32_1 = arith.constant 0 : i32
    return %c0_i32, %c0_i32_0 : i32, i32
  }
  func.func @transform_31(%arg0: i32) -> (i32, i32) {
    %c0_i32 = arith.constant 0 : i32
    %c0_i32_0 = arith.constant 0 : i32
    %c0_i32_1 = arith.constant 0 : i32
    return %c0_i32, %c0_i32_0 : i32, i32
  }
  func.func @transform_32(%arg0: i32) -> (i32, i32) {
    %c0_i32 = arith.constant 0 : i32
    %c0_i32_0 = arith.constant 0 : i32
    %c0_i32_1 = arith.constant 0 : i32
    return %c0_i32, %c0_i32_0 : i32, i32
  }
  func.func @transform_33(%arg0: i32) -> (i32, i32) {
    %c0_i32 = arith.constant 0 : i32
    %c0_i32_0 = arith.constant 0 : i32
    %c0_i32_1 = arith.constant 0 : i32
    return %c0_i32, %c0_i32_0 : i32, i32
  }
  func.func @transform_34(%arg0: i32) -> (i32, i32) {
    %c0_i32 = arith.constant 0 : i32
    %c0_i32_0 = arith.constant 0 : i32
    %c0_i32_1 = arith.constant 0 : i32
    return %c0_i32, %c0_i32_0 : i32, i32
  }
  func.func @transform_35(%arg0: i32) -> (i32, i32) {
    %c0_i32 = arith.constant 0 : i32
    %c0_i32_0 = arith.constant 0 : i32
    %c0_i32_1 = arith.constant 0 : i32
    return %c0_i32, %c0_i32_0 : i32, i32
  }
  func.func @transform_36(%arg0: i32) -> (i32, i32) {
    %c0_i32 = arith.constant 0 : i32
    %c0_i32_0 = arith.constant 0 : i32
    %c0_i32_1 = arith.constant 0 : i32
    return %c0_i32, %c0_i32_0 : i32, i32
  }
  func.func @transform_37(%arg0: i32) -> (i32, i32) {
    %c0_i32 = arith.constant 0 : i32
    %c0_i32_0 = arith.constant 0 : i32
    %c0_i32_1 = arith.constant 0 : i32
    return %c0_i32, %c0_i32_0 : i32, i32
  }
  func.func @transform_38(%arg0: i32) -> (i32, i32, i32) {
    %c0_i32 = arith.constant 0 : i32
    %c0_i32_0 = arith.constant 0 : i32
    %c0_i32_1 = arith.constant 0 : i32
    return %arg0, %c0_i32, %c0_i32_0 : i32, i32, i32
  }
  func.func @transform_39(%arg0: i32) -> (i32, i32, i32) {
    %c0_i32 = arith.constant 0 : i32
    %c0_i32_0 = arith.constant 0 : i32
    %c0_i32_1 = arith.constant 0 : i32
    return %arg0, %c0_i32, %c0_i32_0 : i32, i32, i32
  }
}

</mosaic_0001>

<llo_original>
// kernel: tpu_custom_call.1
$region0: #{tpu_custom_call.1}
  #allocation0 [shape = 'u32[]', space=smem, size = 0x4, offset = 0x4, fixed_abs, tag = 'smem constant byte address 0x4 - core index']
  #allocation1 [shape = 'u32[72,128]{1,0:T(1,128)}', space=vmem, size = 0x9000, scoped, tag = 'internal scratch']
  %s0 = inlined_call_operand.smem [shape: u32[40], index: -1, kind: input, shape index: {}]
  %s1 = sld [smem:[%s0]]
  %s2 = scalar_lea.smem %s0, 1
  %s3 = sld [smem:[%s2]]
  %s4 = scalar_lea.smem %s0, 2
  %s5 = sld [smem:[%s4]]
  %s6 = scalar_lea.smem %s0, 3
  %s7 = sld [smem:[%s6]]
  %s8 = scalar_lea.smem %s0, 4
  %s9 = sld [smem:[%s8]]
  %s10 = scalar_lea.smem %s0, 5
  %s11 = sld [smem:[%s10]]
  %s12 = scalar_lea.smem %s0, 6
  %s13 = sld [smem:[%s12]]
  %s14 = scalar_lea.smem %s0, 7
  %s15 = sld [smem:[%s14]]
  %s16 = scalar_lea.smem %s0, 8
  %s17 = sld [smem:[%s16]]
  %s18 = scalar_lea.smem %s0, 9
  %s19 = sld [smem:[%s18]]
  %s20 = scalar_lea.smem %s0, 10
  %s21 = sld [smem:[%s20]]
  %s22 = scalar_lea.smem %s0, 11
  %s23 = sld [smem:[%s22]]
  %s24 = scalar_lea.smem %s0, 12
  %s25 = sld [smem:[%s24]]
  %s26 = scalar_lea.smem %s0, 13
  %s27 = sld [smem:[%s26]]
  %s28 = scalar_lea.smem %s0, 14
  %s29 = sld [smem:[%s28]]
  %s30 = scalar_lea.smem %s0, 15
  %s31 = sld [smem:[%s30]]
  %s32 = scalar_lea.smem %s0, 16
  %s33 = sld [smem:[%s32]]
  %s34 = scalar_lea.smem %s0, 17
  %s35 = sld [smem:[%s34]]
  %s36 = scalar_lea.smem %s0, 18
  %s37 = sld [smem:[%s36]]
  %s38 = scalar_lea.smem %s0, 19
  %s39 = sld [smem:[%s38]]
  %s40 = scalar_lea.smem %s0, 20
  %s41 = sld [smem:[%s40]]
  %s42 = scalar_lea.smem %s0, 21
  %s43 = sld [smem:[%s42]]
  %s44 = scalar_lea.smem %s0, 22
  %s45 = sld [smem:[%s44]]
  %s46 = scalar_lea.smem %s0, 23
  %s47 = sld [smem:[%s46]]
  %s48 = scalar_lea.smem %s0, 24
  %s49 = sld [smem:[%s48]]
  %s50 = scalar_lea.smem %s0, 25
  %s51 = sld [smem:[%s50]]
  %s52 = scalar_lea.smem %s0, 26
  %s53 = sld [smem:[%s52]]
  %s54 = scalar_lea.smem %s0, 27
  %s55 = sld [smem:[%s54]]
  %s56 = scalar_lea.smem %s0, 28
  %s57 = sld [smem:[%s56]]
  %s58 = scalar_lea.smem %s0, 29
  %s59 = sld [smem:[%s58]]
  %s60 = scalar_lea.smem %s0, 30
  %s61 = sld [smem:[%s60]]
  %s62 = scalar_lea.smem %s0, 31
  %s63 = sld [smem:[%s62]]
  %s64 = scalar_lea.smem %s0, 32
  %s65 = sld [smem:[%s64]]
  %s66 = scalar_lea.smem %s0, 33
  %s67 = sld [smem:[%s66]]
  %s68 = scalar_lea.smem %s0, 34
  %s69 = sld [smem:[%s68]]
  %s70 = scalar_lea.smem %s0, 35
  %s71 = sld [smem:[%s70]]
  %s72 = scalar_lea.smem %s0, 36
  %s73 = sld [smem:[%s72]]
  %s74 = scalar_lea.smem %s0, 37
  %s75 = sld [smem:[%s74]]
  %s76 = scalar_lea.smem %s0, 38
  %s77 = sld [smem:[%s76]]
  %s78 = scalar_lea.smem %s0, 39
  %s79 = sld [smem:[%s78]]
  %80 = xla_tuple %s77, %s79
  %s81 = sld [smem:[#allocation0]]
  $region193: #{tpu_custom_call.1} parent=0
    _
  %s83 = ssub.s32 1, %s81
  %s84 = scalar_select 0, %s83, %s81
  $region1: #{tpu_custom_call.1} parent=0
    #allocation2 [shape = 'u8[8192]{0}', space=vmem, size = 0x2000, scoped, tag = 'output window, operand 0']
    #allocation3 [shape = 's32[2]{0}', space=sflag, size = 0x8, scoped, tag = 'scoped memory for tpu_custom_call.1']
    %85 = vsyncpa [#allocation3], 0
    %s86 = scalar_lea.sflag [#allocation3], 1
    %87 = vsyncpa %s86, 0
    loop: start=0, step=1, limit=4
    $region2: #{tpu_custom_call.1} parent=1 // loop_pre_header
      _
    $region3: #{tpu_custom_call.1} parent=1 // loop_header
      %s89 = sphi 0, %s93
      %p90 = scmp.ge.s32.totalorder %s89, 4
      %s99 = sphi 0, %s101
      %s102 = sphi 0, %s99
      %s103 = sphi 0, %s102
      %s119 = sphi 0, %s103
      %s125 = sphi 0, %s127
      %s128 = sphi 0, %s125
      %s129 = sphi 0, %s128
      %s145 = sphi 0, %s129
      %s151 = sphi 0, %s153
      %s154 = sphi 0, %s151
      %s155 = sphi 0, %s154
      %s171 = sphi 0, %s155
      %s175 = sphi 0, %s175
      %s177 = sphi 0, %s175
      %s178 = sphi 0, %s177
      %s192 = sphi 0, %s178
      %s196 = sphi 0, %s196
      %s198 = sphi 0, %s196
      %s199 = sphi 0, %s198
      %s213 = sphi 0, %s199
      %s217 = sphi 0, %s217
      %s219 = sphi 0, %s217
      %s220 = sphi 0, %s219
      %s234 = sphi 0, %s220
      %s238 = sphi 0, %s238
      %s240 = sphi 0, %s238
      %s241 = sphi 0, %s240
      %s255 = sphi 0, %s241
      %s259 = sphi 0, %s259
      %s261 = sphi 0, %s259
      %s262 = sphi 0, %s261
      %s276 = sphi 0, %s262
      %s280 = sphi 0, %s280
      %s282 = sphi 0, %s280
      %s283 = sphi 0, %s282
      %s297 = sphi 0, %s283
      %s301 = sphi 0, %s301
      %s303 = sphi 0, %s301
      %s304 = sphi 0, %s303
      %s318 = sphi 0, %s304
      %s322 = sphi 0, %s322
      %s324 = sphi 0, %s322
      %s325 = sphi 0, %s324
      %s339 = sphi 0, %s325
      %s343 = sphi 0, %s343
      %s345 = sphi 0, %s343
      %s346 = sphi 0, %s345
      %s360 = sphi 0, %s346
      %s364 = sphi 0, %s364
      %s366 = sphi 0, %s364
      %s367 = sphi 0, %s366
      %s381 = sphi 0, %s367
      %s385 = sphi 0, %s385
      %s387 = sphi 0, %s385
      %s388 = sphi 0, %s387
      %s402 = sphi 0, %s388
      %s406 = sphi 0, %s406
      %s408 = sphi 0, %s406
      %s409 = sphi 0, %s408
      %s423 = sphi 0, %s409
      %s427 = sphi 0, %s427
      %s429 = sphi 0, %s427
      %s430 = sphi 0, %s429
      %s444 = sphi 0, %s430
      %s448 = sphi 0, %s448
      %s450 = sphi 0, %s448
      %s451 = sphi 0, %s450
      %s465 = sphi 0, %s451
      %s469 = sphi 0, %s469
      %s471 = sphi 0, %s469
      %s472 = sphi 0, %s471
      %s486 = sphi 0, %s472
      %s490 = sphi 0, %s490
      %s492 = sphi 0, %s490
      %s493 = sphi 0, %s492
      %s507 = sphi 0, %s493
      %s511 = sphi 0, %s511
      %s513 = sphi 0, %s511
      %s514 = sphi 0, %s513
      %s528 = sphi 0, %s514
      %s532 = sphi 0, %s532
      %s534 = sphi 0, %s532
      %s535 = sphi 0, %s534
      %s549 = sphi 0, %s535
      %s553 = sphi 0, %s553
      %s555 = sphi 0, %s553
      %s556 = sphi 0, %s555
      %s570 = sphi 0, %s556
      %s574 = sphi 0, %s574
      %s576 = sphi 0, %s574
      %s577 = sphi 0, %s576
      %s591 = sphi 0, %s577
      %s595 = sphi 0, %s595
      %s597 = sphi 0, %s595
      %s598 = sphi 0, %s597
      %s612 = sphi 0, %s598
      %s616 = sphi 0, %s616
      %s618 = sphi 0, %s616
      %s619 = sphi 0, %s618
      %s633 = sphi 0, %s619
      %s637 = sphi 0, %s637
      %s639 = sphi 0, %s637
      %s640 = sphi 0, %s639
      %s654 = sphi 0, %s640
      %s658 = sphi 0, %s658
      %s660 = sphi 0, %s658
      %s661 = sphi 0, %s660
      %s675 = sphi 0, %s661
      %s679 = sphi 0, %s679
      %s681 = sphi 0, %s679
      %s682 = sphi 0, %s681
      %s696 = sphi 0, %s682
      %s700 = sphi 0, %s700
      %s702 = sphi 0, %s700
      %s703 = sphi 0, %s702
      %s717 = sphi 0, %s703
      %s721 = sphi 0, %s721
      %s723 = sphi 0, %s721
      %s724 = sphi 0, %s723
      %s738 = sphi 0, %s724
      %s742 = sphi 0, %s742
      %s744 = sphi 0, %s742
      %s745 = sphi 0, %s744
      %s759 = sphi 0, %s745
      %s763 = sphi 0, %s763
      %s765 = sphi 0, %s763
      %s766 = sphi 0, %s765
      %s780 = sphi 0, %s766
      %s784 = sphi 0, %s784
      %s786 = sphi 0, %s784
      %s787 = sphi 0, %s786
      %s801 = sphi 0, %s787
      %s805 = sphi 0, %s805
      %s807 = sphi 0, %s805
      %s808 = sphi 0, %s807
      %s822 = sphi 0, %s808
      %s826 = sphi 0, %s826
      %s828 = sphi 0, %s826
      %s829 = sphi 0, %s828
      %s843 = sphi 0, %s829
      %s847 = sphi 0, %s847
      %s849 = sphi 0, %s847
      %s850 = sphi 0, %s849
      %s864 = sphi 0, %s850
      %s868 = sphi 0, %s868
      %s870 = sphi 0, %s868
      %s871 = sphi 0, %s870
      %s885 = sphi 0, %s871
      %s889 = sphi 0, %s889
      %s891 = sphi 0, %s889
      %s892 = sphi 0, %s891
      %s906 = sphi 0, %s892
      %s912 = sphi 0, %s914
      %s915 = sphi 0, %s912
      %s916 = sphi 0, %s915
      %s932 = sphi 0, %s916
      %s938 = sphi 0, %s940
      %s941 = sphi 0, %s938
      %s942 = sphi 0, %s941
      %s958 = sphi 0, %s942
    $region4: #{tpu_custom_call.1} parent=1 // loop_header_branch
      %92 = sbr.rel (%p90) target = $region8
    $region5: #{tpu_custom_call.1} parent=1 // loop_body
      %s94 = ssub.s32 %s89, 1
      %s95 = ssub.s32 %s89, 2
      %s96 = sadd.s32 %s89, 1
      %s97 = ssub.s32 %s89, %s96
      %p98 = scmp.eq.s32.totalorder %s97, 0
      %s100 = sadd.s32 %s99, 1
      %s101 = scalar_select %p98, %s99, %s100
      %p104 = pneg %p98
      %p105 = scmp.eq.s32.totalorder %s89, 1
      %p106 = por %p104, %p105
      %p107 = scmp.ne.s32.totalorder %s99, %s102
      %p108 = scmp.eq.s32.totalorder %s89, 0
      %p109 = por %p107, %p108
      %p110 = scmp.ne.s32.totalorder %s99, %s102
      %p111 = scmp.eq.s32.totalorder %s94, 1
      %p112 = por %p110, %p111
      %p113 = scmp.ne.s32.totalorder %s102, %s103
      %p114 = scmp.eq.s32.totalorder %s94, 0
      %p115 = por %p113, %p114
      %p116 = scmp.ne.s32.totalorder %s102, %s103
      %p117 = scmp.eq.s32.totalorder %s95, 1
      %p118 = por %p116, %p117
      %p120 = scmp.ne.s32.totalorder %s103, %s119
      %p121 = scmp.eq.s32.totalorder %s95, 0
      %p122 = por %p120, %p121
      %s123 = ssub.s32 %s89, %s96
      %p124 = scmp.eq.s32.totalorder %s123, 0
      %s126 = sadd.s32 %s125, 1
      %s127 = scalar_select %p124, %s125, %s126
      %p130 = pneg %p124
      %p131 = scmp.eq.s32.totalorder %s89, 1
      %p132 = por %p130, %p131
      %p133 = scmp.ne.s32.totalorder %s125, %s128
      %p134 = scmp.eq.s32.totalorder %s89, 0
      %p135 = por %p133, %p134
      %p136 = scmp.ne.s32.totalorder %s125, %s128
      %p137 = scmp.eq.s32.totalorder %s94, 1
      %p138 = por %p136, %p137
      %p139 = scmp.ne.s32.totalorder %s128, %s129
      %p140 = scmp.eq.s32.totalorder %s94, 0
      %p141 = por %p139, %p140
      %p142 = scmp.ne.s32.totalorder %s128, %s129
      %p143 = scmp.eq.s32.totalorder %s95, 1
      %p144 = por %p142, %p143
      %p146 = scmp.ne.s32.totalorder %s129, %s145
      %p147 = scmp.eq.s32.totalorder %s95, 0
      %p148 = por %p146, %p147
      %s149 = ssub.s32 %s89, %s96
      %p150 = scmp.eq.s32.totalorder %s149, 0
      %s152 = sadd.s32 %s151, 1
      %s153 = scalar_select %p150, %s151, %s152
      %p156 = pneg %p150
      %p157 = scmp.eq.s32.totalorder %s89, 1
      %p158 = por %p156, %p157
      %p159 = scmp.ne.s32.totalorder %s151, %s154
      %p160 = scmp.eq.s32.totalorder %s89, 0
      %p161 = por %p159, %p160
      %p162 = scmp.ne.s32.totalorder %s151, %s154
      %p163 = scmp.eq.s32.totalorder %s94, 1
      %p164 = por %p162, %p163
      %p165 = scmp.ne.s32.totalorder %s154, %s155
      %p166 = scmp.eq.s32.totalorder %s94, 0
      %p167 = por %p165, %p166
      %p168 = scmp.ne.s32.totalorder %s154, %s155
      %p169 = scmp.eq.s32.totalorder %s95, 1
      %p170 = por %p168, %p169
      %p172 = scmp.ne.s32.totalorder %s155, %s171
      %p173 = scmp.eq.s32.totalorder %s95, 0
      %p174 = por %p172, %p173
      %s176 = sadd.s32 %s175, 1
      %p179 = scmp.eq.s32.totalorder %s89, 1
      %p180 = scmp.ne.s32.totalorder %s175, %s177
      %p181 = scmp.eq.s32.totalorder %s89, 0
      %p182 = por %p180, %p181
      %p183 = scmp.ne.s32.totalorder %s175, %s177
      %p184 = scmp.eq.s32.totalorder %s94, 1
      %p185 = por %p183, %p184
      %p186 = scmp.ne.s32.totalorder %s177, %s178
      %p187 = scmp.eq.s32.totalorder %s94, 0
      %p188 = por %p186, %p187
      %p189 = scmp.ne.s32.totalorder %s177, %s178
      %p190 = scmp.eq.s32.totalorder %s95, 1
      %p191 = por %p189, %p190
      %p193 = scmp.ne.s32.totalorder %s178, %s192
      %p194 = scmp.eq.s32.totalorder %s95, 0
      %p195 = por %p193, %p194
      %s197 = sadd.s32 %s196, 1
      %p200 = scmp.eq.s32.totalorder %s89, 1
      %p201 = scmp.ne.s32.totalorder %s196, %s198
      %p202 = scmp.eq.s32.totalorder %s89, 0
      %p203 = por %p201, %p202
      %p204 = scmp.ne.s32.totalorder %s196, %s198
      %p205 = scmp.eq.s32.totalorder %s94, 1
      %p206 = por %p204, %p205
      %p207 = scmp.ne.s32.totalorder %s198, %s199
      %p208 = scmp.eq.s32.totalorder %s94, 0
      %p209 = por %p207, %p208
      %p210 = scmp.ne.s32.totalorder %s198, %s199
      %p211 = scmp.eq.s32.totalorder %s95, 1
      %p212 = por %p210, %p211
      %p214 = scmp.ne.s32.totalorder %s199, %s213
      %p215 = scmp.eq.s32.totalorder %s95, 0
      %p216 = por %p214, %p215
      %s218 = sadd.s32 %s217, 1
      %p221 = scmp.eq.s32.totalorder %s89, 1
      %p222 = scmp.ne.s32.totalorder %s217, %s219
      %p223 = scmp.eq.s32.totalorder %s89, 0
      %p224 = por %p222, %p223
      %p225 = scmp.ne.s32.totalorder %s217, %s219
      %p226 = scmp.eq.s32.totalorder %s94, 1
      %p227 = por %p225, %p226
      %p228 = scmp.ne.s32.totalorder %s219, %s220
      %p229 = scmp.eq.s32.totalorder %s94, 0
      %p230 = por %p228, %p229
      %p231 = scmp.ne.s32.totalorder %s219, %s220
      %p232 = scmp.eq.s32.totalorder %s95, 1
      %p233 = por %p231, %p232
      %p235 = scmp.ne.s32.totalorder %s220, %s234
      %p236 = scmp.eq.s32.totalorder %s95, 0
      %p237 = por %p235, %p236
      %s239 = sadd.s32 %s238, 1
      %p242 = scmp.eq.s32.totalorder %s89, 1
      %p243 = scmp.ne.s32.totalorder %s238, %s240
      %p244 = scmp.eq.s32.totalorder %s89, 0
      %p245 = por %p243, %p244
      %p246 = scmp.ne.s32.totalorder %s238, %s240
      %p247 = scmp.eq.s32.totalorder %s94, 1
      %p248 = por %p246, %p247
      %p249 = scmp.ne.s32.totalorder %s240, %s241
      %p250 = scmp.eq.s32.totalorder %s94, 0
      %p251 = por %p249, %p250
      %p252 = scmp.ne.s32.totalorder %s240, %s241
      %p253 = scmp.eq.s32.totalorder %s95, 1
      %p254 = por %p252, %p253
      %p256 = scmp.ne.s32.totalorder %s241, %s255
      %p257 = scmp.eq.s32.totalorder %s95, 0
      %p258 = por %p256, %p257
      %s260 = sadd.s32 %s259, 1
      %p263 = scmp.eq.s32.totalorder %s89, 1
      %p264 = scmp.ne.s32.totalorder %s259, %s261
      %p265 = scmp.eq.s32.totalorder %s89, 0
      %p266 = por %p264, %p265
      %p267 = scmp.ne.s32.totalorder %s259, %s261
      %p268 = scmp.eq.s32.totalorder %s94, 1
      %p269 = por %p267, %p268
      %p270 = scmp.ne.s32.totalorder %s261, %s262
      %p271 = scmp.eq.s32.totalorder %s94, 0
      %p272 = por %p270, %p271
      %p273 = scmp.ne.s32.totalorder %s261, %s262
      %p274 = scmp.eq.s32.totalorder %s95, 1
      %p275 = por %p273, %p274
      %p277 = scmp.ne.s32.totalorder %s262, %s276
      %p278 = scmp.eq.s32.totalorder %s95, 0
      %p279 = por %p277, %p278
      %s281 = sadd.s32 %s280, 1
      %p284 = scmp.eq.s32.totalorder %s89, 1
      %p285 = scmp.ne.s32.totalorder %s280, %s282
      %p286 = scmp.eq.s32.totalorder %s89, 0
      %p287 = por %p285, %p286
      %p288 = scmp.ne.s32.totalorder %s280, %s282
      %p289 = scmp.eq.s32.totalorder %s94, 1
      %p290 = por %p288, %p289
      %p291 = scmp.ne.s32.totalorder %s282, %s283
      %p292 = scmp.eq.s32.totalorder %s94, 0
      %p293 = por %p291, %p292
      %p294 = scmp.ne.s32.totalorder %s282, %s283
      %p295 = scmp.eq.s32.totalorder %s95, 1
      %p296 = por %p294, %p295
      %p298 = scmp.ne.s32.totalorder %s283, %s297
      %p299 = scmp.eq.s32.totalorder %s95, 0
      %p300 = por %p298, %p299
      %s302 = sadd.s32 %s301, 1
      %p305 = scmp.eq.s32.totalorder %s89, 1
      %p306 = scmp.ne.s32.totalorder %s301, %s303
      %p307 = scmp.eq.s32.totalorder %s89, 0
      %p308 = por %p306, %p307
      %p309 = scmp.ne.s32.totalorder %s301, %s303
      %p310 = scmp.eq.s32.totalorder %s94, 1
      %p311 = por %p309, %p310
      %p312 = scmp.ne.s32.totalorder %s303, %s304
      %p313 = scmp.eq.s32.totalorder %s94, 0
      %p314 = por %p312, %p313
      %p315 = scmp.ne.s32.totalorder %s303, %s304
      %p316 = scmp.eq.s32.totalorder %s95, 1
      %p317 = por %p315, %p316
      %p319 = scmp.ne.s32.totalorder %s304, %s318
      %p320 = scmp.eq.s32.totalorder %s95, 0
      %p321 = por %p319, %p320
      %s323 = sadd.s32 %s322, 1
      %p326 = scmp.eq.s32.totalorder %s89, 1
      %p327 = scmp.ne.s32.totalorder %s322, %s324
      %p328 = scmp.eq.s32.totalorder %s89, 0
      %p329 = por %p327, %p328
      %p330 = scmp.ne.s32.totalorder %s322, %s324
      %p331 = scmp.eq.s32.totalorder %s94, 1
      %p332 = por %p330, %p331
      %p333 = scmp.ne.s32.totalorder %s324, %s325
      %p334 = scmp.eq.s32.totalorder %s94, 0
      %p335 = por %p333, %p334
      %p336 = scmp.ne.s32.totalorder %s324, %s325
      %p337 = scmp.eq.s32.totalorder %s95, 1
      %p338 = por %p336, %p337
      %p340 = scmp.ne.s32.totalorder %s325, %s339
      %p341 = scmp.eq.s32.totalorder %s95, 0
      %p342 = por %p340, %p341
      %s344 = sadd.s32 %s343, 1
      %p347 = scmp.eq.s32.totalorder %s89, 1
      %p348 = scmp.ne.s32.totalorder %s343, %s345
      %p349 = scmp.eq.s32.totalorder %s89, 0
      %p350 = por %p348, %p349
      %p351 = scmp.ne.s32.totalorder %s343, %s345
      %p352 = scmp.eq.s32.totalorder %s94, 1
      %p353 = por %p351, %p352
      %p354 = scmp.ne.s32.totalorder %s345, %s346
      %p355 = scmp.eq.s32.totalorder %s94, 0
      %p356 = por %p354, %p355
      %p357 = scmp.ne.s32.totalorder %s345, %s346
      %p358 = scmp.eq.s32.totalorder %s95, 1
      %p359 = por %p357, %p358
      %p361 = scmp.ne.s32.totalorder %s346, %s360
      %p362 = scmp.eq.s32.totalorder %s95, 0
      %p363 = por %p361, %p362
      %s365 = sadd.s32 %s364, 1
      %p368 = scmp.eq.s32.totalorder %s89, 1
      %p369 = scmp.ne.s32.totalorder %s364, %s366
      %p370 = scmp.eq.s32.totalorder %s89, 0
      %p371 = por %p369, %p370
      %p372 = scmp.ne.s32.totalorder %s364, %s366
      %p373 = scmp.eq.s32.totalorder %s94, 1
      %p374 = por %p372, %p373
      %p375 = scmp.ne.s32.totalorder %s366, %s367
      %p376 = scmp.eq.s32.totalorder %s94, 0
      %p377 = por %p375, %p376
      %p378 = scmp.ne.s32.totalorder %s366, %s367
      %p379 = scmp.eq.s32.totalorder %s95, 1
      %p380 = por %p378, %p379
      %p382 = scmp.ne.s32.totalorder %s367, %s381
      %p383 = scmp.eq.s32.totalorder %s95, 0
      %p384 = por %p382, %p383
      %s386 = sadd.s32 %s385, 1
      %p389 = scmp.eq.s32.totalorder %s89, 1
      %p390 = scmp.ne.s32.totalorder %s385, %s387
      %p391 = scmp.eq.s32.totalorder %s89, 0
      %p392 = por %p390, %p391
      %p393 = scmp.ne.s32.totalorder %s385, %s387
      %p394 = scmp.eq.s32.totalorder %s94, 1
      %p395 = por %p393, %p394
      %p396 = scmp.ne.s32.totalorder %s387, %s388
      %p397 = scmp.eq.s32.totalorder %s94, 0
      %p398 = por %p396, %p397
      %p399 = scmp.ne.s32.totalorder %s387, %s388
      %p400 = scmp.eq.s32.totalorder %s95, 1
      %p401 = por %p399, %p400
      %p403 = scmp.ne.s32.totalorder %s388, %s402
      %p404 = scmp.eq.s32.totalorder %s95, 0
      %p405 = por %p403, %p404
      %s407 = sadd.s32 %s406, 1
      %p410 = scmp.eq.s32.totalorder %s89, 1
      %p411 = scmp.ne.s32.totalorder %s406, %s408
      %p412 = scmp.eq.s32.totalorder %s89, 0
      %p413 = por %p411, %p412
      %p414 = scmp.ne.s32.totalorder %s406, %s408
      %p415 = scmp.eq.s32.totalorder %s94, 1
      %p416 = por %p414, %p415
      %p417 = scmp.ne.s32.totalorder %s408, %s409
      %p418 = scmp.eq.s32.totalorder %s94, 0
      %p419 = por %p417, %p418
      %p420 = scmp.ne.s32.totalorder %s408, %s409
      %p421 = scmp.eq.s32.totalorder %s95, 1
      %p422 = por %p420, %p421
      %p424 = scmp.ne.s32.totalorder %s409, %s423
      %p425 = scmp.eq.s32.totalorder %s95, 0
      %p426 = por %p424, %p425
      %s428 = sadd.s32 %s427, 1
      %p431 = scmp.eq.s32.totalorder %s89, 1
      %p432 = scmp.ne.s32.totalorder %s427, %s429
      %p433 = scmp.eq.s32.totalorder %s89, 0
      %p434 = por %p432, %p433
      %p435 = scmp.ne.s32.totalorder %s427, %s429
      %p436 = scmp.eq.s32.totalorder %s94, 1
      %p437 = por %p435, %p436
      %p438 = scmp.ne.s32.totalorder %s429, %s430
      %p439 = scmp.eq.s32.totalorder %s94, 0
      %p440 = por %p438, %p439
      %p441 = scmp.ne.s32.totalorder %s429, %s430
      %p442 = scmp.eq.s32.totalorder %s95, 1
      %p443 = por %p441, %p442
      %p445 = scmp.ne.s32.totalorder %s430, %s444
      %p446 = scmp.eq.s32.totalorder %s95, 0
      %p447 = por %p445, %p446
      %s449 = sadd.s32 %s448, 1
      %p452 = scmp.eq.s32.totalorder %s89, 1
      %p453 = scmp.ne.s32.totalorder %s448, %s450
      %p454 = scmp.eq.s32.totalorder %s89, 0
      %p455 = por %p453, %p454
      %p456 = scmp.ne.s32.totalorder %s448, %s450
      %p457 = scmp.eq.s32.totalorder %s94, 1
      %p458 = por %p456, %p457
      %p459 = scmp.ne.s32.totalorder %s450, %s451
      %p460 = scmp.eq.s32.totalorder %s94, 0
      %p461 = por %p459, %p460
      %p462 = scmp.ne.s32.totalorder %s450, %s451
      %p463 = scmp.eq.s32.totalorder %s95, 1
      %p464 = por %p462, %p463
      %p466 = scmp.ne.s32.totalorder %s451, %s465
      %p467 = scmp.eq.s32.totalorder %s95, 0
      %p468 = por %p466, %p467
      %s470 = sadd.s32 %s469, 1
      %p473 = scmp.eq.s32.totalorder %s89, 1
      %p474 = scmp.ne.s32.totalorder %s469, %s471
      %p475 = scmp.eq.s32.totalorder %s89, 0
      %p476 = por %p474, %p475
      %p477 = scmp.ne.s32.totalorder %s469, %s471
      %p478 = scmp.eq.s32.totalorder %s94, 1
      %p479 = por %p477, %p478
      %p480 = scmp.ne.s32.totalorder %s471, %s472
      %p481 = scmp.eq.s32.totalorder %s94, 0
      %p482 = por %p480, %p481
      %p483 = scmp.ne.s32.totalorder %s471, %s472
      %p484 = scmp.eq.s32.totalorder %s95, 1
      %p485 = por %p483, %p484
      %p487 = scmp.ne.s32.totalorder %s472, %s486
      %p488 = scmp.eq.s32.totalorder %s95, 0
      %p489 = por %p487, %p488
      %s491 = sadd.s32 %s490, 1
      %p494 = scmp.eq.s32.totalorder %s89, 1
      %p495 = scmp.ne.s32.totalorder %s490, %s492
      %p496 = scmp.eq.s32.totalorder %s89, 0
      %p497 = por %p495, %p496
      %p498 = scmp.ne.s32.totalorder %s490, %s492
      %p499 = scmp.eq.s32.totalorder %s94, 1
      %p500 = por %p498, %p499
      %p501 = scmp.ne.s32.totalorder %s492, %s493
      %p502 = scmp.eq.s32.totalorder %s94, 0
      %p503 = por %p501, %p502
      %p504 = scmp.ne.s32.totalorder %s492, %s493
      %p505 = scmp.eq.s32.totalorder %s95, 1
      %p506 = por %p504, %p505
      %p508 = scmp.ne.s32.totalorder %s493, %s507
      %p509 = scmp.eq.s32.totalorder %s95, 0
      %p510 = por %p508, %p509
      %s512 = sadd.s32 %s511, 1
      %p515 = scmp.eq.s32.totalorder %s89, 1
      %p516 = scmp.ne.s32.totalorder %s511, %s513
      %p517 = scmp.eq.s32.totalorder %s89, 0
      %p518 = por %p516, %p517
      %p519 = scmp.ne.s32.totalorder %s511, %s513
      %p520 = scmp.eq.s32.totalorder %s94, 1
      %p521 = por %p519, %p520
      %p522 = scmp.ne.s32.totalorder %s513, %s514
      %p523 = scmp.eq.s32.totalorder %s94, 0
      %p524 = por %p522, %p523
      %p525 = scmp.ne.s32.totalorder %s513, %s514
      %p526 = scmp.eq.s32.totalorder %s95, 1
      %p527 = por %p525, %p526
      %p529 = scmp.ne.s32.totalorder %s514, %s528
      %p530 = scmp.eq.s32.totalorder %s95, 0
      %p531 = por %p529, %p530
      %s533 = sadd.s32 %s532, 1
      %p536 = scmp.eq.s32.totalorder %s89, 1
      %p537 = scmp.ne.s32.totalorder %s532, %s534
      %p538 = scmp.eq.s32.totalorder %s89, 0
      %p539 = por %p537, %p538
      %p540 = scmp.ne.s32.totalorder %s532, %s534
      %p541 = scmp.eq.s32.totalorder %s94, 1
      %p542 = por %p540, %p541
      %p543 = scmp.ne.s32.totalorder %s534, %s535
      %p544 = scmp.eq.s32.totalorder %s94, 0
      %p545 = por %p543, %p544
      %p546 = scmp.ne.s32.totalorder %s534, %s535
      %p547 = scmp.eq.s32.totalorder %s95, 1
      %p548 = por %p546, %p547
      %p550 = scmp.ne.s32.totalorder %s535, %s549
      %p551 = scmp.eq.s32.totalorder %s95, 0
      %p552 = por %p550, %p551
      %s554 = sadd.s32 %s553, 1
      %p557 = scmp.eq.s32.totalorder %s89, 1
      %p558 = scmp.ne.s32.totalorder %s553, %s555
      %p559 = scmp.eq.s32.totalorder %s89, 0
      %p560 = por %p558, %p559
      %p561 = scmp.ne.s32.totalorder %s553, %s555
      %p562 = scmp.eq.s32.totalorder %s94, 1
      %p563 = por %p561, %p562
      %p564 = scmp.ne.s32.totalorder %s555, %s556
      %p565 = scmp.eq.s32.totalorder %s94, 0
      %p566 = por %p564, %p565
      %p567 = scmp.ne.s32.totalorder %s555, %s556
      %p568 = scmp.eq.s32.totalorder %s95, 1
      %p569 = por %p567, %p568
      %p571 = scmp.ne.s32.totalorder %s556, %s570
      %p572 = scmp.eq.s32.totalorder %s95, 0
      %p573 = por %p571, %p572
      %s575 = sadd.s32 %s574, 1
      %p578 = scmp.eq.s32.totalorder %s89, 1
      %p579 = scmp.ne.s32.totalorder %s574, %s576
      %p580 = scmp.eq.s32.totalorder %s89, 0
      %p581 = por %p579, %p580
      %p582 = scmp.ne.s32.totalorder %s574, %s576
      %p583 = scmp.eq.s32.totalorder %s94, 1
      %p584 = por %p582, %p583
      %p585 = scmp.ne.s32.totalorder %s576, %s577
      %p586 = scmp.eq.s32.totalorder %s94, 0
      %p587 = por %p585, %p586
      %p588 = scmp.ne.s32.totalorder %s576, %s577
      %p589 = scmp.eq.s32.totalorder %s95, 1
      %p590 = por %p588, %p589
      %p592 = scmp.ne.s32.totalorder %s577, %s591
      %p593 = scmp.eq.s32.totalorder %s95, 0
      %p594 = por %p592, %p593
      %s596 = sadd.s32 %s595, 1
      %p599 = scmp.eq.s32.totalorder %s89, 1
      %p600 = scmp.ne.s32.totalorder %s595, %s597
      %p601 = scmp.eq.s32.totalorder %s89, 0
      %p602 = por %p600, %p601
      %p603 = scmp.ne.s32.totalorder %s595, %s597
      %p604 = scmp.eq.s32.totalorder %s94, 1
      %p605 = por %p603, %p604
      %p606 = scmp.ne.s32.totalorder %s597, %s598
      %p607 = scmp.eq.s32.totalorder %s94, 0
      %p608 = por %p606, %p607
      %p609 = scmp.ne.s32.totalorder %s597, %s598
      %p610 = scmp.eq.s32.totalorder %s95, 1
      %p611 = por %p609, %p610
      %p613 = scmp.ne.s32.totalorder %s598, %s612
      %p614 = scmp.eq.s32.totalorder %s95, 0
      %p615 = por %p613, %p614
      %s617 = sadd.s32 %s616, 1
      %p620 = scmp.eq.s32.totalorder %s89, 1
      %p621 = scmp.ne.s32.totalorder %s616, %s618
      %p622 = scmp.eq.s32.totalorder %s89, 0
      %p623 = por %p621, %p622
      %p624 = scmp.ne.s32.totalorder %s616, %s618
      %p625 = scmp.eq.s32.totalorder %s94, 1
      %p626 = por %p624, %p625
      %p627 = scmp.ne.s32.totalorder %s618, %s619
      %p628 = scmp.eq.s32.totalorder %s94, 0
      %p629 = por %p627, %p628
      %p630 = scmp.ne.s32.totalorder %s618, %s619
      %p631 = scmp.eq.s32.totalorder %s95, 1
      %p632 = por %p630, %p631
      %p634 = scmp.ne.s32.totalorder %s619, %s633
      %p635 = scmp.eq.s32.totalorder %s95, 0
      %p636 = por %p634, %p635
      %s638 = sadd.s32 %s637, 1
      %p641 = scmp.eq.s32.totalorder %s89, 1
      %p642 = scmp.ne.s32.totalorder %s637, %s639
      %p643 = scmp.eq.s32.totalorder %s89, 0
      %p644 = por %p642, %p643
      %p645 = scmp.ne.s32.totalorder %s637, %s639
      %p646 = scmp.eq.s32.totalorder %s94, 1
      %p647 = por %p645, %p646
      %p648 = scmp.ne.s32.totalorder %s639, %s640
      %p649 = scmp.eq.s32.totalorder %s94, 0
      %p650 = por %p648, %p649
      %p651 = scmp.ne.s32.totalorder %s639, %s640
      %p652 = scmp.eq.s32.totalorder %s95, 1
      %p653 = por %p651, %p652
      %p655 = scmp.ne.s32.totalorder %s640, %s654
      %p656 = scmp.eq.s32.totalorder %s95, 0
      %p657 = por %p655, %p656
      %s659 = sadd.s32 %s658, 1
      %p662 = scmp.eq.s32.totalorder %s89, 1
      %p663 = scmp.ne.s32.totalorder %s658, %s660
      %p664 = scmp.eq.s32.totalorder %s89, 0
      %p665 = por %p663, %p664
      %p666 = scmp.ne.s32.totalorder %s658, %s660
      %p667 = scmp.eq.s32.totalorder %s94, 1
      %p668 = por %p666, %p667
      %p669 = scmp.ne.s32.totalorder %s660, %s661
      %p670 = scmp.eq.s32.totalorder %s94, 0
      %p671 = por %p669, %p670
      %p672 = scmp.ne.s32.totalorder %s660, %s661
      %p673 = scmp.eq.s32.totalorder %s95, 1
      %p674 = por %p672, %p673
      %p676 = scmp.ne.s32.totalorder %s661, %s675
      %p677 = scmp.eq.s32.totalorder %s95, 0
      %p678 = por %p676, %p677
      %s680 = sadd.s32 %s679, 1
      %p683 = scmp.eq.s32.totalorder %s89, 1
      %p684 = scmp.ne.s32.totalorder %s679, %s681
      %p685 = scmp.eq.s32.totalorder %s89, 0
      %p686 = por %p684, %p685
      %p687 = scmp.ne.s32.totalorder %s679, %s681
      %p688 = scmp.eq.s32.totalorder %s94, 1
      %p689 = por %p687, %p688
      %p690 = scmp.ne.s32.totalorder %s681, %s682
      %p691 = scmp.eq.s32.totalorder %s94, 0
      %p692 = por %p690, %p691
      %p693 = scmp.ne.s32.totalorder %s681, %s682
      %p694 = scmp.eq.s32.totalorder %s95, 1
      %p695 = por %p693, %p694
      %p697 = scmp.ne.s32.totalorder %s682, %s696
      %p698 = scmp.eq.s32.totalorder %s95, 0
      %p699 = por %p697, %p698
      %s701 = sadd.s32 %s700, 1
      %p704 = scmp.eq.s32.totalorder %s89, 1
      %p705 = scmp.ne.s32.totalorder %s700, %s702
      %p706 = scmp.eq.s32.totalorder %s89, 0
      %p707 = por %p705, %p706
      %p708 = scmp.ne.s32.totalorder %s700, %s702
      %p709 = scmp.eq.s32.totalorder %s94, 1
      %p710 = por %p708, %p709
      %p711 = scmp.ne.s32.totalorder %s702, %s703
      %p712 = scmp.eq.s32.totalorder %s94, 0
      %p713 = por %p711, %p712
      %p714 = scmp.ne.s32.totalorder %s702, %s703
      %p715 = scmp.eq.s32.totalorder %s95, 1
      %p716 = por %p714, %p715
      %p718 = scmp.ne.s32.totalorder %s703, %s717
      %p719 = scmp.eq.s32.totalorder %s95, 0
      %p720 = por %p718, %p719
      %s722 = sadd.s32 %s721, 1
      %p725 = scmp.eq.s32.totalorder %s89, 1
      %p726 = scmp.ne.s32.totalorder %s721, %s723
      %p727 = scmp.eq.s32.totalorder %s89, 0
      %p728 = por %p726, %p727
      %p729 = scmp.ne.s32.totalorder %s721, %s723
      %p730 = scmp.eq.s32.totalorder %s94, 1
      %p731 = por %p729, %p730
      %p732 = scmp.ne.s32.totalorder %s723, %s724
      %p733 = scmp.eq.s32.totalorder %s94, 0
      %p734 = por %p732, %p733
      %p735 = scmp.ne.s32.totalorder %s723, %s724
      %p736 = scmp.eq.s32.totalorder %s95, 1
      %p737 = por %p735, %p736
      %p739 = scmp.ne.s32.totalorder %s724, %s738
      %p740 = scmp.eq.s32.totalorder %s95, 0
      %p741 = por %p739, %p740
      %s743 = sadd.s32 %s742, 1
      %p746 = scmp.eq.s32.totalorder %s89, 1
      %p747 = scmp.ne.s32.totalorder %s742, %s744
      %p748 = scmp.eq.s32.totalorder %s89, 0
      %p749 = por %p747, %p748
      %p750 = scmp.ne.s32.totalorder %s742, %s744
      %p751 = scmp.eq.s32.totalorder %s94, 1
      %p752 = por %p750, %p751
      %p753 = scmp.ne.s32.totalorder %s744, %s745
      %p754 = scmp.eq.s32.totalorder %s94, 0
      %p755 = por %p753, %p754
      %p756 = scmp.ne.s32.totalorder %s744, %s745
      %p757 = scmp.eq.s32.totalorder %s95, 1
      %p758 = por %p756, %p757
      %p760 = scmp.ne.s32.totalorder %s745, %s759
      %p761 = scmp.eq.s32.totalorder %s95, 0
      %p762 = por %p760, %p761
      %s764 = sadd.s32 %s763, 1
      %p767 = scmp.eq.s32.totalorder %s89, 1
      %p768 = scmp.ne.s32.totalorder %s763, %s765
      %p769 = scmp.eq.s32.totalorder %s89, 0
      %p770 = por %p768, %p769
      %p771 = scmp.ne.s32.totalorder %s763, %s765
      %p772 = scmp.eq.s32.totalorder %s94, 1
      %p773 = por %p771, %p772
      %p774 = scmp.ne.s32.totalorder %s765, %s766
      %p775 = scmp.eq.s32.totalorder %s94, 0
      %p776 = por %p774, %p775
      %p777 = scmp.ne.s32.totalorder %s765, %s766
      %p778 = scmp.eq.s32.totalorder %s95, 1
      %p779 = por %p777, %p778
      %p781 = scmp.ne.s32.totalorder %s766, %s780
      %p782 = scmp.eq.s32.totalorder %s95, 0
      %p783 = por %p781, %p782
      %s785 = sadd.s32 %s784, 1
      %p788 = scmp.eq.s32.totalorder %s89, 1
      %p789 = scmp.ne.s32.totalorder %s784, %s786
      %p790 = scmp.eq.s32.totalorder %s89, 0
      %p791 = por %p789, %p790
      %p792 = scmp.ne.s32.totalorder %s784, %s786
      %p793 = scmp.eq.s32.totalorder %s94, 1
      %p794 = por %p792, %p793
      %p795 = scmp.ne.s32.totalorder %s786, %s787
      %p796 = scmp.eq.s32.totalorder %s94, 0
      %p797 = por %p795, %p796
      %p798 = scmp.ne.s32.totalorder %s786, %s787
      %p799 = scmp.eq.s32.totalorder %s95, 1
      %p800 = por %p798, %p799
      %p802 = scmp.ne.s32.totalorder %s787, %s801
      %p803 = scmp.eq.s32.totalorder %s95, 0
      %p804 = por %p802, %p803
      %s806 = sadd.s32 %s805, 1
      %p809 = scmp.eq.s32.totalorder %s89, 1
      %p810 = scmp.ne.s32.totalorder %s805, %s807
      %p811 = scmp.eq.s32.totalorder %s89, 0
      %p812 = por %p810, %p811
      %p813 = scmp.ne.s32.totalorder %s805, %s807
      %p814 = scmp.eq.s32.totalorder %s94, 1
      %p815 = por %p813, %p814
      %p816 = scmp.ne.s32.totalorder %s807, %s808
      %p817 = scmp.eq.s32.totalorder %s94, 0
      %p818 = por %p816, %p817
      %p819 = scmp.ne.s32.totalorder %s807, %s808
      %p820 = scmp.eq.s32.totalorder %s95, 1
      %p821 = por %p819, %p820
      %p823 = scmp.ne.s32.totalorder %s808, %s822
      %p824 = scmp.eq.s32.totalorder %s95, 0
      %p825 = por %p823, %p824
      %s827 = sadd.s32 %s826, 1
      %p830 = scmp.eq.s32.totalorder %s89, 1
      %p831 = scmp.ne.s32.totalorder %s826, %s828
      %p832 = scmp.eq.s32.totalorder %s89, 0
      %p833 = por %p831, %p832
      %p834 = scmp.ne.s32.totalorder %s826, %s828
      %p835 = scmp.eq.s32.totalorder %s94, 1
      %p836 = por %p834, %p835
      %p837 = scmp.ne.s32.totalorder %s828, %s829
      %p838 = scmp.eq.s32.totalorder %s94, 0
      %p839 = por %p837, %p838
      %p840 = scmp.ne.s32.totalorder %s828, %s829
      %p841 = scmp.eq.s32.totalorder %s95, 1
      %p842 = por %p840, %p841
      %p844 = scmp.ne.s32.totalorder %s829, %s843
      %p845 = scmp.eq.s32.totalorder %s95, 0
      %p846 = por %p844, %p845
      %s848 = sadd.s32 %s847, 1
      %p851 = scmp.eq.s32.totalorder %s89, 1
      %p852 = scmp.ne.s32.totalorder %s847, %s849
      %p853 = scmp.eq.s32.totalorder %s89, 0
      %p854 = por %p852, %p853
      %p855 = scmp.ne.s32.totalorder %s847, %s849
      %p856 = scmp.eq.s32.totalorder %s94, 1
      %p857 = por %p855, %p856
      %p858 = scmp.ne.s32.totalorder %s849, %s850
      %p859 = scmp.eq.s32.totalorder %s94, 0
      %p860 = por %p858, %p859
      %p861 = scmp.ne.s32.totalorder %s849, %s850
      %p862 = scmp.eq.s32.totalorder %s95, 1
      %p863 = por %p861, %p862
      %p865 = scmp.ne.s32.totalorder %s850, %s864
      %p866 = scmp.eq.s32.totalorder %s95, 0
      %p867 = por %p865, %p866
      %s869 = sadd.s32 %s868, 1
      %p872 = scmp.eq.s32.totalorder %s89, 1
      %p873 = scmp.ne.s32.totalorder %s868, %s870
      %p874 = scmp.eq.s32.totalorder %s89, 0
      %p875 = por %p873, %p874
      %p876 = scmp.ne.s32.totalorder %s868, %s870
      %p877 = scmp.eq.s32.totalorder %s94, 1
      %p878 = por %p876, %p877
      %p879 = scmp.ne.s32.totalorder %s870, %s871
      %p880 = scmp.eq.s32.totalorder %s94, 0
      %p881 = por %p879, %p880
      %p882 = scmp.ne.s32.totalorder %s870, %s871
      %p883 = scmp.eq.s32.totalorder %s95, 1
      %p884 = por %p882, %p883
      %p886 = scmp.ne.s32.totalorder %s871, %s885
      %p887 = scmp.eq.s32.totalorder %s95, 0
      %p888 = por %p886, %p887
      %s890 = sadd.s32 %s889, 1
      %p893 = scmp.eq.s32.totalorder %s89, 1
      %p894 = scmp.ne.s32.totalorder %s889, %s891
      %p895 = scmp.eq.s32.totalorder %s89, 0
      %p896 = por %p894, %p895
      %p897 = scmp.ne.s32.totalorder %s889, %s891
      %p898 = scmp.eq.s32.totalorder %s94, 1
      %p899 = por %p897, %p898
      %p900 = scmp.ne.s32.totalorder %s891, %s892
      %p901 = scmp.eq.s32.totalorder %s94, 0
      %p902 = por %p900, %p901
      %p903 = scmp.ne.s32.totalorder %s891, %s892
      %p904 = scmp.eq.s32.totalorder %s95, 1
      %p905 = por %p903, %p904
      %p907 = scmp.ne.s32.totalorder %s892, %s906
      %p908 = scmp.eq.s32.totalorder %s95, 0
      %p909 = por %p907, %p908
      %s910 = ssub.s32 %s89, %s96
      %p911 = scmp.eq.s32.totalorder %s910, 0
      %s913 = sadd.s32 %s912, 1
      %s914 = scalar_select %p911, %s912, %s913
      %p917 = pneg %p911
      %p918 = scmp.eq.s32.totalorder %s89, 1
      %p919 = por %p917, %p918
      %p920 = scmp.ne.s32.totalorder %s912, %s915
      %p921 = scmp.eq.s32.totalorder %s89, 0
      %p922 = por %p920, %p921
      %p923 = scmp.ne.s32.totalorder %s912, %s915
      %p924 = scmp.eq.s32.totalorder %s94, 1
      %p925 = por %p923, %p924
      %p926 = scmp.ne.s32.totalorder %s915, %s916
      %p927 = scmp.eq.s32.totalorder %s94, 0
      %p928 = por %p926, %p927
      %p929 = scmp.ne.s32.totalorder %s915, %s916
      %p930 = scmp.eq.s32.totalorder %s95, 1
      %p931 = por %p929, %p930
      %p933 = scmp.ne.s32.totalorder %s916, %s932
      %p934 = scmp.eq.s32.totalorder %s95, 0
      %p935 = por %p933, %p934
      %s936 = ssub.s32 %s89, %s96
      %p937 = scmp.eq.s32.totalorder %s936, 0
      %s939 = sadd.s32 %s938, 1
      %s940 = scalar_select %p937, %s938, %s939
      %p943 = pneg %p937
      %p944 = scmp.eq.s32.totalorder %s89, 1
      %p945 = por %p943, %p944
      %p946 = scmp.ne.s32.totalorder %s938, %s941
      %p947 = scmp.eq.s32.totalorder %s89, 0
      %p948 = por %p946, %p947
      %p949 = scmp.ne.s32.totalorder %s938, %s941
      %p950 = scmp.eq.s32.totalorder %s94, 1
      %p951 = por %p949, %p950
      %p952 = scmp.ne.s32.totalorder %s941, %s942
      %p953 = scmp.eq.s32.totalorder %s94, 0
      %p954 = por %p952, %p953
      %p955 = scmp.ne.s32.totalorder %s941, %s942
      %p956 = scmp.eq.s32.totalorder %s95, 1
      %p957 = por %p955, %p956
      %p959 = scmp.ne.s32.totalorder %s942, %s958
      %p960 = scmp.eq.s32.totalorder %s95, 0
      %p961 = por %p959, %p960
      %p962 = scmp.le.s32.totalorder 1, %s89
      %p963 = scmp.lt.s32.totalorder %s89, 3
      %p964 = pnand %p962, %p963
      %p965 = pneg %p964
      // Predicated region
      $region9: #{tpu_custom_call.1} parent=5 // pred_check
        _
      $region10: #{tpu_custom_call.1} parent=5 // pred_check_branch
        %967 = sbr.rel (%p964) target = $region12
      $region11: #{tpu_custom_call.1} parent=5 // pred_region
        %s968 = ssub.s32 %s89, 1
        // Predicated region
        $region13: #{tpu_custom_call.1} parent=11 // pred_check
          %p969 = pneg %p188
        $region14: #{tpu_custom_call.1} parent=11 // pred_check_branch
          %971 = sbr.rel (%p969) target = $region16
        $region15: #{tpu_custom_call.1} parent=11 // pred_region
          _
        $region16: #{tpu_custom_call.1} parent=11 // pred_fallthru
          _
        // Predicated region
        $region17: #{tpu_custom_call.1} parent=11 // pred_check
          %p972 = pneg %p209
        $region18: #{tpu_custom_call.1} parent=11 // pred_check_branch
          %974 = sbr.rel (%p972) target = $region20
        $region19: #{tpu_custom_call.1} parent=11 // pred_region
          _
        $region20: #{tpu_custom_call.1} parent=11 // pred_fallthru
          _
        // Predicated region
        $region21: #{tpu_custom_call.1} parent=11 // pred_check
          %p975 = pneg %p230
        $region22: #{tpu_custom_call.1} parent=11 // pred_check_branch
          %977 = sbr.rel (%p975) target = $region24
        $region23: #{tpu_custom_call.1} parent=11 // pred_region
          _
        $region24: #{tpu_custom_call.1} parent=11 // pred_fallthru
          _
        // Predicated region
        $region25: #{tpu_custom_call.1} parent=11 // pred_check
          %p978 = pneg %p251
        $region26: #{tpu_custom_call.1} parent=11 // pred_check_branch
          %980 = sbr.rel (%p978) target = $region28
        $region27: #{tpu_custom_call.1} parent=11 // pred_region
          _
        $region28: #{tpu_custom_call.1} parent=11 // pred_fallthru
          _
        // Predicated region
        $region29: #{tpu_custom_call.1} parent=11 // pred_check
          %p981 = pneg %p272
        $region30: #{tpu_custom_call.1} parent=11 // pred_check_branch
          %983 = sbr.rel (%p981) target = $region32
        $region31: #{tpu_custom_call.1} parent=11 // pred_region
          _
        $region32: #{tpu_custom_call.1} parent=11 // pred_fallthru
          _
        // Predicated region
        $region33: #{tpu_custom_call.1} parent=11 // pred_check
          %p984 = pneg %p293
        $region34: #{tpu_custom_call.1} parent=11 // pred_check_branch
          %986 = sbr.rel (%p984) target = $region36
        $region35: #{tpu_custom_call.1} parent=11 // pred_region
          _
        $region36: #{tpu_custom_call.1} parent=11 // pred_fallthru
          _
        // Predicated region
        $region37: #{tpu_custom_call.1} parent=11 // pred_check
          %p987 = pneg %p314
        $region38: #{tpu_custom_call.1} parent=11 // pred_check_branch
          %989 = sbr.rel (%p987) target = $region40
        $region39: #{tpu_custom_call.1} parent=11 // pred_region
          _
        $region40: #{tpu_custom_call.1} parent=11 // pred_fallthru
          _
        // Predicated region
        $region41: #{tpu_custom_call.1} parent=11 // pred_check
          %p990 = pneg %p335
        $region42: #{tpu_custom_call.1} parent=11 // pred_check_branch
          %992 = sbr.rel (%p990) target = $region44
        $region43: #{tpu_custom_call.1} parent=11 // pred_region
          _
        $region44: #{tpu_custom_call.1} parent=11 // pred_fallthru
          _
        // Predicated region
        $region45: #{tpu_custom_call.1} parent=11 // pred_check
          %p993 = pneg %p356
        $region46: #{tpu_custom_call.1} parent=11 // pred_check_branch
          %995 = sbr.rel (%p993) target = $region48
        $region47: #{tpu_custom_call.1} parent=11 // pred_region
          _
        $region48: #{tpu_custom_call.1} parent=11 // pred_fallthru
          _
        // Predicated region
        $region49: #{tpu_custom_call.1} parent=11 // pred_check
          %p996 = pneg %p377
        $region50: #{tpu_custom_call.1} parent=11 // pred_check_branch
          %998 = sbr.rel (%p996) target = $region52
        $region51: #{tpu_custom_call.1} parent=11 // pred_region
          _
        $region52: #{tpu_custom_call.1} parent=11 // pred_fallthru
          _
        // Predicated region
        $region53: #{tpu_custom_call.1} parent=11 // pred_check
          %p999 = pneg %p398
        $region54: #{tpu_custom_call.1} parent=11 // pred_check_branch
          %1001 = sbr.rel (%p999) target = $region56
        $region55: #{tpu_custom_call.1} parent=11 // pred_region
          _
        $region56: #{tpu_custom_call.1} parent=11 // pred_fallthru
          _
        // Predicated region
        $region57: #{tpu_custom_call.1} parent=11 // pred_check
          %p1002 = pneg %p419
        $region58: #{tpu_custom_call.1} parent=11 // pred_check_branch
          %1004 = sbr.rel (%p1002) target = $region60
        $region59: #{tpu_custom_call.1} parent=11 // pred_region
          _
        $region60: #{tpu_custom_call.1} parent=11 // pred_fallthru
          _
        // Predicated region
        $region61: #{tpu_custom_call.1} parent=11 // pred_check
          %p1005 = pneg %p440
        $region62: #{tpu_custom_call.1} parent=11 // pred_check_branch
          %1007 = sbr.rel (%p1005) target = $region64
        $region63: #{tpu_custom_call.1} parent=11 // pred_region
          _
        $region64: #{tpu_custom_call.1} parent=11 // pred_fallthru
          _
        // Predicated region
        $region65: #{tpu_custom_call.1} parent=11 // pred_check
          %p1008 = pneg %p461
        $region66: #{tpu_custom_call.1} parent=11 // pred_check_branch
          %1010 = sbr.rel (%p1008) target = $region68
        $region67: #{tpu_custom_call.1} parent=11 // pred_region
          _
        $region68: #{tpu_custom_call.1} parent=11 // pred_fallthru
          _
        // Predicated region
        $region69: #{tpu_custom_call.1} parent=11 // pred_check
          %p1011 = pneg %p482
        $region70: #{tpu_custom_call.1} parent=11 // pred_check_branch
          %1013 = sbr.rel (%p1011) target = $region72
        $region71: #{tpu_custom_call.1} parent=11 // pred_region
          _
        $region72: #{tpu_custom_call.1} parent=11 // pred_fallthru
          _
        // Predicated region
        $region73: #{tpu_custom_call.1} parent=11 // pred_check
          %p1014 = pneg %p503
        $region74: #{tpu_custom_call.1} parent=11 // pred_check_branch
          %1016 = sbr.rel (%p1014) target = $region76
        $region75: #{tpu_custom_call.1} parent=11 // pred_region
          _
        $region76: #{tpu_custom_call.1} parent=11 // pred_fallthru
          _
        // Predicated region
        $region77: #{tpu_custom_call.1} parent=11 // pred_check
          %p1017 = pneg %p524
        $region78: #{tpu_custom_call.1} parent=11 // pred_check_branch
          %1019 = sbr.rel (%p1017) target = $region80
        $region79: #{tpu_custom_call.1} parent=11 // pred_region
          _
        $region80: #{tpu_custom_call.1} parent=11 // pred_fallthru
          _
        // Predicated region
        $region81: #{tpu_custom_call.1} parent=11 // pred_check
          %p1020 = pneg %p545
        $region82: #{tpu_custom_call.1} parent=11 // pred_check_branch
          %1022 = sbr.rel (%p1020) target = $region84
        $region83: #{tpu_custom_call.1} parent=11 // pred_region
          _
        $region84: #{tpu_custom_call.1} parent=11 // pred_fallthru
          _
        // Predicated region
        $region85: #{tpu_custom_call.1} parent=11 // pred_check
          %p1023 = pneg %p566
        $region86: #{tpu_custom_call.1} parent=11 // pred_check_branch
          %1025 = sbr.rel (%p1023) target = $region88
        $region87: #{tpu_custom_call.1} parent=11 // pred_region
          _
        $region88: #{tpu_custom_call.1} parent=11 // pred_fallthru
          _
        // Predicated region
        $region89: #{tpu_custom_call.1} parent=11 // pred_check
          %p1026 = pneg %p587
        $region90: #{tpu_custom_call.1} parent=11 // pred_check_branch
          %1028 = sbr.rel (%p1026) target = $region92
        $region91: #{tpu_custom_call.1} parent=11 // pred_region
          _
        $region92: #{tpu_custom_call.1} parent=11 // pred_fallthru
          _
        // Predicated region
        $region93: #{tpu_custom_call.1} parent=11 // pred_check
          %p1029 = pneg %p608
        $region94: #{tpu_custom_call.1} parent=11 // pred_check_branch
          %1031 = sbr.rel (%p1029) target = $region96
        $region95: #{tpu_custom_call.1} parent=11 // pred_region
          _
        $region96: #{tpu_custom_call.1} parent=11 // pred_fallthru
          _
        // Predicated region
        $region97: #{tpu_custom_call.1} parent=11 // pred_check
          %p1032 = pneg %p629
        $region98: #{tpu_custom_call.1} parent=11 // pred_check_branch
          %1034 = sbr.rel (%p1032) target = $region100
        $region99: #{tpu_custom_call.1} parent=11 // pred_region
          _
        $region100: #{tpu_custom_call.1} parent=11 // pred_fallthru
          _
        // Predicated region
        $region101: #{tpu_custom_call.1} parent=11 // pred_check
          %p1035 = pneg %p650
        $region102: #{tpu_custom_call.1} parent=11 // pred_check_branch
          %1037 = sbr.rel (%p1035) target = $region104
        $region103: #{tpu_custom_call.1} parent=11 // pred_region
          _
        $region104: #{tpu_custom_call.1} parent=11 // pred_fallthru
          _
        // Predicated region
        $region105: #{tpu_custom_call.1} parent=11 // pred_check
          %p1038 = pneg %p671
        $region106: #{tpu_custom_call.1} parent=11 // pred_check_branch
          %1040 = sbr.rel (%p1038) target = $region108
        $region107: #{tpu_custom_call.1} parent=11 // pred_region
          _
        $region108: #{tpu_custom_call.1} parent=11 // pred_fallthru
          _
        // Predicated region
        $region109: #{tpu_custom_call.1} parent=11 // pred_check
          %p1041 = pneg %p692
        $region110: #{tpu_custom_call.1} parent=11 // pred_check_branch
          %1043 = sbr.rel (%p1041) target = $region112
        $region111: #{tpu_custom_call.1} parent=11 // pred_region
          _
        $region112: #{tpu_custom_call.1} parent=11 // pred_fallthru
          _
        // Predicated region
        $region113: #{tpu_custom_call.1} parent=11 // pred_check
          %p1044 = pneg %p713
        $region114: #{tpu_custom_call.1} parent=11 // pred_check_branch
          %1046 = sbr.rel (%p1044) target = $region116
        $region115: #{tpu_custom_call.1} parent=11 // pred_region
          _
        $region116: #{tpu_custom_call.1} parent=11 // pred_fallthru
          _
        // Predicated region
        $region117: #{tpu_custom_call.1} parent=11 // pred_check
          %p1047 = pneg %p734
        $region118: #{tpu_custom_call.1} parent=11 // pred_check_branch
          %1049 = sbr.rel (%p1047) target = $region120
        $region119: #{tpu_custom_call.1} parent=11 // pred_region
          _
        $region120: #{tpu_custom_call.1} parent=11 // pred_fallthru
          _
        // Predicated region
        $region121: #{tpu_custom_call.1} parent=11 // pred_check
          %p1050 = pneg %p755
        $region122: #{tpu_custom_call.1} parent=11 // pred_check_branch
          %1052 = sbr.rel (%p1050) target = $region124
        $region123: #{tpu_custom_call.1} parent=11 // pred_region
          _
        $region124: #{tpu_custom_call.1} parent=11 // pred_fallthru
          _
        // Predicated region
        $region125: #{tpu_custom_call.1} parent=11 // pred_check
          %p1053 = pneg %p776
        $region126: #{tpu_custom_call.1} parent=11 // pred_check_branch
          %1055 = sbr.rel (%p1053) target = $region128
        $region127: #{tpu_custom_call.1} parent=11 // pred_region
          _
        $region128: #{tpu_custom_call.1} parent=11 // pred_fallthru
          _
        // Predicated region
        $region129: #{tpu_custom_call.1} parent=11 // pred_check
          %p1056 = pneg %p797
        $region130: #{tpu_custom_call.1} parent=11 // pred_check_branch
          %1058 = sbr.rel (%p1056) target = $region132
        $region131: #{tpu_custom_call.1} parent=11 // pred_region
          _
        $region132: #{tpu_custom_call.1} parent=11 // pred_fallthru
          _
        // Predicated region
        $region133: #{tpu_custom_call.1} parent=11 // pred_check
          %p1059 = pneg %p818
        $region134: #{tpu_custom_call.1} parent=11 // pred_check_branch
          %1061 = sbr.rel (%p1059) target = $region136
        $region135: #{tpu_custom_call.1} parent=11 // pred_region
          _
        $region136: #{tpu_custom_call.1} parent=11 // pred_fallthru
          _
        // Predicated region
        $region137: #{tpu_custom_call.1} parent=11 // pred_check
          %p1062 = pneg %p839
        $region138: #{tpu_custom_call.1} parent=11 // pred_check_branch
          %1064 = sbr.rel (%p1062) target = $region140
        $region139: #{tpu_custom_call.1} parent=11 // pred_region
          _
        $region140: #{tpu_custom_call.1} parent=11 // pred_fallthru
          _
        // Predicated region
        $region141: #{tpu_custom_call.1} parent=11 // pred_check
          %p1065 = pneg %p860
        $region142: #{tpu_custom_call.1} parent=11 // pred_check_branch
          %1067 = sbr.rel (%p1065) target = $region144
        $region143: #{tpu_custom_call.1} parent=11 // pred_region
          _
        $region144: #{tpu_custom_call.1} parent=11 // pred_fallthru
          _
        // Predicated region
        $region145: #{tpu_custom_call.1} parent=11 // pred_check
          %p1068 = pneg %p881
        $region146: #{tpu_custom_call.1} parent=11 // pred_check_branch
          %1070 = sbr.rel (%p1068) target = $region148
        $region147: #{tpu_custom_call.1} parent=11 // pred_region
          _
        $region148: #{tpu_custom_call.1} parent=11 // pred_fallthru
          _
        // Predicated region
        $region149: #{tpu_custom_call.1} parent=11 // pred_check
          %p1071 = pneg %p902
        $region150: #{tpu_custom_call.1} parent=11 // pred_check_branch
          %1073 = sbr.rel (%p1071) target = $region152
        $region151: #{tpu_custom_call.1} parent=11 // pred_region
          _
        $region152: #{tpu_custom_call.1} parent=11 // pred_fallthru
          _
      $region12: #{tpu_custom_call.1} parent=5 // pred_fallthru
        _
      %p1074 = scmp.lt.s32.totalorder %s89, 2
      // Predicated region
      $region153: #{tpu_custom_call.1} parent=5 // pred_check
        %p1075 = pneg %p1074
      $region154: #{tpu_custom_call.1} parent=5 // pred_check_branch
        %1077 = sbr.rel (%p1075) target = $region156
      $region155: #{tpu_custom_call.1} parent=5 // pred_region
        // Predicated region
        $region157: #{tpu_custom_call.1} parent=155 // pred_check
          %p1078 = pneg %p109
        $region158: #{tpu_custom_call.1} parent=155 // pred_check_branch
          %1080 = sbr.rel (%p1078) target = $region160
        $region159: #{tpu_custom_call.1} parent=155 // pred_region
          %p1081 = scmp.lt.s32.totalorder %s89, 1
          %s1082 = scalar_select %p1081, %s89, 1
          %s1083 = smul.addr %s1082, 8
          %s1084 = scalar_lea.vmem %s1, %s1083
        $region160: #{tpu_custom_call.1} parent=155 // pred_fallthru
          _
        // Predicated region
        $region161: #{tpu_custom_call.1} parent=155 // pred_check
          %p1085 = pneg %p135
        $region162: #{tpu_custom_call.1} parent=155 // pred_check_branch
          %1087 = sbr.rel (%p1085) target = $region164
        $region163: #{tpu_custom_call.1} parent=155 // pred_region
          %p1088 = scmp.lt.s32.totalorder %s89, 1
          %s1089 = scalar_select %p1088, %s89, 1
          %s1090 = smul.addr %s1089, 2
          %s1091 = smul.addr %s1090, 8
          %s1092 = scalar_lea.vmem %s3, %s1091
        $region164: #{tpu_custom_call.1} parent=155 // pred_fallthru
          _
        // Predicated region
        $region165: #{tpu_custom_call.1} parent=155 // pred_check
          %p1093 = pneg %p161
        $region166: #{tpu_custom_call.1} parent=155 // pred_check_branch
          %1095 = sbr.rel (%p1093) target = $region168
        $region167: #{tpu_custom_call.1} parent=155 // pred_region
          %p1096 = scmp.lt.s32.totalorder %s89, 1
          %s1097 = scalar_select %p1096, %s89, 1
          %s1098 = smul.addr %s1097, 2
          %s1099 = smul.addr %s1098, 8
          %s1100 = scalar_lea.vmem %s5, %s1099
        $region168: #{tpu_custom_call.1} parent=155 // pred_fallthru
          _
      $region156: #{tpu_custom_call.1} parent=5 // pred_fallthru
        _
      %p1101 = scmp.le.s32.totalorder 1, %s89
      %p1102 = scmp.lt.s32.totalorder %s89, 3
      %p1103 = pnand %p1101, %p1102
      %p1104 = pneg %p1103
      // Predicated region
      $region169: #{tpu_custom_call.1} parent=5 // pred_check
        _
      $region170: #{tpu_custom_call.1} parent=5 // pred_check_branch
        %1106 = sbr.rel (%p1103) target = $region172
      $region171: #{tpu_custom_call.1} parent=5 // pred_region
        %s1107 = ssub.s32 %s89, 1
        %p1108 = scmp.lt.s32.totalorder %s94, 1
        %s1109 = scalar_select %p1108, %s94, 1
        %s1110 = smul.addr %s1109, 8
        %s1111 = scalar_lea.vmem %s1, %s1110
        %p1112 = pneg %p115
        %p1113 = pneg %p112
        %p1114 = scmp.lt.s32.totalorder %s94, 1
        %s1115 = scalar_select %p1114, %s94, 1
        %s1116 = smul.addr %s1115, 2
        %s1117 = smul.addr %s1116, 8
        %s1118 = scalar_lea.vmem %s3, %s1117
        %p1119 = pneg %p141
        %p1120 = pneg %p138
        %p1121 = scmp.lt.s32.totalorder %s94, 1
        %s1122 = scalar_select %p1121, %s94, 1
        %s1123 = smul.addr %s1122, 2
        %s1124 = smul.addr %s1123, 8
        %s1125 = scalar_lea.vmem %s5, %s1124
        %p1126 = pneg %p167
        %p1127 = pneg %p164
        %p1128 = pneg %p188
        %p1129 = pneg %p185
        %p1130 = pneg %p209
        %p1131 = pneg %p206
        %p1132 = pneg %p230
        %p1133 = pneg %p227
        %p1134 = pneg %p251
        %p1135 = pneg %p248
        %p1136 = pneg %p272
        %p1137 = pneg %p269
        %p1138 = pneg %p293
        %p1139 = pneg %p290
        %p1140 = pneg %p314
        %p1141 = pneg %p311
        %p1142 = pneg %p335
        %p1143 = pneg %p332
        %p1144 = pneg %p356
        %p1145 = pneg %p353
        %p1146 = pneg %p377
        %p1147 = pneg %p374
        %p1148 = pneg %p398
        %p1149 = pneg %p395
        %p1150 = pneg %p419
        %p1151 = pneg %p416
        %p1152 = pneg %p440
        %p1153 = pneg %p437
        %p1154 = pneg %p461
        %p1155 = pneg %p458
        %p1156 = pneg %p482
        %p1157 = pneg %p479
        %p1158 = pneg %p503
        %p1159 = pneg %p500
        %p1160 = pneg %p524
        %p1161 = pneg %p521
        %p1162 = pneg %p545
        %p1163 = pneg %p542
        %p1164 = pneg %p566
        %p1165 = pneg %p563
        %p1166 = pneg %p587
        %p1167 = pneg %p584
        %p1168 = pneg %p608
        %p1169 = pneg %p605
        %p1170 = pneg %p629
        %p1171 = pneg %p626
        %p1172 = pneg %p650
        %p1173 = pneg %p647
        %p1174 = pneg %p671
        %p1175 = pneg %p668
        %p1176 = pneg %p692
        %p1177 = pneg %p689
        %p1178 = pneg %p713
        %p1179 = pneg %p710
        %p1180 = pneg %p734
        %p1181 = pneg %p731
        %p1182 = pneg %p755
        %p1183 = pneg %p752
        %p1184 = pneg %p776
        %p1185 = pneg %p773
        %p1186 = pneg %p797
        %p1187 = pneg %p794
        %p1188 = pneg %p818
        %p1189 = pneg %p815
        %p1190 = pneg %p839
        %p1191 = pneg %p836
        %p1192 = pneg %p860
        %p1193 = pneg %p857
        %p1194 = pneg %p881
        %p1195 = pneg %p878
        %p1196 = pneg %p902
        %p1197 = pneg %p899
        %p1198 = pneg %p928
        %p1199 = pneg %p925
        %s1200 = sand.u32 %s915, 1
        %s1201 = scalar_lea.sflag [#allocation3], %s1200
        %s1202 = sand.u32 %s915, 1
        %s1203 = smul.addr %s1202, 8
        %s1204 = scalar_lea.vmem [#allocation2], %s1203
        %p1205 = pneg %p954
        %p1206 = pneg %p951
        %p1207 = scmp.lt.s32.totalorder %s94, 1
        %s1208 = scalar_select %p1207, %s94, 1
        %s1209 = smul.addr %s1208, 2
        %s1210 = smul.addr %s1209, 8
        %s1211 = scalar_lea.vmem %s79, %s1210
        %p1212 = scmp.lt.s32.totalorder %s94, 1
        %s1213 = scalar_select %p1212, %s94, 1
        %s1214 = smul.addr %s1213, 8
        %s1215 = scalar_lea.vmem %s1, %s1214
        %p1216 = scmp.lt.s32.totalorder %s94, 1
        %s1217 = scalar_select %p1216, %s94, 1
        %s1218 = smul.addr %s1217, 2
        %s1219 = smul.addr %s1218, 8
        %s1220 = scalar_lea.vmem %s3, %s1219
        %p1221 = scmp.lt.s32.totalorder %s94, 1
        %s1222 = scalar_select %p1221, %s94, 1
        %s1223 = smul.addr %s1222, 2
        %s1224 = smul.addr %s1223, 8
        %s1225 = scalar_lea.vmem %s5, %s1224
        %p1226 = scmp.lt.s32.totalorder %s94, 1
        %s1227 = scalar_select %p1226, %s94, 1
        %s1228 = smul.addr %s1227, 2
        %s1229 = smul.addr %s1228, 8
        %s1230 = scalar_lea.vmem %s79, %s1229
        %v1231 = vld [vmem:[%s1215] sm:$0xff]
        %v1232 = vld [vmem:[%s1220] sm:$0xff]
        %v1233 = vld [vmem:[%s1220 + $0x8] sm:$0xf]
        %v1234 = vld [vmem:[%s1225] sm:$0xff]
        %v1235 = vld [vmem:[%s1225 + $0x8] sm:$0xf]
        %v1236 = vld [vmem:[%s35] sm:$0xff]
        %v1237 = vld [vmem:[%s35 + $0x8] sm:$0xff]
        %v1238 = vld [vmem:[%s35 + $0x10] sm:$0xff]
        %v1239 = vld [vmem:[%s35 + $0x18] sm:$0xff]
        %vm1240 = vcmask 64512
        %v1241 = vsel %vm1240, %v1234, 0.0
        %vm1242 = vcmask 60416
        %v1243 = vsel %vm1242, %v1235, 0.0
        %v1244 = vadd.f32 %v1241, %v1243
        %v1245 = vrot.slane %v1244, 4
        %v1246 = vadd.f32 %v1244, %v1245
        %v1247 = vrot.slane %v1246, 2
        %v1248 = vadd.f32 %v1246, %v1247
        %v1249 = vrot.slane %v1248, 1
        %v1250 = vadd.f32 %v1248, %v1249
        %v1251 = vlaneseq
        %v1252 = vshrl.u32 %v1251, 7
        %1254 = vset.pattern.permute.xlu0 %v1252
        %1255 = vperm.xlu0 %1254, %v1250
        %v1256 = vpop.permute.xlu0 %1255
        %v1257 = vrcp.pop %v1256
        %v1258 = vmul.f32 %v1256, %v1257
        %v1259 = vsub.f32 1.0, %v1258
        %v1260 = vmul.f32 %v1257, %v1259
        %v1261 = vadd.f32 %v1257, %v1260
        %vm1262 = vweird.f32 %v1256
        %vm1263 = vweird.f32 %v1257
        %vm1264 = vmor %vm1262, %vm1263
        %v1265 = vsel %vm1264, %v1257, %v1261
        %v1266 = vand.u32 2147483647, %v1256
        %vm1267 = vcmp.eq.f32.partialorder %v1266, 8.507059e+37
        %v1268 = vand.u32 %v1256, 2147483648
        %v1269 = vor.u32 1.1754944e-38, %v1268
        %v1270 = vsel %vm1267, %v1269, %v1265
        %v1271 = vmul.f32 1.0, %v1270
        %1272 = vadd.xlane.f32.xlu0 %v1241
        %v1273 = vpop.xlane.xlu0 %1272
        %1274 = vadd.xlane.f32.xlu0 %v1243
        %v1275 = vpop.xlane.xlu0 %1274
        %v1276 = vrcp.pop %v1273
        %v1277 = vmul.f32 %v1273, %v1276
        %v1278 = vsub.f32 1.0, %v1277
        %v1279 = vmul.f32 %v1276, %v1278
        %v1280 = vadd.f32 %v1276, %v1279
        %vm1281 = vweird.f32 %v1273
        %vm1282 = vweird.f32 %v1276
        %vm1283 = vmor %vm1281, %vm1282
        %v1284 = vsel %vm1283, %v1276, %v1280
        %v1285 = vand.u32 2147483647, %v1273
        %vm1286 = vcmp.eq.f32.partialorder %v1285, 8.507059e+37
        %v1287 = vand.u32 %v1273, 2147483648
        %v1288 = vor.u32 1.1754944e-38, %v1287
        %v1289 = vsel %vm1286, %v1288, %v1284
        %v1290 = vmul.f32 1.0, %v1289
        %v1291 = vrcp.pop %v1275
        %v1292 = vmul.f32 %v1275, %v1291
        %v1293 = vsub.f32 1.0, %v1292
        %v1294 = vmul.f32 %v1291, %v1293
        %v1295 = vadd.f32 %v1291, %v1294
        %vm1296 = vweird.f32 %v1275
        %vm1297 = vweird.f32 %v1291
        %vm1298 = vmor %vm1296, %vm1297
        %v1299 = vsel %vm1298, %v1291, %v1295
        %v1300 = vand.u32 2147483647, %v1275
        %vm1301 = vcmp.eq.f32.partialorder %v1300, 8.507059e+37
        %v1302 = vand.u32 %v1275, 2147483648
        %v1303 = vor.u32 1.1754944e-38, %v1302
        %v1304 = vsel %vm1301, %v1303, %v1299
        %v1305 = vmul.f32 1.0, %v1304
        %v1306 = vld [vmem:[%s11] sm:$0xff]
        %v1307 = vld [vmem:[%s11 + $0x8] sm:$0xff]
        %v1308 = vld [vmem:[%s11 + $0x10] sm:$0xff]
        %v1309 = vld [vmem:[%s11 + $0x18] sm:$0xff]
        %v1310 = vld [vmem:[%s13] sm:$0x1]
        %v1312 = vperm.slane %v1310, 0
        %vm1314 = vcmask 261120
        %v1316 = vsel %vm1314, %v1232, 0
        %v1319 = vsel %vm1314, %v1233, 0
        %1321 = vmatpush.msra.mxu0 0.0
        %1322 = vmatpush.msra.mxu0 0.0
        %1323 = vmatpush.msra.mxu0 0.0
        %1324 = vmatpush.msra.mxu0 0.0
        %1325 = vmatpush.msra.mxu0 0.0
        %1326 = vmatpush.msra.mxu0 0.0
        %1327 = vmatpush.msra.mxu0 0.0
        %1328 = vmatpush.msra.mxu0 0.0
        %1329 = vmatpush.msra.mxu0 0.0
        %1330 = vmatpush.msra.mxu0 0.0
        %1331 = vmatpush.msra.mxu0 0.0
        %1332 = vmatpush.msra.mxu0 0.0
        %1333 = vmatpush.msra.mxu0 %v1309
        %1334 = vmatpush.msra.mxu0 %v1308
        %1335 = vmatpush.msra.mxu0 %v1307
        %1336 = vmatpush.msra.mxu0 %v1306
        %1337 = vmatmul.f32.gmra.mxu0 %v1316
        %v1338 = vpop.f32.mrf.mxu0
        %v1339 = vadd.f32 %v1312, %v1338
        %1340 = vmatmul.f32.gmra.mxu0 %v1319
        %v1341 = vpop.f32.mrf.mxu0
        %v1342 = vadd.f32 %v1312, %v1341
        %1343 = vdwg.mxu0
        %1344 = vxpose.xlu0.b32.start [1/16] %v1234, 128
        %1345 = vxpose.xlu0.b32.cont [2/16] %v1235, 128
        %1346 = vxpose.xlu0.b32.cont [3/16] 0.0, 128
        %1347 = vxpose.xlu0.b32.cont [4/16] 0.0, 128
        %1348 = vxpose.xlu0.b32.cont [5/16] 0.0, 128
        %1349 = vxpose.xlu0.b32.cont [6/16] 0.0, 128
        %1350 = vxpose.xlu0.b32.cont [7/16] 0.0, 128
        %1351 = vxpose.xlu0.b32.cont [8/16] 0.0, 128
        %1352 = vxpose.xlu0.b32.cont [9/16] 0.0, 128
        %1353 = vxpose.xlu0.b32.cont [10/16] 0.0, 128
        %1354 = vxpose.xlu0.b32.cont [11/16] 0.0, 128
        %1355 = vxpose.xlu0.b32.cont [12/16] 0.0, 128
        %1356 = vxpose.xlu0.b32.cont [13/16] 0.0, 128
        %1357 = vxpose.xlu0.b32.cont [14/16] 0.0, 128
        %1358 = vxpose.xlu0.b32.cont [15/16] 0.0, 128
        %1359 = vxpose.xlu0.b32.end [16/16] 0.0, 128
        %v1360 = vpop.trf.xlu0
        %v1361 = vpop.trf.xlu0
        %v1362 = vpop.trf.xlu0
        %v1363 = vpop.trf.xlu0
        %v1364 = vpop.trf.xlu0
        %v1365 = vpop.trf.xlu0
        %v1366 = vpop.trf.xlu0
        %v1367 = vpop.trf.xlu0
        %v1368 = vpop.trf.xlu0
        %v1369 = vpop.trf.xlu0
        %v1370 = vpop.trf.xlu0
        %v1371 = vpop.trf.xlu0
        %v1372 = vpop.trf.xlu0
        %v1373 = vpop.trf.xlu0
        %v1374 = vpop.trf.xlu0
        %v1375 = vpop.trf.xlu0
        %vm1376 = vcmask 97280
        %v1378 = vsel %vm1376, %v1360, 0
        %vm1380 = vcmask 1043456
        %v1382 = vsel %vm1380, %v1342, 0
        %1384 = vmatpush.msra.mxu0 0.0
        %1385 = vmatpush.msra.mxu0 0.0
        %1386 = vmatpush.msra.mxu0 0.0
        %1387 = vmatpush.msra.mxu0 0.0
        %1388 = vmatpush.msra.mxu0 0.0
        %1389 = vmatpush.msra.mxu0 0.0
        %1390 = vmatpush.msra.mxu0 0.0
        %1391 = vmatpush.msra.mxu0 0.0
        %1392 = vmatpush.msra.mxu0 0.0
        %1393 = vmatpush.msra.mxu0 0.0
        %1394 = vmatpush.msra.mxu0 0.0
        %1395 = vmatpush.msra.mxu0 0.0
        %1396 = vmatpush.msra.mxu0 0.0
        %1397 = vmatpush.msra.mxu0 0.0
        %1398 = vmatpush.msra.mxu0 %v1382
        %1399 = vmatpush.msra.mxu0 %v1339
        %1400 = vmatmul.f32.gmra.mxu0 %v1378
        %v1401 = vpop.f32.mrf.mxu0
        %v1402 = vadd.f32 0.0, %v1401
        %1403 = vdwg.mxu0
        %v1404 = vmul.f32 %v1402, %v1271
        %v1405 = vld [vmem:[%s7] sm:$0xff]
        %v1406 = vld [vmem:[%s7 + $0x8] sm:$0xff]
        %v1407 = vld [vmem:[%s7 + $0x10] sm:$0xff]
        %v1408 = vld [vmem:[%s7 + $0x18] sm:$0xff]
        %v1409 = vld [vmem:[%s9] sm:$0x1]
        %v1411 = vperm.slane %v1409, 0
        %v1414 = vsel %vm1314, %v1231, 0
        %1416 = vmatpush.msra.mxu0 0.0
        %1417 = vmatpush.msra.mxu0 0.0
        %1418 = vmatpush.msra.mxu0 0.0
        %1419 = vmatpush.msra.mxu0 0.0
        %1420 = vmatpush.msra.mxu0 0.0
        %1421 = vmatpush.msra.mxu0 0.0
        %1422 = vmatpush.msra.mxu0 0.0
        %1423 = vmatpush.msra.mxu0 0.0
        %1424 = vmatpush.msra.mxu0 0.0
        %1425 = vmatpush.msra.mxu0 0.0
        %1426 = vmatpush.msra.mxu0 0.0
        %1427 = vmatpush.msra.mxu0 0.0
        %1428 = vmatpush.msra.mxu0 %v1408
        %1429 = vmatpush.msra.mxu0 %v1407
        %1430 = vmatpush.msra.mxu0 %v1406
        %1431 = vmatpush.msra.mxu0 %v1405
        %1432 = vmatmul.f32.gmra.mxu0 %v1414
        %v1433 = vpop.f32.mrf.mxu0
        %v1434 = vadd.f32 %v1411, %v1433
        %1435 = vdwg.mxu0
        %v1436 = vadd.f32 %v1434, %v1404
        %v1437 = vld [vmem:[%s15] sm:$0xff]
        %v1438 = vld [vmem:[%s15 + $0x8] sm:$0xff]
        %v1439 = vld [vmem:[%s15 + $0x10] sm:$0xff]
        %v1440 = vld [vmem:[%s15 + $0x18] sm:$0xff]
        %1442 = vrot.lane.b32.xlu0 %v1436, 120
        %v1443 = vpop.permute.xlu0 %1442
        %v1444 = vsel %vm1240, %v1436, 0
        %v1446 = vsel %vm1240, %v1443, 0
        %1448 = vmatpush.xpose.msra.mxu0 0.0
        %1449 = vmatpush.xpose.msra.mxu0 0.0
        %1450 = vmatpush.xpose.msra.mxu0 0.0
        %1451 = vmatpush.xpose.msra.mxu0 0.0
        %1452 = vmatpush.xpose.msra.mxu0 0.0
        %1453 = vmatpush.xpose.msra.mxu0 0.0
        %1454 = vmatpush.xpose.msra.mxu0 0.0
        %1455 = vmatpush.xpose.msra.mxu0 0.0
        %1456 = vmatpush.xpose.msra.mxu0 0.0
        %1457 = vmatpush.xpose.msra.mxu0 0.0
        %1458 = vmatpush.xpose.msra.mxu0 0.0
        %1459 = vmatpush.xpose.msra.mxu0 0.0
        %1460 = vmatpush.xpose.msra.mxu0 0.0
        %1461 = vmatpush.xpose.msra.mxu0 0.0
        %1462 = vmatpush.xpose.msra.mxu0 0.0
        %1463 = vmatpush.xpose.msra.mxu0 %v1446
        %1464 = vmatmul.f32.gmra.mxu0 %v1444
        %v1465 = vpop.f32.mrf.mxu0
        %v1466 = vadd.f32 0.0, %v1465
        %1467 = vdwg.mxu0
        %v1468 = vmul.f32 %v1466, 0.35355338
        %v1469 = vsel %vm1240, %v1468, -inf
        %1470 = vmax.xlane.f32.xlu0 %v1469
        %v1471 = vpop.xlane.xlu0 %1470
        %v1472 = vsub.f32 %v1468, %v1471
        %v1473 = vmul.f32 %v1472, 1.442695
        %v1474 = vpow.pop %v1473
        %v1475 = vsel %vm1240, %v1474, 0.0
        %1476 = vadd.xlane.f32.xlu0 %v1475
        %v1477 = vpop.xlane.xlu0 %1476
        %v1478 = vrcp.pop %v1477
        %v1479 = vmul.f32 %v1474, %v1478
        %1480 = vrot.lane.b32.xlu0 %v1436, 112
        %v1481 = vpop.permute.xlu0 %1480
        %v1484 = vsel %vm1240, %v1479, 0
        %1486 = vmatpush.msra.mxu0 0.0
        %1487 = vmatpush.msra.mxu0 0.0
        %1488 = vmatpush.msra.mxu0 0.0
        %1489 = vmatpush.msra.mxu0 0.0
        %1490 = vmatpush.msra.mxu0 0.0
        %1491 = vmatpush.msra.mxu0 0.0
        %1492 = vmatpush.msra.mxu0 0.0
        %1493 = vmatpush.msra.mxu0 0.0
        %1494 = vmatpush.msra.mxu0 0.0
        %1495 = vmatpush.msra.mxu0 0.0
        %1496 = vmatpush.msra.mxu0 0.0
        %1497 = vmatpush.msra.mxu0 0.0
        %1498 = vmatpush.msra.mxu0 0.0
        %1499 = vmatpush.msra.mxu0 0.0
        %1500 = vmatpush.msra.mxu0 0.0
        %1501 = vmatpush.msra.mxu0 %v1481
        %1502 = vmatmul.f32.gmra.mxu0 %v1484
        %v1503 = vpop.f32.mrf.mxu0
        %v1504 = vadd.f32 0.0, %v1503
        %1505 = vdwg.mxu0
        %1506 = vrot.lane.b32.xlu0 %v1436, 104
        %v1507 = vpop.permute.xlu0 %1506
        %1508 = vrot.lane.b32.xlu0 %v1436, 96
        %v1509 = vpop.permute.xlu0 %1508
        %v1510 = vsel %vm1240, %v1507, 0
        %v1512 = vsel %vm1240, %v1509, 0
        %1514 = vmatpush.xpose.msra.mxu0 0.0
        %1515 = vmatpush.xpose.msra.mxu0 0.0
        %1516 = vmatpush.xpose.msra.mxu0 0.0
        %1517 = vmatpush.xpose.msra.mxu0 0.0
        %1518 = vmatpush.xpose.msra.mxu0 0.0
        %1519 = vmatpush.xpose.msra.mxu0 0.0
        %1520 = vmatpush.xpose.msra.mxu0 0.0
        %1521 = vmatpush.xpose.msra.mxu0 0.0
        %1522 = vmatpush.xpose.msra.mxu0 0.0
        %1523 = vmatpush.xpose.msra.mxu0 0.0
        %1524 = vmatpush.xpose.msra.mxu0 0.0
        %1525 = vmatpush.xpose.msra.mxu0 0.0
        %1526 = vmatpush.xpose.msra.mxu0 0.0
        %1527 = vmatpush.xpose.msra.mxu0 0.0
        %1528 = vmatpush.xpose.msra.mxu0 0.0
        %1529 = vmatpush.xpose.msra.mxu0 %v1512
        %1530 = vmatmul.f32.gmra.mxu0 %v1510
        %v1531 = vpop.f32.mrf.mxu0
        %v1532 = vadd.f32 0.0, %v1531
        %1533 = vdwg.mxu0
        %v1534 = vmul.f32 %v1532, 0.35355338
        %v1535 = vsel %vm1240, %v1534, -inf
        %1536 = vmax.xlane.f32.xlu0 %v1535
        %v1537 = vpop.xlane.xlu0 %1536
        %v1538 = vsub.f32 %v1534, %v1537
        %v1539 = vmul.f32 %v1538, 1.442695
        %v1540 = vpow.pop %v1539
        %v1541 = vsel %vm1240, %v1540, 0.0
        %1542 = vadd.xlane.f32.xlu0 %v1541
        %v1543 = vpop.xlane.xlu0 %1542
        %v1544 = vrcp.pop %v1543
        %v1545 = vmul.f32 %v1540, %v1544
        %1546 = vrot.lane.b32.xlu0 %v1436, 88
        %v1547 = vpop.permute.xlu0 %1546
        %v1550 = vsel %vm1240, %v1545, 0
        %1552 = vmatpush.msra.mxu0 0.0
        %1553 = vmatpush.msra.mxu0 0.0
        %1554 = vmatpush.msra.mxu0 0.0
        %1555 = vmatpush.msra.mxu0 0.0
        %1556 = vmatpush.msra.mxu0 0.0
        %1557 = vmatpush.msra.mxu0 0.0
        %1558 = vmatpush.msra.mxu0 0.0
        %1559 = vmatpush.msra.mxu0 0.0
        %1560 = vmatpush.msra.mxu0 0.0
        %1561 = vmatpush.msra.mxu0 0.0
        %1562 = vmatpush.msra.mxu0 0.0
        %1563 = vmatpush.msra.mxu0 0.0
        %1564 = vmatpush.msra.mxu0 0.0
        %1565 = vmatpush.msra.mxu0 0.0
        %1566 = vmatpush.msra.mxu0 0.0
        %1567 = vmatpush.msra.mxu0 %v1547
        %1568 = vmatmul.f32.gmra.mxu0 %v1550
        %v1569 = vpop.f32.mrf.mxu0
        %v1570 = vadd.f32 0.0, %v1569
        %1571 = vdwg.mxu0
        %v1573 = vsel %vm1240, %v1570, 0
        %1575 = vmatpush.msra.mxu0 0.0
        %1576 = vmatpush.msra.mxu0 0.0
        %1577 = vmatpush.msra.mxu0 0.0
        %1578 = vmatpush.msra.mxu0 0.0
        %1579 = vmatpush.msra.mxu0 0.0
        %1580 = vmatpush.msra.mxu0 0.0
        %1581 = vmatpush.msra.mxu0 0.0
        %1582 = vmatpush.msra.mxu0 0.0
        %1583 = vmatpush.msra.mxu0 0.0
        %1584 = vmatpush.msra.mxu0 0.0
        %1585 = vmatpush.msra.mxu0 0.0
        %1586 = vmatpush.msra.mxu0 0.0
        %1587 = vmatpush.msra.mxu0 0.0
        %1588 = vmatpush.msra.mxu0 0.0
        %1589 = vmatpush.msra.mxu0 0.0
        %1590 = vmatpush.msra.mxu0 %v1438
        %1591 = vmatmul.f32.gmra.mxu0 %v1573
        %v1592 = vpop.f32.mrf.mxu0
        %v1593 = vadd.f32 0.0, %v1592
        %1594 = vdwg.mxu0
        %v1596 = vsel %vm1240, %v1504, 0
        %1598 = vmatpush.msra.mxu0 0.0
        %1599 = vmatpush.msra.mxu0 0.0
        %1600 = vmatpush.msra.mxu0 0.0
        %1601 = vmatpush.msra.mxu0 0.0
        %1602 = vmatpush.msra.mxu0 0.0
        %1603 = vmatpush.msra.mxu0 0.0
        %1604 = vmatpush.msra.mxu0 0.0
        %1605 = vmatpush.msra.mxu0 0.0
        %1606 = vmatpush.msra.mxu0 0.0
        %1607 = vmatpush.msra.mxu0 0.0
        %1608 = vmatpush.msra.mxu0 0.0
        %1609 = vmatpush.msra.mxu0 0.0
        %1610 = vmatpush.msra.mxu0 0.0
        %1611 = vmatpush.msra.mxu0 0.0
        %1612 = vmatpush.msra.mxu0 0.0
        %1613 = vmatpush.msra.mxu0 %v1437
        %1614 = vmatmul.f32.gmra.mxu0 %v1596
        %v1615 = vpop.f32.mrf.mxu0
        %v1616 = vadd.f32 %v1593, %v1615
        %1617 = vdwg.mxu0
        %1618 = vrot.lane.b32.xlu0 %v1436, 80
        %v1619 = vpop.permute.xlu0 %1618
        %1620 = vrot.lane.b32.xlu0 %v1436, 72
        %v1621 = vpop.permute.xlu0 %1620
        %v1622 = vsel %vm1240, %v1619, 0
        %v1624 = vsel %vm1240, %v1621, 0
        %1626 = vmatpush.xpose.msra.mxu0 0.0
        %1627 = vmatpush.xpose.msra.mxu0 0.0
        %1628 = vmatpush.xpose.msra.mxu0 0.0
        %1629 = vmatpush.xpose.msra.mxu0 0.0
        %1630 = vmatpush.xpose.msra.mxu0 0.0
        %1631 = vmatpush.xpose.msra.mxu0 0.0
        %1632 = vmatpush.xpose.msra.mxu0 0.0
        %1633 = vmatpush.xpose.msra.mxu0 0.0
        %1634 = vmatpush.xpose.msra.mxu0 0.0
        %1635 = vmatpush.xpose.msra.mxu0 0.0
        %1636 = vmatpush.xpose.msra.mxu0 0.0
        %1637 = vmatpush.xpose.msra.mxu0 0.0
        %1638 = vmatpush.xpose.msra.mxu0 0.0
        %1639 = vmatpush.xpose.msra.mxu0 0.0
        %1640 = vmatpush.xpose.msra.mxu0 0.0
        %1641 = vmatpush.xpose.msra.mxu0 %v1624
        %1642 = vmatmul.f32.gmra.mxu0 %v1622
        %v1643 = vpop.f32.mrf.mxu0
        %v1644 = vadd.f32 0.0, %v1643
        %1645 = vdwg.mxu0
        %v1646 = vmul.f32 %v1644, 0.35355338
        %v1647 = vsel %vm1240, %v1646, -inf
        %1648 = vmax.xlane.f32.xlu0 %v1647
        %v1649 = vpop.xlane.xlu0 %1648
        %v1650 = vsub.f32 %v1646, %v1649
        %v1651 = vmul.f32 %v1650, 1.442695
        %v1652 = vpow.pop %v1651
        %v1653 = vsel %vm1240, %v1652, 0.0
        %1654 = vadd.xlane.f32.xlu0 %v1653
        %v1655 = vpop.xlane.xlu0 %1654
        %v1656 = vrcp.pop %v1655
        %v1657 = vmul.f32 %v1652, %v1656
        %1658 = vrot.lane.b32.xlu0 %v1436, 64
        %v1659 = vpop.permute.xlu0 %1658
        %v1662 = vsel %vm1240, %v1657, 0
        %1664 = vmatpush.msra.mxu0 0.0
        %1665 = vmatpush.msra.mxu0 0.0
        %1666 = vmatpush.msra.mxu0 0.0
        %1667 = vmatpush.msra.mxu0 0.0
        %1668 = vmatpush.msra.mxu0 0.0
        %1669 = vmatpush.msra.mxu0 0.0
        %1670 = vmatpush.msra.mxu0 0.0
        %1671 = vmatpush.msra.mxu0 0.0
        %1672 = vmatpush.msra.mxu0 0.0
        %1673 = vmatpush.msra.mxu0 0.0
        %1674 = vmatpush.msra.mxu0 0.0
        %1675 = vmatpush.msra.mxu0 0.0
        %1676 = vmatpush.msra.mxu0 0.0
        %1677 = vmatpush.msra.mxu0 0.0
        %1678 = vmatpush.msra.mxu0 0.0
        %1679 = vmatpush.msra.mxu0 %v1659
        %1680 = vmatmul.f32.gmra.mxu0 %v1662
        %v1681 = vpop.f32.mrf.mxu0
        %v1682 = vadd.f32 0.0, %v1681
        %1683 = vdwg.mxu0
        %v1685 = vsel %vm1240, %v1682, 0
        %1687 = vmatpush.msra.mxu0 0.0
        %1688 = vmatpush.msra.mxu0 0.0
        %1689 = vmatpush.msra.mxu0 0.0
        %1690 = vmatpush.msra.mxu0 0.0
        %1691 = vmatpush.msra.mxu0 0.0
        %1692 = vmatpush.msra.mxu0 0.0
        %1693 = vmatpush.msra.mxu0 0.0
        %1694 = vmatpush.msra.mxu0 0.0
        %1695 = vmatpush.msra.mxu0 0.0
        %1696 = vmatpush.msra.mxu0 0.0
        %1697 = vmatpush.msra.mxu0 0.0
        %1698 = vmatpush.msra.mxu0 0.0
        %1699 = vmatpush.msra.mxu0 0.0
        %1700 = vmatpush.msra.mxu0 0.0
        %1701 = vmatpush.msra.mxu0 0.0
        %1702 = vmatpush.msra.mxu0 %v1439
        %1703 = vmatmul.f32.gmra.mxu0 %v1685
        %v1704 = vpop.f32.mrf.mxu0
        %v1705 = vadd.f32 0.0, %v1704
        %1706 = vdwg.mxu0
        %v1707 = vadd.f32 %v1616, %v1705
        %1708 = vrot.lane.b32.xlu0 %v1436, 56
        %v1709 = vpop.permute.xlu0 %1708
        %1710 = vrot.lane.b32.xlu0 %v1436, 48
        %v1711 = vpop.permute.xlu0 %1710
        %v1712 = vsel %vm1240, %v1709, 0
        %v1714 = vsel %vm1240, %v1711, 0
        %1716 = vmatpush.xpose.msra.mxu0 0.0
        %1717 = vmatpush.xpose.msra.mxu0 0.0
        %1718 = vmatpush.xpose.msra.mxu0 0.0
        %1719 = vmatpush.xpose.msra.mxu0 0.0
        %1720 = vmatpush.xpose.msra.mxu0 0.0
        %1721 = vmatpush.xpose.msra.mxu0 0.0
        %1722 = vmatpush.xpose.msra.mxu0 0.0
        %1723 = vmatpush.xpose.msra.mxu0 0.0
        %1724 = vmatpush.xpose.msra.mxu0 0.0
        %1725 = vmatpush.xpose.msra.mxu0 0.0
        %1726 = vmatpush.xpose.msra.mxu0 0.0
        %1727 = vmatpush.xpose.msra.mxu0 0.0
        %1728 = vmatpush.xpose.msra.mxu0 0.0
        %1729 = vmatpush.xpose.msra.mxu0 0.0
        %1730 = vmatpush.xpose.msra.mxu0 0.0
        %1731 = vmatpush.xpose.msra.mxu0 %v1714
        %1732 = vmatmul.f32.gmra.mxu0 %v1712
        %v1733 = vpop.f32.mrf.mxu0
        %v1734 = vadd.f32 0.0, %v1733
        %1735 = vdwg.mxu0
        %v1736 = vmul.f32 %v1734, 0.35355338
        %v1737 = vsel %vm1240, %v1736, -inf
        %1738 = vmax.xlane.f32.xlu0 %v1737
        %v1739 = vpop.xlane.xlu0 %1738
        %v1740 = vsub.f32 %v1736, %v1739
        %v1741 = vmul.f32 %v1740, 1.442695
        %v1742 = vpow.pop %v1741
        %v1743 = vsel %vm1240, %v1742, 0.0
        %1744 = vadd.xlane.f32.xlu0 %v1743
        %v1745 = vpop.xlane.xlu0 %1744
        %v1746 = vrcp.pop %v1745
        %v1747 = vmul.f32 %v1742, %v1746
        %1748 = vrot.lane.b32.xlu0 %v1436, 40
        %v1749 = vpop.permute.xlu0 %1748
        %v1752 = vsel %vm1240, %v1747, 0
        %1754 = vmatpush.msra.mxu0 0.0
        %1755 = vmatpush.msra.mxu0 0.0
        %1756 = vmatpush.msra.mxu0 0.0
        %1757 = vmatpush.msra.mxu0 0.0
        %1758 = vmatpush.msra.mxu0 0.0
        %1759 = vmatpush.msra.mxu0 0.0
        %1760 = vmatpush.msra.mxu0 0.0
        %1761 = vmatpush.msra.mxu0 0.0
        %1762 = vmatpush.msra.mxu0 0.0
        %1763 = vmatpush.msra.mxu0 0.0
        %1764 = vmatpush.msra.mxu0 0.0
        %1765 = vmatpush.msra.mxu0 0.0
        %1766 = vmatpush.msra.mxu0 0.0
        %1767 = vmatpush.msra.mxu0 0.0
        %1768 = vmatpush.msra.mxu0 0.0
        %1769 = vmatpush.msra.mxu0 %v1749
        %1770 = vmatmul.f32.gmra.mxu0 %v1752
        %v1771 = vpop.f32.mrf.mxu0
        %v1772 = vadd.f32 0.0, %v1771
        %1773 = vdwg.mxu0
        %v1775 = vsel %vm1240, %v1772, 0
        %1777 = vmatpush.msra.mxu0 0.0
        %1778 = vmatpush.msra.mxu0 0.0
        %1779 = vmatpush.msra.mxu0 0.0
        %1780 = vmatpush.msra.mxu0 0.0
        %1781 = vmatpush.msra.mxu0 0.0
        %1782 = vmatpush.msra.mxu0 0.0
        %1783 = vmatpush.msra.mxu0 0.0
        %1784 = vmatpush.msra.mxu0 0.0
        %1785 = vmatpush.msra.mxu0 0.0
        %1786 = vmatpush.msra.mxu0 0.0
        %1787 = vmatpush.msra.mxu0 0.0
        %1788 = vmatpush.msra.mxu0 0.0
        %1789 = vmatpush.msra.mxu0 0.0
        %1790 = vmatpush.msra.mxu0 0.0
        %1791 = vmatpush.msra.mxu0 0.0
        %1792 = vmatpush.msra.mxu0 %v1440
        %1793 = vmatmul.f32.gmra.mxu0 %v1775
        %v1794 = vpop.f32.mrf.mxu0
        %v1795 = vadd.f32 0.0, %v1794
        %1796 = vdwg.mxu0
        %v1797 = vadd.f32 %v1707, %v1795
        %v1798 = vld [vmem:[%s17] sm:$0x1]
        %v1800 = vperm.slane %v1798, 0
        %v1802 = vadd.f32 %v1797, %v1800
        %v1803 = vadd.f32 %v1231, %v1802
        %v1804 = vld [vmem:[%s19] sm:$0x1]
        %v1805 = vld [vmem:[%s21] sm:$0x1]
        %v1806 = vsel %vm1314, %v1803, 0.0
        %1807 = vadd.xlane.f32.xlu0 %v1806
        %v1808 = vpop.xlane.xlu0 %1807
        %v1809 = vrcp.pop 32.0
        %v1810 = vmul.f32 32.0, %v1809
        %v1811 = vsub.f32 1.0, %v1810
        %v1812 = vmul.f32 %v1809, %v1811
        %v1813 = vadd.f32 %v1809, %v1812
        %vm1814 = vweird.f32 %v1809
        %v1815 = vsel %vm1814, %v1809, %v1813
        %v1816 = vmul.f32 %v1808, %v1815
        %v1817 = vsub.f32 %v1803, %v1816
        %v1818 = vmul.f32 %v1817, %v1817
        %v1819 = vsel %vm1314, %v1818, 0.0
        %1820 = vadd.xlane.f32.xlu0 %v1819
        %v1821 = vpop.xlane.xlu0 %1820
        %v1822 = vmul.f32 %v1821, %v1815
        %v1823 = vadd.f32 %v1822, 1e-05
        %v1824 = vrsqrt.pop %v1823
        %v1825 = vmul.f32 %v1824, %v1823
        %v1826 = vmul.f32 %v1825, %v1824
        %v1827 = vmul.f32 0.5, %v1826
        %v1828 = vsub.f32 1.5, %v1827
        %v1829 = vmul.f32 %v1824, %v1828
        %vm1830 = vweird.f32 %v1823
        %vm1831 = vweird.f32 %v1824
        %vm1832 = vmor %vm1830, %vm1831
        %v1833 = vsel %vm1832, %v1824, %v1829
        %v1834 = vmul.f32 %v1817, %v1833
        %v1836 = vperm.slane %v1804, 0
        %v1838 = vmul.f32 %v1834, %v1836
        %v1840 = vperm.slane %v1805, 0
        %v1842 = vadd.f32 %v1838, %v1840
        %v1843 = vld [vmem:[%s37] sm:$0xff]
        %v1844 = vld [vmem:[%s37 + $0x8] sm:$0xff]
        %v1845 = vld [vmem:[%s37 + $0x10] sm:$0xff]
        %v1846 = vld [vmem:[%s37 + $0x18] sm:$0xff]
        %v1847 = vld [vmem:[%s39] sm:$0x1]
        %v1848 = vld [vmem:[%s41] sm:$0xff]
        %v1849 = vld [vmem:[%s41 + $0x8] sm:$0xff]
        %v1850 = vld [vmem:[%s41 + $0x10] sm:$0xff]
        %v1851 = vld [vmem:[%s41 + $0x18] sm:$0xff]
        %v1852 = vld [vmem:[%s41 + $0x20] sm:$0xff]
        %v1853 = vld [vmem:[%s41 + $0x28] sm:$0xff]
        %v1854 = vld [vmem:[%s41 + $0x30] sm:$0xff]
        %v1855 = vld [vmem:[%s41 + $0x38] sm:$0xff]
        %v1856 = vld [vmem:[%s41 + $0x40] sm:$0xff]
        %v1857 = vld [vmem:[%s41 + $0x48] sm:$0xff]
        %v1858 = vld [vmem:[%s41 + $0x50] sm:$0xff]
        %v1859 = vld [vmem:[%s41 + $0x58] sm:$0xff]
        %v1860 = vld [vmem:[%s41 + $0x60] sm:$0xff]
        %v1861 = vld [vmem:[%s41 + $0x68] sm:$0xff]
        %v1862 = vld [vmem:[%s41 + $0x70] sm:$0xff]
        %v1863 = vld [vmem:[%s41 + $0x78] sm:$0xff]
        %v1864 = vld [vmem:[%s43] sm:$0xf]
        %v1865 = vld [vmem:[%s45] sm:$0xff]
        %v1866 = vld [vmem:[%s45 + $0x8] sm:$0xff]
        %v1867 = vld [vmem:[%s45 + $0x10] sm:$0xff]
        %v1868 = vld [vmem:[%s45 + $0x18] sm:$0xff]
        %v1869 = vld [vmem:[%s45 + $0x20] sm:$0xff]
        %v1870 = vld [vmem:[%s45 + $0x28] sm:$0xff]
        %v1871 = vld [vmem:[%s45 + $0x30] sm:$0xff]
        %v1872 = vld [vmem:[%s45 + $0x38] sm:$0xff]
        %v1873 = vld [vmem:[%s45 + $0x40] sm:$0xff]
        %v1874 = vld [vmem:[%s45 + $0x48] sm:$0xff]
        %v1875 = vld [vmem:[%s45 + $0x50] sm:$0xff]
        %v1876 = vld [vmem:[%s45 + $0x58] sm:$0xff]
        %v1877 = vld [vmem:[%s45 + $0x60] sm:$0xff]
        %v1878 = vld [vmem:[%s45 + $0x68] sm:$0xff]
        %v1879 = vld [vmem:[%s45 + $0x70] sm:$0xff]
        %v1880 = vld [vmem:[%s45 + $0x78] sm:$0xff]
        %v1881 = vld [vmem:[%s45 + $0x80] sm:$0xff]
        %v1882 = vld [vmem:[%s45 + $0x88] sm:$0xff]
        %v1883 = vld [vmem:[%s45 + $0x90] sm:$0xff]
        %v1884 = vld [vmem:[%s45 + $0x98] sm:$0xff]
        %v1885 = vld [vmem:[%s45 + $0xa0] sm:$0xff]
        %v1886 = vld [vmem:[%s45 + $0xa8] sm:$0xff]
        %v1887 = vld [vmem:[%s45 + $0xb0] sm:$0xff]
        %v1888 = vld [vmem:[%s45 + $0xb8] sm:$0xff]
        %v1889 = vld [vmem:[%s45 + $0xc0] sm:$0xff]
        %v1890 = vld [vmem:[%s45 + $0xc8] sm:$0xff]
        %v1891 = vld [vmem:[%s45 + $0xd0] sm:$0xff]
        %v1892 = vld [vmem:[%s45 + $0xd8] sm:$0xff]
        %v1893 = vld [vmem:[%s45 + $0xe0] sm:$0xff]
        %v1894 = vld [vmem:[%s45 + $0xe8] sm:$0xff]
        %v1895 = vld [vmem:[%s45 + $0xf0] sm:$0xff]
        %v1896 = vld [vmem:[%s45 + $0xf8] sm:$0xff]
        %v1897 = vld [vmem:[%s45 + $0x100] sm:$0xff]
        %v1898 = vld [vmem:[%s45 + $0x108] sm:$0xff]
        %v1899 = vld [vmem:[%s45 + $0x110] sm:$0xff]
        %v1900 = vld [vmem:[%s45 + $0x118] sm:$0xff]
        %v1901 = vld [vmem:[%s45 + $0x120] sm:$0xff]
        %v1902 = vld [vmem:[%s45 + $0x128] sm:$0xff]
        %v1903 = vld [vmem:[%s45 + $0x130] sm:$0xff]
        %v1904 = vld [vmem:[%s45 + $0x138] sm:$0xff]
        %v1905 = vld [vmem:[%s45 + $0x140] sm:$0xff]
        %v1906 = vld [vmem:[%s45 + $0x148] sm:$0xff]
        %v1907 = vld [vmem:[%s45 + $0x150] sm:$0xff]
        %v1908 = vld [vmem:[%s45 + $0x158] sm:$0xff]
        %v1909 = vld [vmem:[%s45 + $0x160] sm:$0xff]
        %v1910 = vld [vmem:[%s45 + $0x168] sm:$0xff]
        %v1911 = vld [vmem:[%s45 + $0x170] sm:$0xff]
        %v1912 = vld [vmem:[%s45 + $0x178] sm:$0xff]
        %v1913 = vld [vmem:[%s45 + $0x180] sm:$0xff]
        %v1914 = vld [vmem:[%s45 + $0x188] sm:$0xff]
        %v1915 = vld [vmem:[%s45 + $0x190] sm:$0xff]
        %v1916 = vld [vmem:[%s45 + $0x198] sm:$0xff]
        %v1917 = vld [vmem:[%s45 + $0x1a0] sm:$0xff]
        %v1918 = vld [vmem:[%s45 + $0x1a8] sm:$0xff]
        %v1919 = vld [vmem:[%s45 + $0x1b0] sm:$0xff]
        %v1920 = vld [vmem:[%s45 + $0x1b8] sm:$0xff]
        %v1921 = vld [vmem:[%s45 + $0x1c0] sm:$0xff]
        %v1922 = vld [vmem:[%s45 + $0x1c8] sm:$0xff]
        %v1923 = vld [vmem:[%s45 + $0x1d0] sm:$0xff]
        %v1924 = vld [vmem:[%s45 + $0x1d8] sm:$0xff]
        %v1925 = vld [vmem:[%s45 + $0x1e0] sm:$0xff]
        %v1926 = vld [vmem:[%s45 + $0x1e8] sm:$0xff]
        %v1927 = vld [vmem:[%s45 + $0x1f0] sm:$0xff]
        %v1928 = vld [vmem:[%s45 + $0x1f8] sm:$0xff]
        %v1929 = vld [vmem:[%s47] sm:$0xff]
        %v1931 = vperm.slane %v1847, 0
        %v1934 = vsel %vm1314, %v1842, 0
        %1936 = vmatpush.msra.mxu0 0.0
        %1937 = vmatpush.msra.mxu0 0.0
        %1938 = vmatpush.msra.mxu0 0.0
        %1939 = vmatpush.msra.mxu0 0.0
        %1940 = vmatpush.msra.mxu0 0.0
        %1941 = vmatpush.msra.mxu0 0.0
        %1942 = vmatpush.msra.mxu0 0.0
        %1943 = vmatpush.msra.mxu0 0.0
        %1944 = vmatpush.msra.mxu0 0.0
        %1945 = vmatpush.msra.mxu0 0.0
        %1946 = vmatpush.msra.mxu0 0.0
        %1947 = vmatpush.msra.mxu0 0.0
        %1948 = vmatpush.msra.mxu0 %v1846
        %1949 = vmatpush.msra.mxu0 %v1845
        %1950 = vmatpush.msra.mxu0 %v1844
        %1951 = vmatpush.msra.mxu0 %v1843
        %1952 = vmatmul.f32.gmra.mxu0 %v1934
        %v1953 = vpop.f32.mrf.mxu0
        %v1954 = vadd.f32 %v1931, %v1953
        %1955 = vdwg.mxu0
        %v1956 = vsel %vm1240, %v1954, -inf
        %1957 = vmax.xlane.f32.xlu0 %v1956
        %v1958 = vpop.xlane.xlu0 %1957
        %v1959 = vsub.f32 %v1954, %v1958
        %v1960 = vmul.f32 %v1959, 1.442695
        %v1961 = vpow.pop %v1960
        %v1962 = vsel %vm1240, %v1961, 0.0
        %1963 = vadd.xlane.f32.xlu0 %v1962
        %v1964 = vpop.xlane.xlu0 %1963
        %v1965 = vrcp.pop %v1964
        %v1966 = vmul.f32 %v1961, %v1965
        %v1968 = vperm.slane %v1864, 0
        %v1969 = vperm.slane %v1864, 1
        %v1970 = vperm.slane %v1864, 2
        %v1971 = vperm.slane %v1864, 3
        %1976 = vmatpush.msra.mxu0 0.0
        %1977 = vmatpush.msra.mxu0 0.0
        %1978 = vmatpush.msra.mxu0 0.0
        %1979 = vmatpush.msra.mxu0 0.0
        %1980 = vmatpush.msra.mxu0 0.0
        %1981 = vmatpush.msra.mxu0 0.0
        %1982 = vmatpush.msra.mxu0 0.0
        %1983 = vmatpush.msra.mxu0 0.0
        %1984 = vmatpush.msra.mxu0 0.0
        %1985 = vmatpush.msra.mxu0 0.0
        %1986 = vmatpush.msra.mxu0 0.0
        %1987 = vmatpush.msra.mxu0 0.0
        %1988 = vmatpush.msra.mxu0 %v1860
        %1989 = vmatpush.msra.mxu0 %v1856
        %1990 = vmatpush.msra.mxu0 %v1852
        %1991 = vmatpush.msra.mxu0 %v1848
        %1992 = vmatmul.f32.gmra.mxu0 %v1934
        %v1993 = vpop.f32.mrf.mxu0
        %v1994 = vadd.f32 %v1968, %v1993
        %1995 = vdwg.mxu0
        %1996 = vmatpush.msra.mxu0 0.0
        %1997 = vmatpush.msra.mxu0 0.0
        %1998 = vmatpush.msra.mxu0 0.0
        %1999 = vmatpush.msra.mxu0 0.0
        %2000 = vmatpush.msra.mxu0 0.0
        %2001 = vmatpush.msra.mxu0 0.0
        %2002 = vmatpush.msra.mxu0 0.0
        %2003 = vmatpush.msra.mxu0 0.0
        %2004 = vmatpush.msra.mxu0 0.0
        %2005 = vmatpush.msra.mxu0 0.0
        %2006 = vmatpush.msra.mxu0 0.0
        %2007 = vmatpush.msra.mxu0 0.0
        %2008 = vmatpush.msra.mxu0 %v1861
        %2009 = vmatpush.msra.mxu0 %v1857
        %2010 = vmatpush.msra.mxu0 %v1853
        %2011 = vmatpush.msra.mxu0 %v1849
        %2012 = vmatmul.f32.gmra.mxu0 %v1934
        %v2013 = vpop.f32.mrf.mxu0
        %v2014 = vadd.f32 %v1969, %v2013
        %2015 = vdwg.mxu0
        %2016 = vmatpush.msra.mxu0 0.0
        %2017 = vmatpush.msra.mxu0 0.0
        %2018 = vmatpush.msra.mxu0 0.0
        %2019 = vmatpush.msra.mxu0 0.0
        %2020 = vmatpush.msra.mxu0 0.0
        %2021 = vmatpush.msra.mxu0 0.0
        %2022 = vmatpush.msra.mxu0 0.0
        %2023 = vmatpush.msra.mxu0 0.0
        %2024 = vmatpush.msra.mxu0 0.0
        %2025 = vmatpush.msra.mxu0 0.0
        %2026 = vmatpush.msra.mxu0 0.0
        %2027 = vmatpush.msra.mxu0 0.0
        %2028 = vmatpush.msra.mxu0 %v1862
        %2029 = vmatpush.msra.mxu0 %v1858
        %2030 = vmatpush.msra.mxu0 %v1854
        %2031 = vmatpush.msra.mxu0 %v1850
        %2032 = vmatmul.f32.gmra.mxu0 %v1934
        %v2033 = vpop.f32.mrf.mxu0
        %v2034 = vadd.f32 %v1970, %v2033
        %2035 = vdwg.mxu0
        %2036 = vmatpush.msra.mxu0 0.0
        %2037 = vmatpush.msra.mxu0 0.0
        %2038 = vmatpush.msra.mxu0 0.0
        %2039 = vmatpush.msra.mxu0 0.0
        %2040 = vmatpush.msra.mxu0 0.0
        %2041 = vmatpush.msra.mxu0 0.0
        %2042 = vmatpush.msra.mxu0 0.0
        %2043 = vmatpush.msra.mxu0 0.0
        %2044 = vmatpush.msra.mxu0 0.0
        %2045 = vmatpush.msra.mxu0 0.0
        %2046 = vmatpush.msra.mxu0 0.0
        %2047 = vmatpush.msra.mxu0 0.0
        %2048 = vmatpush.msra.mxu0 %v1863
        %2049 = vmatpush.msra.mxu0 %v1859
        %2050 = vmatpush.msra.mxu0 %v1855
        %2051 = vmatpush.msra.mxu0 %v1851
        %2052 = vmatmul.f32.gmra.mxu0 %v1934
        %v2053 = vpop.f32.mrf.mxu0
        %v2054 = vadd.f32 %v1971, %v2053
        %2055 = vdwg.mxu0
        %v2056 = vmax.f32 %v1994, 0.0
        %v2057 = vmax.f32 %v2014, 0.0
        %v2058 = vmax.f32 %v2034, 0.0
        %v2059 = vmax.f32 %v2054, 0.0
        %v2061 = vsel %vm1240, %v1966, 0
        %2063 = vmatpush.msra.mxu0 0.0
        %2064 = vmatpush.msra.mxu0 0.0
        %2065 = vmatpush.msra.mxu0 0.0
        %2066 = vmatpush.msra.mxu0 0.0
        %2067 = vmatpush.msra.mxu0 0.0
        %2068 = vmatpush.msra.mxu0 0.0
        %2069 = vmatpush.msra.mxu0 0.0
        %2070 = vmatpush.msra.mxu0 0.0
        %2071 = vmatpush.msra.mxu0 0.0
        %2072 = vmatpush.msra.mxu0 0.0
        %2073 = vmatpush.msra.mxu0 0.0
        %2074 = vmatpush.msra.mxu0 0.0
        %2075 = vmatpush.msra.mxu0 0.0
        %2076 = vmatpush.msra.mxu0 0.0
        %2077 = vmatpush.msra.mxu0 0.0
        %2078 = vmatpush.msra.mxu0 %v1236
        %2079 = vmatmul.f32.gmra.mxu0 %v2061
        %v2080 = vpop.f32.mrf.mxu0
        %v2081 = vadd.f32 0.0, %v2080
        %2082 = vdwg.mxu0
        %2083 = vmatpush.msra.mxu0 0.0
        %2084 = vmatpush.msra.mxu0 0.0
        %2085 = vmatpush.msra.mxu0 0.0
        %2086 = vmatpush.msra.mxu0 0.0
        %2087 = vmatpush.msra.mxu0 0.0
        %2088 = vmatpush.msra.mxu0 0.0
        %2089 = vmatpush.msra.mxu0 0.0
        %2090 = vmatpush.msra.mxu0 0.0
        %2091 = vmatpush.msra.mxu0 0.0
        %2092 = vmatpush.msra.mxu0 0.0
        %2093 = vmatpush.msra.mxu0 0.0
        %2094 = vmatpush.msra.mxu0 0.0
        %2095 = vmatpush.msra.mxu0 0.0
        %2096 = vmatpush.msra.mxu0 0.0
        %2097 = vmatpush.msra.mxu0 0.0
        %2098 = vmatpush.msra.mxu0 %v1237
        %2099 = vmatmul.f32.gmra.mxu0 %v2061
        %v2100 = vpop.f32.mrf.mxu0
        %v2101 = vadd.f32 0.0, %v2100
        %2102 = vdwg.mxu0
        %2103 = vmatpush.msra.mxu0 0.0
        %2104 = vmatpush.msra.mxu0 0.0
        %2105 = vmatpush.msra.mxu0 0.0
        %2106 = vmatpush.msra.mxu0 0.0
        %2107 = vmatpush.msra.mxu0 0.0
        %2108 = vmatpush.msra.mxu0 0.0
        %2109 = vmatpush.msra.mxu0 0.0
        %2110 = vmatpush.msra.mxu0 0.0
        %2111 = vmatpush.msra.mxu0 0.0
        %2112 = vmatpush.msra.mxu0 0.0
        %2113 = vmatpush.msra.mxu0 0.0
        %2114 = vmatpush.msra.mxu0 0.0
        %2115 = vmatpush.msra.mxu0 0.0
        %2116 = vmatpush.msra.mxu0 0.0
        %2117 = vmatpush.msra.mxu0 0.0
        %2118 = vmatpush.msra.mxu0 %v1238
        %2119 = vmatmul.f32.gmra.mxu0 %v2061
        %v2120 = vpop.f32.mrf.mxu0
        %v2121 = vadd.f32 0.0, %v2120
        %2122 = vdwg.mxu0
        %2123 = vmatpush.msra.mxu0 0.0
        %2124 = vmatpush.msra.mxu0 0.0
        %2125 = vmatpush.msra.mxu0 0.0
        %2126 = vmatpush.msra.mxu0 0.0
        %2127 = vmatpush.msra.mxu0 0.0
        %2128 = vmatpush.msra.mxu0 0.0
        %2129 = vmatpush.msra.mxu0 0.0
        %2130 = vmatpush.msra.mxu0 0.0
        %2131 = vmatpush.msra.mxu0 0.0
        %2132 = vmatpush.msra.mxu0 0.0
        %2133 = vmatpush.msra.mxu0 0.0
        %2134 = vmatpush.msra.mxu0 0.0
        %2135 = vmatpush.msra.mxu0 0.0
        %2136 = vmatpush.msra.mxu0 0.0
        %2137 = vmatpush.msra.mxu0 0.0
        %2138 = vmatpush.msra.mxu0 %v1239
        %2139 = vmatmul.f32.gmra.mxu0 %v2061
        %v2140 = vpop.f32.mrf.mxu0
        %v2141 = vadd.f32 0.0, %v2140
        %2142 = vdwg.mxu0
        %v2143 = vmul.f32 %v2056, %v2081
        %v2144 = vmul.f32 %v2057, %v2101
        %v2145 = vmul.f32 %v2058, %v2121
        %v2146 = vmul.f32 %v2059, %v2141
        %2147 = vmatpush.msra.mxu0 0.0
        %2148 = vmatpush.msra.mxu0 0.0
        %2149 = vmatpush.msra.mxu0 0.0
        %2150 = vmatpush.msra.mxu0 0.0
        %2151 = vmatpush.msra.mxu0 0.0
        %2152 = vmatpush.msra.mxu0 0.0
        %2153 = vmatpush.msra.mxu0 0.0
        %2154 = vmatpush.msra.mxu0 0.0
        %2155 = vmatpush.msra.mxu0 0.0
        %2156 = vmatpush.msra.mxu0 0.0
        %2157 = vmatpush.msra.mxu0 0.0
        %2158 = vmatpush.msra.mxu0 0.0
        %2159 = vmatpush.msra.mxu0 0.0
        %2160 = vmatpush.msra.mxu0 0.0
        %2161 = vmatpush.msra.mxu0 0.0
        %2162 = vmatpush.msra.mxu0 %v1929
        %2163 = vmatmul.f32.gmra.mxu0 %v2061
        %v2164 = vpop.f32.mrf.mxu0
        %v2165 = vadd.f32 0.0, %v2164
        %2166 = vdwg.mxu0
        %2167 = vmatpush.msra.mxu0 %v1880
        %2168 = vmatpush.msra.mxu0 %v1879
        %2169 = vmatpush.msra.mxu0 %v1878
        %2170 = vmatpush.msra.mxu0 %v1877
        %2171 = vmatpush.msra.mxu0 %v1876
        %2172 = vmatpush.msra.mxu0 %v1875
        %2173 = vmatpush.msra.mxu0 %v1874
        %2174 = vmatpush.msra.mxu0 %v1873
        %2175 = vmatpush.msra.mxu0 %v1872
        %2176 = vmatpush.msra.mxu0 %v1871
        %2177 = vmatpush.msra.mxu0 %v1870
        %2178 = vmatpush.msra.mxu0 %v1869
        %2179 = vmatpush.msra.mxu0 %v1868
        %2180 = vmatpush.msra.mxu0 %v1867
        %2181 = vmatpush.msra.mxu0 %v1866
        %2182 = vmatpush.msra.mxu0 %v1865
        %2183 = vmatmul.f32.gmra.mxu0 %v2143
        %v2184 = vpop.f32.mrf.mxu0
        %v2185 = vadd.f32 %v2165, %v2184
        %2186 = vdwg.mxu0
        %2187 = vmatpush.msra.mxu0 %v1896
        %2188 = vmatpush.msra.mxu0 %v1895
        %2189 = vmatpush.msra.mxu0 %v1894
        %2190 = vmatpush.msra.mxu0 %v1893
        %2191 = vmatpush.msra.mxu0 %v1892
        %2192 = vmatpush.msra.mxu0 %v1891
        %2193 = vmatpush.msra.mxu0 %v1890
        %2194 = vmatpush.msra.mxu0 %v1889
        %2195 = vmatpush.msra.mxu0 %v1888
        %2196 = vmatpush.msra.mxu0 %v1887
        %2197 = vmatpush.msra.mxu0 %v1886
        %2198 = vmatpush.msra.mxu0 %v1885
        %2199 = vmatpush.msra.mxu0 %v1884
        %2200 = vmatpush.msra.mxu0 %v1883
        %2201 = vmatpush.msra.mxu0 %v1882
        %2202 = vmatpush.msra.mxu0 %v1881
        %2203 = vmatmul.f32.gmra.mxu0 %v2144
        %v2204 = vpop.f32.mrf.mxu0
        %v2205 = vadd.f32 %v2185, %v2204
        %2206 = vdwg.mxu0
        %2207 = vmatpush.msra.mxu0 %v1912
        %2208 = vmatpush.msra.mxu0 %v1911
        %2209 = vmatpush.msra.mxu0 %v1910
        %2210 = vmatpush.msra.mxu0 %v1909
        %2211 = vmatpush.msra.mxu0 %v1908
        %2212 = vmatpush.msra.mxu0 %v1907
        %2213 = vmatpush.msra.mxu0 %v1906
        %2214 = vmatpush.msra.mxu0 %v1905
        %2215 = vmatpush.msra.mxu0 %v1904
        %2216 = vmatpush.msra.mxu0 %v1903
        %2217 = vmatpush.msra.mxu0 %v1902
        %2218 = vmatpush.msra.mxu0 %v1901
        %2219 = vmatpush.msra.mxu0 %v1900
        %2220 = vmatpush.msra.mxu0 %v1899
        %2221 = vmatpush.msra.mxu0 %v1898
        %2222 = vmatpush.msra.mxu0 %v1897
        %2223 = vmatmul.f32.gmra.mxu0 %v2145
        %v2224 = vpop.f32.mrf.mxu0
        %v2225 = vadd.f32 %v2205, %v2224
        %2226 = vdwg.mxu0
        %2227 = vmatpush.msra.mxu0 %v1928
        %2228 = vmatpush.msra.mxu0 %v1927
        %2229 = vmatpush.msra.mxu0 %v1926
        %2230 = vmatpush.msra.mxu0 %v1925
        %2231 = vmatpush.msra.mxu0 %v1924
        %2232 = vmatpush.msra.mxu0 %v1923
        %2233 = vmatpush.msra.mxu0 %v1922
        %2234 = vmatpush.msra.mxu0 %v1921
        %2235 = vmatpush.msra.mxu0 %v1920
        %2236 = vmatpush.msra.mxu0 %v1919
        %2237 = vmatpush.msra.mxu0 %v1918
        %2238 = vmatpush.msra.mxu0 %v1917
        %2239 = vmatpush.msra.mxu0 %v1916
        %2240 = vmatpush.msra.mxu0 %v1915
        %2241 = vmatpush.msra.mxu0 %v1914
        %2242 = vmatpush.msra.mxu0 %v1913
        %2243 = vmatmul.f32.gmra.mxu0 %v2146
        %v2244 = vpop.f32.mrf.mxu0
        %v2245 = vadd.f32 %v2225, %v2244
        %2246 = vdwg.mxu0
        %v2247 = vadd.f32 %v1842, %v2245
        %v2248 = vld [vmem:[%s23] sm:$0x1]
        %v2249 = vld [vmem:[%s25] sm:$0x1]
        %v2250 = vsel %vm1314, %v2247, 0.0
        %2251 = vadd.xlane.f32.xlu0 %v2250
        %v2252 = vpop.xlane.xlu0 %2251
        %v2253 = vmul.f32 %v2252, %v1815
        %v2254 = vsub.f32 %v2247, %v2253
        %v2255 = vmul.f32 %v2254, %v2254
        %v2256 = vsel %vm1314, %v2255, 0.0
        %2257 = vadd.xlane.f32.xlu0 %v2256
        %v2258 = vpop.xlane.xlu0 %2257
        %v2259 = vmul.f32 %v2258, %v1815
        %v2260 = vadd.f32 %v2259, 1e-05
        %v2261 = vrsqrt.pop %v2260
        %v2262 = vmul.f32 %v2261, %v2260
        %v2263 = vmul.f32 %v2262, %v2261
        %v2264 = vmul.f32 0.5, %v2263
        %v2265 = vsub.f32 1.5, %v2264
        %v2266 = vmul.f32 %v2261, %v2265
        %vm2267 = vweird.f32 %v2260
        %vm2268 = vweird.f32 %v2261
        %vm2269 = vmor %vm2267, %vm2268
        %v2270 = vsel %vm2269, %v2261, %v2266
        %v2271 = vmul.f32 %v2254, %v2270
        %v2273 = vperm.slane %v2248, 0
        %v2275 = vmul.f32 %v2271, %v2273
        %v2277 = vperm.slane %v2249, 0
        %v2279 = vadd.f32 %v2275, %v2277
        %2280 = vst.msk [vmem:[%s1204] sm:$0xff] %vm1314, %v2279
        %v2282 = vsel %vm1240, %v1234, 0
        %v2285 = vsel %vm1240, %v1235, 0
        %2287 = vmatpush.msra.mxu0 0.0
        %2288 = vmatpush.msra.mxu0 0.0
        %2289 = vmatpush.msra.mxu0 0.0
        %2290 = vmatpush.msra.mxu0 0.0
        %2291 = vmatpush.msra.mxu0 0.0
        %2292 = vmatpush.msra.mxu0 0.0
        %2293 = vmatpush.msra.mxu0 0.0
        %2294 = vmatpush.msra.mxu0 0.0
        %2295 = vmatpush.msra.mxu0 0.0
        %2296 = vmatpush.msra.mxu0 0.0
        %2297 = vmatpush.msra.mxu0 0.0
        %2298 = vmatpush.msra.mxu0 0.0
        %2299 = vmatpush.msra.mxu0 0.0
        %2300 = vmatpush.msra.mxu0 0.0
        %2301 = vmatpush.msra.mxu0 0.0
        %2302 = vmatpush.msra.mxu0 %v2279
        %2303 = vmatmul.f32.gmra.mxu0 %v2282
        %v2304 = vpop.f32.mrf.mxu0
        %v2305 = vadd.f32 0.0, %v2304
        %2306 = vmatmul.f32.gmra.mxu0 %v2285
        %v2307 = vpop.f32.mrf.mxu0
        %v2308 = vadd.f32 0.0, %v2307
        %2309 = vdwg.mxu0
        %v2310 = vmul.f32 %v2305, %v1290
        %v2311 = vmul.f32 %v2308, %v1305
        %v2312 = vld [vmem:[%s49] sm:$0xff]
        %v2313 = vld [vmem:[%s49 + $0x8] sm:$0xff]
        %v2314 = vld [vmem:[%s49 + $0x10] sm:$0xff]
        %v2315 = vld [vmem:[%s49 + $0x18] sm:$0xff]
        %v2316 = vld [vmem:[%s51] sm:$0xff]
        %v2317 = vld [vmem:[%s51 + $0x8] sm:$0xff]
        %v2318 = vld [vmem:[%s51 + $0x10] sm:$0xff]
        %v2319 = vld [vmem:[%s51 + $0x18] sm:$0xff]
        %v2321 = vsel %vm1314, %v2310, 0
        %v2324 = vsel %vm1314, %v2311, 0
        %2326 = vmatpush.msra.mxu0 0.0
        %2327 = vmatpush.msra.mxu0 0.0
        %2328 = vmatpush.msra.mxu0 0.0
        %2329 = vmatpush.msra.mxu0 0.0
        %2330 = vmatpush.msra.mxu0 0.0
        %2331 = vmatpush.msra.mxu0 0.0
        %2332 = vmatpush.msra.mxu0 0.0
        %2333 = vmatpush.msra.mxu0 0.0
        %2334 = vmatpush.msra.mxu0 0.0
        %2335 = vmatpush.msra.mxu0 0.0
        %2336 = vmatpush.msra.mxu0 0.0
        %2337 = vmatpush.msra.mxu0 0.0
        %2338 = vmatpush.msra.mxu0 %v2319
        %2339 = vmatpush.msra.mxu0 %v2318
        %2340 = vmatpush.msra.mxu0 %v2317
        %2341 = vmatpush.msra.mxu0 %v2316
        %2342 = vmatmul.f32.gmra.mxu0 %v2321
        %v2343 = vpop.f32.mrf.mxu0
        %v2344 = vadd.f32 0.0, %v2343
        %2345 = vmatmul.f32.gmra.mxu0 %v2324
        %v2346 = vpop.f32.mrf.mxu0
        %v2347 = vadd.f32 0.0, %v2346
        %2348 = vdwg.mxu0
        %2349 = vmatpush.msra.mxu0 0.0
        %2350 = vmatpush.msra.mxu0 0.0
        %2351 = vmatpush.msra.mxu0 0.0
        %2352 = vmatpush.msra.mxu0 0.0
        %2353 = vmatpush.msra.mxu0 0.0
        %2354 = vmatpush.msra.mxu0 0.0
        %2355 = vmatpush.msra.mxu0 0.0
        %2356 = vmatpush.msra.mxu0 0.0
        %2357 = vmatpush.msra.mxu0 0.0
        %2358 = vmatpush.msra.mxu0 0.0
        %2359 = vmatpush.msra.mxu0 0.0
        %2360 = vmatpush.msra.mxu0 0.0
        %2361 = vmatpush.msra.mxu0 %v2315
        %2362 = vmatpush.msra.mxu0 %v2314
        %2363 = vmatpush.msra.mxu0 %v2313
        %2364 = vmatpush.msra.mxu0 %v2312
        %2365 = vmatmul.f32.gmra.mxu0 %v1316
        %v2366 = vpop.f32.mrf.mxu0
        %v2367 = vadd.f32 %v2344, %v2366
        %2368 = vmatmul.f32.gmra.mxu0 %v1319
        %v2369 = vpop.f32.mrf.mxu0
        %v2370 = vadd.f32 %v2347, %v2369
        %2371 = vdwg.mxu0
        %v2372 = vld [vmem:[%s53] sm:$0x1]
        %v2374 = vperm.slane %v2372, 0
        %v2376 = vadd.f32 %v2367, %v2374
        %v2377 = vadd.f32 %v2370, %v2374
        %v2378 = vsel %vm1240, %v2376, -inf
        %2379 = vmax.xlane.f32.xlu0 %v2378
        %v2380 = vpop.xlane.xlu0 %2379
        %v2381 = vsel %vm1242, %v2377, -inf
        %2382 = vmax.xlane.f32.xlu0 %v2381
        %v2383 = vpop.xlane.xlu0 %2382
        %v2384 = vsub.f32 %v2376, %v2380
        %v2385 = vsub.f32 %v2377, %v2383
        %v2386 = vmul.f32 %v2384, 1.442695
        %v2387 = vpow.pop %v2386
        %v2388 = vmul.f32 %v2385, 1.442695
        %v2389 = vpow.pop %v2388
        %v2390 = vsel %vm1240, %v2387, 0.0
        %2391 = vadd.xlane.f32.xlu0 %v2390
        %v2392 = vpop.xlane.xlu0 %2391
        %v2393 = vsel %vm1242, %v2389, 0.0
        %2394 = vadd.xlane.f32.xlu0 %v2393
        %v2395 = vpop.xlane.xlu0 %2394
        %v2396 = vrcp.pop %v2392
        %v2397 = vrcp.pop %v2395
        %v2398 = vmul.f32 %v2387, %v2396
        %v2399 = vmul.f32 %v2389, %v2397
        %v2400 = vld [vmem:[%s55] sm:$0xff]
        %v2401 = vld [vmem:[%s55 + $0x8] sm:$0xff]
        %v2402 = vld [vmem:[%s55 + $0x10] sm:$0xff]
        %v2403 = vld [vmem:[%s55 + $0x18] sm:$0xff]
        %v2404 = vld [vmem:[%s55 + $0x20] sm:$0xff]
        %v2405 = vld [vmem:[%s55 + $0x28] sm:$0xff]
        %v2406 = vld [vmem:[%s55 + $0x30] sm:$0xff]
        %v2407 = vld [vmem:[%s55 + $0x38] sm:$0xff]
        %v2408 = vld [vmem:[%s55 + $0x40] sm:$0xff]
        %v2409 = vld [vmem:[%s55 + $0x48] sm:$0xff]
        %v2410 = vld [vmem:[%s55 + $0x50] sm:$0xff]
        %v2411 = vld [vmem:[%s55 + $0x58] sm:$0xff]
        %v2412 = vld [vmem:[%s55 + $0x60] sm:$0xff]
        %v2413 = vld [vmem:[%s55 + $0x68] sm:$0xff]
        %v2414 = vld [vmem:[%s55 + $0x70] sm:$0xff]
        %v2415 = vld [vmem:[%s55 + $0x78] sm:$0xff]
        %v2416 = vld [vmem:[%s57] sm:$0xff]
        %v2417 = vld [vmem:[%s57 + $0x8] sm:$0xff]
        %v2418 = vld [vmem:[%s57 + $0x10] sm:$0xff]
        %v2419 = vld [vmem:[%s57 + $0x18] sm:$0xff]
        %v2420 = vld [vmem:[%s57 + $0x20] sm:$0xff]
        %v2421 = vld [vmem:[%s57 + $0x28] sm:$0xff]
        %v2422 = vld [vmem:[%s57 + $0x30] sm:$0xff]
        %v2423 = vld [vmem:[%s57 + $0x38] sm:$0xff]
        %v2424 = vld [vmem:[%s57 + $0x40] sm:$0xff]
        %v2425 = vld [vmem:[%s57 + $0x48] sm:$0xff]
        %v2426 = vld [vmem:[%s57 + $0x50] sm:$0xff]
        %v2427 = vld [vmem:[%s57 + $0x58] sm:$0xff]
        %v2428 = vld [vmem:[%s57 + $0x60] sm:$0xff]
        %v2429 = vld [vmem:[%s57 + $0x68] sm:$0xff]
        %v2430 = vld [vmem:[%s57 + $0x70] sm:$0xff]
        %v2431 = vld [vmem:[%s57 + $0x78] sm:$0xff]
        %2432 = vmatpush.msra.mxu0 0.0
        %2433 = vmatpush.msra.mxu0 0.0
        %2434 = vmatpush.msra.mxu0 0.0
        %2435 = vmatpush.msra.mxu0 0.0
        %2436 = vmatpush.msra.mxu0 0.0
        %2437 = vmatpush.msra.mxu0 0.0
        %2438 = vmatpush.msra.mxu0 0.0
        %2439 = vmatpush.msra.mxu0 0.0
        %2440 = vmatpush.msra.mxu0 0.0
        %2441 = vmatpush.msra.mxu0 0.0
        %2442 = vmatpush.msra.mxu0 0.0
        %2443 = vmatpush.msra.mxu0 0.0
        %2444 = vmatpush.msra.mxu0 %v2428
        %2445 = vmatpush.msra.mxu0 %v2424
        %2446 = vmatpush.msra.mxu0 %v2420
        %2447 = vmatpush.msra.mxu0 %v2416
        %2448 = vmatmul.f32.gmra.mxu0 %v2321
        %v2449 = vpop.f32.mrf.mxu0
        %v2450 = vadd.f32 0.0, %v2449
        %2451 = vmatmul.f32.gmra.mxu0 %v2324
        %v2452 = vpop.f32.mrf.mxu0
        %v2453 = vadd.f32 0.0, %v2452
        %2454 = vdwg.mxu0
        %2455 = vmatpush.msra.mxu0 0.0
        %2456 = vmatpush.msra.mxu0 0.0
        %2457 = vmatpush.msra.mxu0 0.0
        %2458 = vmatpush.msra.mxu0 0.0
        %2459 = vmatpush.msra.mxu0 0.0
        %2460 = vmatpush.msra.mxu0 0.0
        %2461 = vmatpush.msra.mxu0 0.0
        %2462 = vmatpush.msra.mxu0 0.0
        %2463 = vmatpush.msra.mxu0 0.0
        %2464 = vmatpush.msra.mxu0 0.0
        %2465 = vmatpush.msra.mxu0 0.0
        %2466 = vmatpush.msra.mxu0 0.0
        %2467 = vmatpush.msra.mxu0 %v2429
        %2468 = vmatpush.msra.mxu0 %v2425
        %2469 = vmatpush.msra.mxu0 %v2421
        %2470 = vmatpush.msra.mxu0 %v2417
        %2471 = vmatmul.f32.gmra.mxu0 %v2321
        %v2472 = vpop.f32.mrf.mxu0
        %v2473 = vadd.f32 0.0, %v2472
        %2474 = vmatmul.f32.gmra.mxu0 %v2324
        %v2475 = vpop.f32.mrf.mxu0
        %v2476 = vadd.f32 0.0, %v2475
        %2477 = vdwg.mxu0
        %2478 = vmatpush.msra.mxu0 0.0
        %2479 = vmatpush.msra.mxu0 0.0
        %2480 = vmatpush.msra.mxu0 0.0
        %2481 = vmatpush.msra.mxu0 0.0
        %2482 = vmatpush.msra.mxu0 0.0
        %2483 = vmatpush.msra.mxu0 0.0
        %2484 = vmatpush.msra.mxu0 0.0
        %2485 = vmatpush.msra.mxu0 0.0
        %2486 = vmatpush.msra.mxu0 0.0
        %2487 = vmatpush.msra.mxu0 0.0
        %2488 = vmatpush.msra.mxu0 0.0
        %2489 = vmatpush.msra.mxu0 0.0
        %2490 = vmatpush.msra.mxu0 %v2430
        %2491 = vmatpush.msra.mxu0 %v2426
        %2492 = vmatpush.msra.mxu0 %v2422
        %2493 = vmatpush.msra.mxu0 %v2418
        %2494 = vmatmul.f32.gmra.mxu0 %v2321
        %v2495 = vpop.f32.mrf.mxu0
        %v2496 = vadd.f32 0.0, %v2495
        %2497 = vmatmul.f32.gmra.mxu0 %v2324
        %v2498 = vpop.f32.mrf.mxu0
        %v2499 = vadd.f32 0.0, %v2498
        %2500 = vdwg.mxu0
        %2501 = vmatpush.msra.mxu0 0.0
        %2502 = vmatpush.msra.mxu0 0.0
        %2503 = vmatpush.msra.mxu0 0.0
        %2504 = vmatpush.msra.mxu0 0.0
        %2505 = vmatpush.msra.mxu0 0.0
        %2506 = vmatpush.msra.mxu0 0.0
        %2507 = vmatpush.msra.mxu0 0.0
        %2508 = vmatpush.msra.mxu0 0.0
        %2509 = vmatpush.msra.mxu0 0.0
        %2510 = vmatpush.msra.mxu0 0.0
        %2511 = vmatpush.msra.mxu0 0.0
        %2512 = vmatpush.msra.mxu0 0.0
        %2513 = vmatpush.msra.mxu0 %v2431
        %2514 = vmatpush.msra.mxu0 %v2427
        %2515 = vmatpush.msra.mxu0 %v2423
        %2516 = vmatpush.msra.mxu0 %v2419
        %2517 = vmatmul.f32.gmra.mxu0 %v2321
        %v2518 = vpop.f32.mrf.mxu0
        %v2519 = vadd.f32 0.0, %v2518
        %2520 = vmatmul.f32.gmra.mxu0 %v2324
        %v2521 = vpop.f32.mrf.mxu0
        %v2522 = vadd.f32 0.0, %v2521
        %2523 = vdwg.mxu0
        %2524 = vmatpush.msra.mxu0 0.0
        %2525 = vmatpush.msra.mxu0 0.0
        %2526 = vmatpush.msra.mxu0 0.0
        %2527 = vmatpush.msra.mxu0 0.0
        %2528 = vmatpush.msra.mxu0 0.0
        %2529 = vmatpush.msra.mxu0 0.0
        %2530 = vmatpush.msra.mxu0 0.0
        %2531 = vmatpush.msra.mxu0 0.0
        %2532 = vmatpush.msra.mxu0 0.0
        %2533 = vmatpush.msra.mxu0 0.0
        %2534 = vmatpush.msra.mxu0 0.0
        %2535 = vmatpush.msra.mxu0 0.0
        %2536 = vmatpush.msra.mxu0 %v2412
        %2537 = vmatpush.msra.mxu0 %v2408
        %2538 = vmatpush.msra.mxu0 %v2404
        %2539 = vmatpush.msra.mxu0 %v2400
        %2540 = vmatmul.f32.gmra.mxu0 %v1316
        %v2541 = vpop.f32.mrf.mxu0
        %v2542 = vadd.f32 %v2450, %v2541
        %2543 = vmatmul.f32.gmra.mxu0 %v1319
        %v2544 = vpop.f32.mrf.mxu0
        %v2545 = vadd.f32 %v2453, %v2544
        %2546 = vdwg.mxu0
        %2547 = vmatpush.msra.mxu0 0.0
        %2548 = vmatpush.msra.mxu0 0.0
        %2549 = vmatpush.msra.mxu0 0.0
        %2550 = vmatpush.msra.mxu0 0.0
        %2551 = vmatpush.msra.mxu0 0.0
        %2552 = vmatpush.msra.mxu0 0.0
        %2553 = vmatpush.msra.mxu0 0.0
        %2554 = vmatpush.msra.mxu0 0.0
        %2555 = vmatpush.msra.mxu0 0.0
        %2556 = vmatpush.msra.mxu0 0.0
        %2557 = vmatpush.msra.mxu0 0.0
        %2558 = vmatpush.msra.mxu0 0.0
        %2559 = vmatpush.msra.mxu0 %v2413
        %2560 = vmatpush.msra.mxu0 %v2409
        %2561 = vmatpush.msra.mxu0 %v2405
        %2562 = vmatpush.msra.mxu0 %v2401
        %2563 = vmatmul.f32.gmra.mxu0 %v1316
        %v2564 = vpop.f32.mrf.mxu0
        %v2565 = vadd.f32 %v2473, %v2564
        %2566 = vmatmul.f32.gmra.mxu0 %v1319
        %v2567 = vpop.f32.mrf.mxu0
        %v2568 = vadd.f32 %v2476, %v2567
        %2569 = vdwg.mxu0
        %2570 = vmatpush.msra.mxu0 0.0
        %2571 = vmatpush.msra.mxu0 0.0
        %2572 = vmatpush.msra.mxu0 0.0
        %2573 = vmatpush.msra.mxu0 0.0
        %2574 = vmatpush.msra.mxu0 0.0
        %2575 = vmatpush.msra.mxu0 0.0
        %2576 = vmatpush.msra.mxu0 0.0
        %2577 = vmatpush.msra.mxu0 0.0
        %2578 = vmatpush.msra.mxu0 0.0
        %2579 = vmatpush.msra.mxu0 0.0
        %2580 = vmatpush.msra.mxu0 0.0
        %2581 = vmatpush.msra.mxu0 0.0
        %2582 = vmatpush.msra.mxu0 %v2414
        %2583 = vmatpush.msra.mxu0 %v2410
        %2584 = vmatpush.msra.mxu0 %v2406
        %2585 = vmatpush.msra.mxu0 %v2402
        %2586 = vmatmul.f32.gmra.mxu0 %v1316
        %v2587 = vpop.f32.mrf.mxu0
        %v2588 = vadd.f32 %v2496, %v2587
        %2589 = vmatmul.f32.gmra.mxu0 %v1319
        %v2590 = vpop.f32.mrf.mxu0
        %v2591 = vadd.f32 %v2499, %v2590
        %2592 = vdwg.mxu0
        %2593 = vmatpush.msra.mxu0 0.0
        %2594 = vmatpush.msra.mxu0 0.0
        %2595 = vmatpush.msra.mxu0 0.0
        %2596 = vmatpush.msra.mxu0 0.0
        %2597 = vmatpush.msra.mxu0 0.0
        %2598 = vmatpush.msra.mxu0 0.0
        %2599 = vmatpush.msra.mxu0 0.0
        %2600 = vmatpush.msra.mxu0 0.0
        %2601 = vmatpush.msra.mxu0 0.0
        %2602 = vmatpush.msra.mxu0 0.0
        %2603 = vmatpush.msra.mxu0 0.0
        %2604 = vmatpush.msra.mxu0 0.0
        %2605 = vmatpush.msra.mxu0 %v2415
        %2606 = vmatpush.msra.mxu0 %v2411
        %2607 = vmatpush.msra.mxu0 %v2407
        %2608 = vmatpush.msra.mxu0 %v2403
        %2609 = vmatmul.f32.gmra.mxu0 %v1316
        %v2610 = vpop.f32.mrf.mxu0
        %v2611 = vadd.f32 %v2519, %v2610
        %2612 = vmatmul.f32.gmra.mxu0 %v1319
        %v2613 = vpop.f32.mrf.mxu0
        %v2614 = vadd.f32 %v2522, %v2613
        %2615 = vdwg.mxu0
        %v2616 = vld [vmem:[%s59] sm:$0xf]
        %v2618 = vperm.slane %v2616, 0
        %v2619 = vperm.slane %v2616, 1
        %v2620 = vperm.slane %v2616, 2
        %v2621 = vperm.slane %v2616, 3
        %v2626 = vadd.f32 %v2542, %v2618
        %v2627 = vadd.f32 %v2565, %v2619
        %v2628 = vadd.f32 %v2588, %v2620
        %v2629 = vadd.f32 %v2611, %v2621
        %v2630 = vadd.f32 %v2545, %v2618
        %v2631 = vadd.f32 %v2568, %v2619
        %v2632 = vadd.f32 %v2591, %v2620
        %v2633 = vadd.f32 %v2614, %v2621
        %v2634 = vmax.f32 %v2626, 0.0
        %v2635 = vmax.f32 %v2627, 0.0
        %v2636 = vmax.f32 %v2628, 0.0
        %v2637 = vmax.f32 %v2629, 0.0
        %v2638 = vmax.f32 %v2630, 0.0
        %v2639 = vmax.f32 %v2631, 0.0
        %v2640 = vmax.f32 %v2632, 0.0
        %v2641 = vmax.f32 %v2633, 0.0
        %v2643 = vsel %vm1240, %v2398, 0
        %v2646 = vsel %vm1240, %v2399, 0
        %2648 = vmatpush.msra.mxu0 0.0
        %2649 = vmatpush.msra.mxu0 0.0
        %2650 = vmatpush.msra.mxu0 0.0
        %2651 = vmatpush.msra.mxu0 0.0
        %2652 = vmatpush.msra.mxu0 0.0
        %2653 = vmatpush.msra.mxu0 0.0
        %2654 = vmatpush.msra.mxu0 0.0
        %2655 = vmatpush.msra.mxu0 0.0
        %2656 = vmatpush.msra.mxu0 0.0
        %2657 = vmatpush.msra.mxu0 0.0
        %2658 = vmatpush.msra.mxu0 0.0
        %2659 = vmatpush.msra.mxu0 0.0
        %2660 = vmatpush.msra.mxu0 0.0
        %2661 = vmatpush.msra.mxu0 0.0
        %2662 = vmatpush.msra.mxu0 0.0
        %2663 = vmatpush.msra.mxu0 %v1236
        %2664 = vmatmul.f32.gmra.mxu0 %v2643
        %v2665 = vpop.f32.mrf.mxu0
        %v2666 = vadd.f32 0.0, %v2665
        %2667 = vmatmul.f32.gmra.mxu0 %v2646
        %v2668 = vpop.f32.mrf.mxu0
        %v2669 = vadd.f32 0.0, %v2668
        %2670 = vdwg.mxu0
        %2671 = vmatpush.msra.mxu0 0.0
        %2672 = vmatpush.msra.mxu0 0.0
        %2673 = vmatpush.msra.mxu0 0.0
        %2674 = vmatpush.msra.mxu0 0.0
        %2675 = vmatpush.msra.mxu0 0.0
        %2676 = vmatpush.msra.mxu0 0.0
        %2677 = vmatpush.msra.mxu0 0.0
        %2678 = vmatpush.msra.mxu0 0.0
        %2679 = vmatpush.msra.mxu0 0.0
        %2680 = vmatpush.msra.mxu0 0.0
        %2681 = vmatpush.msra.mxu0 0.0
        %2682 = vmatpush.msra.mxu0 0.0
        %2683 = vmatpush.msra.mxu0 0.0
        %2684 = vmatpush.msra.mxu0 0.0
        %2685 = vmatpush.msra.mxu0 0.0
        %2686 = vmatpush.msra.mxu0 %v1237
        %2687 = vmatmul.f32.gmra.mxu0 %v2643
        %v2688 = vpop.f32.mrf.mxu0
        %v2689 = vadd.f32 0.0, %v2688
        %2690 = vmatmul.f32.gmra.mxu0 %v2646
        %v2691 = vpop.f32.mrf.mxu0
        %v2692 = vadd.f32 0.0, %v2691
        %2693 = vdwg.mxu0
        %2694 = vmatpush.msra.mxu0 0.0
        %2695 = vmatpush.msra.mxu0 0.0
        %2696 = vmatpush.msra.mxu0 0.0
        %2697 = vmatpush.msra.mxu0 0.0
        %2698 = vmatpush.msra.mxu0 0.0
        %2699 = vmatpush.msra.mxu0 0.0
        %2700 = vmatpush.msra.mxu0 0.0
        %2701 = vmatpush.msra.mxu0 0.0
        %2702 = vmatpush.msra.mxu0 0.0
        %2703 = vmatpush.msra.mxu0 0.0
        %2704 = vmatpush.msra.mxu0 0.0
        %2705 = vmatpush.msra.mxu0 0.0
        %2706 = vmatpush.msra.mxu0 0.0
        %2707 = vmatpush.msra.mxu0 0.0
        %2708 = vmatpush.msra.mxu0 0.0
        %2709 = vmatpush.msra.mxu0 %v1238
        %2710 = vmatmul.f32.gmra.mxu0 %v2643
        %v2711 = vpop.f32.mrf.mxu0
        %v2712 = vadd.f32 0.0, %v2711
        %2713 = vmatmul.f32.gmra.mxu0 %v2646
        %v2714 = vpop.f32.mrf.mxu0
        %v2715 = vadd.f32 0.0, %v2714
        %2716 = vdwg.mxu0
        %2717 = vmatpush.msra.mxu0 0.0
        %2718 = vmatpush.msra.mxu0 0.0
        %2719 = vmatpush.msra.mxu0 0.0
        %2720 = vmatpush.msra.mxu0 0.0
        %2721 = vmatpush.msra.mxu0 0.0
        %2722 = vmatpush.msra.mxu0 0.0
        %2723 = vmatpush.msra.mxu0 0.0
        %2724 = vmatpush.msra.mxu0 0.0
        %2725 = vmatpush.msra.mxu0 0.0
        %2726 = vmatpush.msra.mxu0 0.0
        %2727 = vmatpush.msra.mxu0 0.0
        %2728 = vmatpush.msra.mxu0 0.0
        %2729 = vmatpush.msra.mxu0 0.0
        %2730 = vmatpush.msra.mxu0 0.0
        %2731 = vmatpush.msra.mxu0 0.0
        %2732 = vmatpush.msra.mxu0 %v1239
        %2733 = vmatmul.f32.gmra.mxu0 %v2643
        %v2734 = vpop.f32.mrf.mxu0
        %v2735 = vadd.f32 0.0, %v2734
        %2736 = vmatmul.f32.gmra.mxu0 %v2646
        %v2737 = vpop.f32.mrf.mxu0
        %v2738 = vadd.f32 0.0, %v2737
        %2739 = vdwg.mxu0
        %v2740 = vmul.f32 %v2634, %v2666
        %v2741 = vmul.f32 %v2635, %v2689
        %v2742 = vmul.f32 %v2636, %v2712
        %v2743 = vmul.f32 %v2637, %v2735
        %v2744 = vmul.f32 %v2638, %v2669
        %v2745 = vmul.f32 %v2639, %v2692
        %v2746 = vmul.f32 %v2640, %v2715
        %v2747 = vmul.f32 %v2641, %v2738
        %v2748 = vld [vmem:[%s61] sm:$0xff]
        %v2749 = vld [vmem:[%s61 + $0x8] sm:$0xff]
        %v2750 = vld [vmem:[%s61 + $0x10] sm:$0xff]
        %v2751 = vld [vmem:[%s61 + $0x18] sm:$0xff]
        %v2752 = vld [vmem:[%s61 + $0x20] sm:$0xff]
        %v2753 = vld [vmem:[%s61 + $0x28] sm:$0xff]
        %v2754 = vld [vmem:[%s61 + $0x30] sm:$0xff]
        %v2755 = vld [vmem:[%s61 + $0x38] sm:$0xff]
        %v2756 = vld [vmem:[%s61 + $0x40] sm:$0xff]
        %v2757 = vld [vmem:[%s61 + $0x48] sm:$0xff]
        %v2758 = vld [vmem:[%s61 + $0x50] sm:$0xff]
        %v2759 = vld [vmem:[%s61 + $0x58] sm:$0xff]
        %v2760 = vld [vmem:[%s61 + $0x60] sm:$0xff]
        %v2761 = vld [vmem:[%s61 + $0x68] sm:$0xff]
        %v2762 = vld [vmem:[%s61 + $0x70] sm:$0xff]
        %v2763 = vld [vmem:[%s61 + $0x78] sm:$0xff]
        %v2764 = vld [vmem:[%s61 + $0x80] sm:$0xff]
        %v2765 = vld [vmem:[%s61 + $0x88] sm:$0xff]
        %v2766 = vld [vmem:[%s61 + $0x90] sm:$0xff]
        %v2767 = vld [vmem:[%s61 + $0x98] sm:$0xff]
        %v2768 = vld [vmem:[%s61 + $0xa0] sm:$0xff]
        %v2769 = vld [vmem:[%s61 + $0xa8] sm:$0xff]
        %v2770 = vld [vmem:[%s61 + $0xb0] sm:$0xff]
        %v2771 = vld [vmem:[%s61 + $0xb8] sm:$0xff]
        %v2772 = vld [vmem:[%s61 + $0xc0] sm:$0xff]
        %v2773 = vld [vmem:[%s61 + $0xc8] sm:$0xff]
        %v2774 = vld [vmem:[%s61 + $0xd0] sm:$0xff]
        %v2775 = vld [vmem:[%s61 + $0xd8] sm:$0xff]
        %v2776 = vld [vmem:[%s61 + $0xe0] sm:$0xff]
        %v2777 = vld [vmem:[%s61 + $0xe8] sm:$0xff]
        %v2778 = vld [vmem:[%s61 + $0xf0] sm:$0xff]
        %v2779 = vld [vmem:[%s61 + $0xf8] sm:$0xff]
        %v2780 = vld [vmem:[%s61 + $0x100] sm:$0xff]
        %v2781 = vld [vmem:[%s61 + $0x108] sm:$0xff]
        %v2782 = vld [vmem:[%s61 + $0x110] sm:$0xff]
        %v2783 = vld [vmem:[%s61 + $0x118] sm:$0xff]
        %v2784 = vld [vmem:[%s61 + $0x120] sm:$0xff]
        %v2785 = vld [vmem:[%s61 + $0x128] sm:$0xff]
        %v2786 = vld [vmem:[%s61 + $0x130] sm:$0xff]
        %v2787 = vld [vmem:[%s61 + $0x138] sm:$0xff]
        %v2788 = vld [vmem:[%s61 + $0x140] sm:$0xff]
        %v2789 = vld [vmem:[%s61 + $0x148] sm:$0xff]
        %v2790 = vld [vmem:[%s61 + $0x150] sm:$0xff]
        %v2791 = vld [vmem:[%s61 + $0x158] sm:$0xff]
        %v2792 = vld [vmem:[%s61 + $0x160] sm:$0xff]
        %v2793 = vld [vmem:[%s61 + $0x168] sm:$0xff]
        %v2794 = vld [vmem:[%s61 + $0x170] sm:$0xff]
        %v2795 = vld [vmem:[%s61 + $0x178] sm:$0xff]
        %v2796 = vld [vmem:[%s61 + $0x180] sm:$0xff]
        %v2797 = vld [vmem:[%s61 + $0x188] sm:$0xff]
        %v2798 = vld [vmem:[%s61 + $0x190] sm:$0xff]
        %v2799 = vld [vmem:[%s61 + $0x198] sm:$0xff]
        %v2800 = vld [vmem:[%s61 + $0x1a0] sm:$0xff]
        %v2801 = vld [vmem:[%s61 + $0x1a8] sm:$0xff]
        %v2802 = vld [vmem:[%s61 + $0x1b0] sm:$0xff]
        %v2803 = vld [vmem:[%s61 + $0x1b8] sm:$0xff]
        %v2804 = vld [vmem:[%s61 + $0x1c0] sm:$0xff]
        %v2805 = vld [vmem:[%s61 + $0x1c8] sm:$0xff]
        %v2806 = vld [vmem:[%s61 + $0x1d0] sm:$0xff]
        %v2807 = vld [vmem:[%s61 + $0x1d8] sm:$0xff]
        %v2808 = vld [vmem:[%s61 + $0x1e0] sm:$0xff]
        %v2809 = vld [vmem:[%s61 + $0x1e8] sm:$0xff]
        %v2810 = vld [vmem:[%s61 + $0x1f0] sm:$0xff]
        %v2811 = vld [vmem:[%s61 + $0x1f8] sm:$0xff]
        %v2812 = vld [vmem:[%s63] sm:$0xff]
        %2813 = vmatpush.msra.mxu0 0.0
        %2814 = vmatpush.msra.mxu0 0.0
        %2815 = vmatpush.msra.mxu0 0.0
        %2816 = vmatpush.msra.mxu0 0.0
        %2817 = vmatpush.msra.mxu0 0.0
        %2818 = vmatpush.msra.mxu0 0.0
        %2819 = vmatpush.msra.mxu0 0.0
        %2820 = vmatpush.msra.mxu0 0.0
        %2821 = vmatpush.msra.mxu0 0.0
        %2822 = vmatpush.msra.mxu0 0.0
        %2823 = vmatpush.msra.mxu0 0.0
        %2824 = vmatpush.msra.mxu0 0.0
        %2825 = vmatpush.msra.mxu0 0.0
        %2826 = vmatpush.msra.mxu0 0.0
        %2827 = vmatpush.msra.mxu0 0.0
        %2828 = vmatpush.msra.mxu0 %v2812
        %2829 = vmatmul.f32.gmra.mxu0 %v2643
        %v2830 = vpop.f32.mrf.mxu0
        %v2831 = vadd.f32 0.0, %v2830
        %2832 = vmatmul.f32.gmra.mxu0 %v2646
        %v2833 = vpop.f32.mrf.mxu0
        %v2834 = vadd.f32 0.0, %v2833
        %2835 = vdwg.mxu0
        %2836 = vmatpush.msra.mxu0 %v2763
        %2837 = vmatpush.msra.mxu0 %v2762
        %2838 = vmatpush.msra.mxu0 %v2761
        %2839 = vmatpush.msra.mxu0 %v2760
        %2840 = vmatpush.msra.mxu0 %v2759
        %2841 = vmatpush.msra.mxu0 %v2758
        %2842 = vmatpush.msra.mxu0 %v2757
        %2843 = vmatpush.msra.mxu0 %v2756
        %2844 = vmatpush.msra.mxu0 %v2755
        %2845 = vmatpush.msra.mxu0 %v2754
        %2846 = vmatpush.msra.mxu0 %v2753
        %2847 = vmatpush.msra.mxu0 %v2752
        %2848 = vmatpush.msra.mxu0 %v2751
        %2849 = vmatpush.msra.mxu0 %v2750
        %2850 = vmatpush.msra.mxu0 %v2749
        %2851 = vmatpush.msra.mxu0 %v2748
        %2852 = vmatmul.f32.gmra.mxu0 %v2740
        %v2853 = vpop.f32.mrf.mxu0
        %v2854 = vadd.f32 %v2831, %v2853
        %2855 = vmatmul.f32.gmra.mxu0 %v2744
        %v2856 = vpop.f32.mrf.mxu0
        %v2857 = vadd.f32 %v2834, %v2856
        %2858 = vdwg.mxu0
        %2859 = vmatpush.msra.mxu0 %v2779
        %2860 = vmatpush.msra.mxu0 %v2778
        %2861 = vmatpush.msra.mxu0 %v2777
        %2862 = vmatpush.msra.mxu0 %v2776
        %2863 = vmatpush.msra.mxu0 %v2775
        %2864 = vmatpush.msra.mxu0 %v2774
        %2865 = vmatpush.msra.mxu0 %v2773
        %2866 = vmatpush.msra.mxu0 %v2772
        %2867 = vmatpush.msra.mxu0 %v2771
        %2868 = vmatpush.msra.mxu0 %v2770
        %2869 = vmatpush.msra.mxu0 %v2769
        %2870 = vmatpush.msra.mxu0 %v2768
        %2871 = vmatpush.msra.mxu0 %v2767
        %2872 = vmatpush.msra.mxu0 %v2766
        %2873 = vmatpush.msra.mxu0 %v2765
        %2874 = vmatpush.msra.mxu0 %v2764
        %2875 = vmatmul.f32.gmra.mxu0 %v2741
        %v2876 = vpop.f32.mrf.mxu0
        %v2877 = vadd.f32 %v2854, %v2876
        %2878 = vmatmul.f32.gmra.mxu0 %v2745
        %v2879 = vpop.f32.mrf.mxu0
        %v2880 = vadd.f32 %v2857, %v2879
        %2881 = vdwg.mxu0
        %2882 = vmatpush.msra.mxu0 %v2795
        %2883 = vmatpush.msra.mxu0 %v2794
        %2884 = vmatpush.msra.mxu0 %v2793
        %2885 = vmatpush.msra.mxu0 %v2792
        %2886 = vmatpush.msra.mxu0 %v2791
        %2887 = vmatpush.msra.mxu0 %v2790
        %2888 = vmatpush.msra.mxu0 %v2789
        %2889 = vmatpush.msra.mxu0 %v2788
        %2890 = vmatpush.msra.mxu0 %v2787
        %2891 = vmatpush.msra.mxu0 %v2786
        %2892 = vmatpush.msra.mxu0 %v2785
        %2893 = vmatpush.msra.mxu0 %v2784
        %2894 = vmatpush.msra.mxu0 %v2783
        %2895 = vmatpush.msra.mxu0 %v2782
        %2896 = vmatpush.msra.mxu0 %v2781
        %2897 = vmatpush.msra.mxu0 %v2780
        %2898 = vmatmul.f32.gmra.mxu0 %v2742
        %v2899 = vpop.f32.mrf.mxu0
        %v2900 = vadd.f32 %v2877, %v2899
        %2901 = vmatmul.f32.gmra.mxu0 %v2746
        %v2902 = vpop.f32.mrf.mxu0
        %v2903 = vadd.f32 %v2880, %v2902
        %2904 = vdwg.mxu0
        %2905 = vmatpush.msra.mxu0 %v2811
        %2906 = vmatpush.msra.mxu0 %v2810
        %2907 = vmatpush.msra.mxu0 %v2809
        %2908 = vmatpush.msra.mxu0 %v2808
        %2909 = vmatpush.msra.mxu0 %v2807
        %2910 = vmatpush.msra.mxu0 %v2806
        %2911 = vmatpush.msra.mxu0 %v2805
        %2912 = vmatpush.msra.mxu0 %v2804
        %2913 = vmatpush.msra.mxu0 %v2803
        %2914 = vmatpush.msra.mxu0 %v2802
        %2915 = vmatpush.msra.mxu0 %v2801
        %2916 = vmatpush.msra.mxu0 %v2800
        %2917 = vmatpush.msra.mxu0 %v2799
        %2918 = vmatpush.msra.mxu0 %v2798
        %2919 = vmatpush.msra.mxu0 %v2797
        %2920 = vmatpush.msra.mxu0 %v2796
        %2921 = vmatmul.f32.gmra.mxu0 %v2743
        %v2922 = vpop.f32.mrf.mxu0
        %v2923 = vadd.f32 %v2900, %v2922
        %2924 = vmatmul.f32.gmra.mxu0 %v2747
        %v2925 = vpop.f32.mrf.mxu0
        %v2926 = vadd.f32 %v2903, %v2925
        %2927 = vdwg.mxu0
        %v2928 = vadd.f32 %v1232, %v2923
        %v2929 = vadd.f32 %v1233, %v2926
        %v2930 = vld [vmem:[%s27] sm:$0x1]
        %v2931 = vld [vmem:[%s29] sm:$0x1]
        %v2932 = vsel %vm1314, %v2928, 0.0
        %2933 = vadd.xlane.f32.xlu0 %v2932
        %v2934 = vpop.xlane.xlu0 %2933
        %vm2935 = vcmask 257024
        %v2936 = vsel %vm2935, %v2929, 0.0
        %2937 = vadd.xlane.f32.xlu0 %v2936
        %v2938 = vpop.xlane.xlu0 %2937
        %v2939 = vmul.f32 %v2934, %v1815
        %v2940 = vmul.f32 %v2938, %v1815
        %v2941 = vsub.f32 %v2928, %v2939
        %v2942 = vsub.f32 %v2929, %v2940
        %v2943 = vmul.f32 %v2941, %v2941
        %v2944 = vmul.f32 %v2942, %v2942
        %v2945 = vsel %vm1314, %v2943, 0.0
        %2946 = vadd.xlane.f32.xlu0 %v2945
        %v2947 = vpop.xlane.xlu0 %2946
        %v2948 = vsel %vm2935, %v2944, 0.0
        %2949 = vadd.xlane.f32.xlu0 %v2948
        %v2950 = vpop.xlane.xlu0 %2949
        %v2951 = vmul.f32 %v2947, %v1815
        %v2952 = vmul.f32 %v2950, %v1815
        %v2953 = vadd.f32 %v2951, 1e-05
        %v2954 = vadd.f32 %v2952, 1e-05
        %v2955 = vrsqrt.pop %v2953
        %v2956 = vmul.f32 %v2955, %v2953
        %v2957 = vmul.f32 %v2956, %v2955
        %v2958 = vmul.f32 0.5, %v2957
        %v2959 = vsub.f32 1.5, %v2958
        %v2960 = vmul.f32 %v2955, %v2959
        %vm2961 = vweird.f32 %v2953
        %vm2962 = vweird.f32 %v2955
        %vm2963 = vmor %vm2961, %vm2962
        %v2964 = vsel %vm2963, %v2955, %v2960
        %v2965 = vrsqrt.pop %v2954
        %v2966 = vmul.f32 %v2965, %v2954
        %v2967 = vmul.f32 %v2966, %v2965
        %v2968 = vmul.f32 0.5, %v2967
        %v2969 = vsub.f32 1.5, %v2968
        %v2970 = vmul.f32 %v2965, %v2969
        %vm2971 = vweird.f32 %v2954
        %vm2972 = vweird.f32 %v2965
        %vm2973 = vmor %vm2971, %vm2972
        %v2974 = vsel %vm2973, %v2965, %v2970
        %v2975 = vmul.f32 %v2941, %v2964
        %v2976 = vmul.f32 %v2942, %v2974
        %v2978 = vperm.slane %v2930, 0
        %v2980 = vmul.f32 %v2975, %v2978
        %v2981 = vmul.f32 %v2976, %v2978
        %v2983 = vperm.slane %v2931, 0
        %v2985 = vadd.f32 %v2980, %v2983
        %v2986 = vadd.f32 %v2981, %v2983
        %v2987 = vld [vmem:[%s65] sm:$0xff]
        %v2988 = vld [vmem:[%s65 + $0x8] sm:$0xff]
        %v2989 = vld [vmem:[%s65 + $0x10] sm:$0xff]
        %v2990 = vld [vmem:[%s65 + $0x18] sm:$0xff]
        %v2991 = vld [vmem:[%s67] sm:$0x1]
        %v2992 = vld [vmem:[%s69] sm:$0xff]
        %v2993 = vld [vmem:[%s69 + $0x8] sm:$0xff]
        %v2994 = vld [vmem:[%s69 + $0x10] sm:$0xff]
        %v2995 = vld [vmem:[%s69 + $0x18] sm:$0xff]
        %v2996 = vld [vmem:[%s69 + $0x20] sm:$0xff]
        %v2997 = vld [vmem:[%s69 + $0x28] sm:$0xff]
        %v2998 = vld [vmem:[%s69 + $0x30] sm:$0xff]
        %v2999 = vld [vmem:[%s69 + $0x38] sm:$0xff]
        %v3000 = vld [vmem:[%s69 + $0x40] sm:$0xff]
        %v3001 = vld [vmem:[%s69 + $0x48] sm:$0xff]
        %v3002 = vld [vmem:[%s69 + $0x50] sm:$0xff]
        %v3003 = vld [vmem:[%s69 + $0x58] sm:$0xff]
        %v3004 = vld [vmem:[%s69 + $0x60] sm:$0xff]
        %v3005 = vld [vmem:[%s69 + $0x68] sm:$0xff]
        %v3006 = vld [vmem:[%s69 + $0x70] sm:$0xff]
        %v3007 = vld [vmem:[%s69 + $0x78] sm:$0xff]
        %v3008 = vld [vmem:[%s71] sm:$0xf]
        %v3009 = vld [vmem:[%s73] sm:$0xff]
        %v3010 = vld [vmem:[%s73 + $0x8] sm:$0xff]
        %v3011 = vld [vmem:[%s73 + $0x10] sm:$0xff]
        %v3012 = vld [vmem:[%s73 + $0x18] sm:$0xff]
        %v3013 = vld [vmem:[%s73 + $0x20] sm:$0xff]
        %v3014 = vld [vmem:[%s73 + $0x28] sm:$0xff]
        %v3015 = vld [vmem:[%s73 + $0x30] sm:$0xff]
        %v3016 = vld [vmem:[%s73 + $0x38] sm:$0xff]
        %v3017 = vld [vmem:[%s73 + $0x40] sm:$0xff]
        %v3018 = vld [vmem:[%s73 + $0x48] sm:$0xff]
        %v3019 = vld [vmem:[%s73 + $0x50] sm:$0xff]
        %v3020 = vld [vmem:[%s73 + $0x58] sm:$0xff]
        %v3021 = vld [vmem:[%s73 + $0x60] sm:$0xff]
        %v3022 = vld [vmem:[%s73 + $0x68] sm:$0xff]
        %v3023 = vld [vmem:[%s73 + $0x70] sm:$0xff]
        %v3024 = vld [vmem:[%s73 + $0x78] sm:$0xff]
        %v3025 = vld [vmem:[%s73 + $0x80] sm:$0xff]
        %v3026 = vld [vmem:[%s73 + $0x88] sm:$0xff]
        %v3027 = vld [vmem:[%s73 + $0x90] sm:$0xff]
        %v3028 = vld [vmem:[%s73 + $0x98] sm:$0xff]
        %v3029 = vld [vmem:[%s73 + $0xa0] sm:$0xff]
        %v3030 = vld [vmem:[%s73 + $0xa8] sm:$0xff]
        %v3031 = vld [vmem:[%s73 + $0xb0] sm:$0xff]
        %v3032 = vld [vmem:[%s73 + $0xb8] sm:$0xff]
        %v3033 = vld [vmem:[%s73 + $0xc0] sm:$0xff]
        %v3034 = vld [vmem:[%s73 + $0xc8] sm:$0xff]
        %v3035 = vld [vmem:[%s73 + $0xd0] sm:$0xff]
        %v3036 = vld [vmem:[%s73 + $0xd8] sm:$0xff]
        %v3037 = vld [vmem:[%s73 + $0xe0] sm:$0xff]
        %v3038 = vld [vmem:[%s73 + $0xe8] sm:$0xff]
        %v3039 = vld [vmem:[%s73 + $0xf0] sm:$0xff]
        %v3040 = vld [vmem:[%s73 + $0xf8] sm:$0xff]
        %v3041 = vld [vmem:[%s73 + $0x100] sm:$0xff]
        %v3042 = vld [vmem:[%s73 + $0x108] sm:$0xff]
        %v3043 = vld [vmem:[%s73 + $0x110] sm:$0xff]
        %v3044 = vld [vmem:[%s73 + $0x118] sm:$0xff]
        %v3045 = vld [vmem:[%s73 + $0x120] sm:$0xff]
        %v3046 = vld [vmem:[%s73 + $0x128] sm:$0xff]
        %v3047 = vld [vmem:[%s73 + $0x130] sm:$0xff]
        %v3048 = vld [vmem:[%s73 + $0x138] sm:$0xff]
        %v3049 = vld [vmem:[%s73 + $0x140] sm:$0xff]
        %v3050 = vld [vmem:[%s73 + $0x148] sm:$0xff]
        %v3051 = vld [vmem:[%s73 + $0x150] sm:$0xff]
        %v3052 = vld [vmem:[%s73 + $0x158] sm:$0xff]
        %v3053 = vld [vmem:[%s73 + $0x160] sm:$0xff]
        %v3054 = vld [vmem:[%s73 + $0x168] sm:$0xff]
        %v3055 = vld [vmem:[%s73 + $0x170] sm:$0xff]
        %v3056 = vld [vmem:[%s73 + $0x178] sm:$0xff]
        %v3057 = vld [vmem:[%s73 + $0x180] sm:$0xff]
        %v3058 = vld [vmem:[%s73 + $0x188] sm:$0xff]
        %v3059 = vld [vmem:[%s73 + $0x190] sm:$0xff]
        %v3060 = vld [vmem:[%s73 + $0x198] sm:$0xff]
        %v3061 = vld [vmem:[%s73 + $0x1a0] sm:$0xff]
        %v3062 = vld [vmem:[%s73 + $0x1a8] sm:$0xff]
        %v3063 = vld [vmem:[%s73 + $0x1b0] sm:$0xff]
        %v3064 = vld [vmem:[%s73 + $0x1b8] sm:$0xff]
        %v3065 = vld [vmem:[%s73 + $0x1c0] sm:$0xff]
        %v3066 = vld [vmem:[%s73 + $0x1c8] sm:$0xff]
        %v3067 = vld [vmem:[%s73 + $0x1d0] sm:$0xff]
        %v3068 = vld [vmem:[%s73 + $0x1d8] sm:$0xff]
        %v3069 = vld [vmem:[%s73 + $0x1e0] sm:$0xff]
        %v3070 = vld [vmem:[%s73 + $0x1e8] sm:$0xff]
        %v3071 = vld [vmem:[%s73 + $0x1f0] sm:$0xff]
        %v3072 = vld [vmem:[%s73 + $0x1f8] sm:$0xff]
        %v3073 = vld [vmem:[%s75] sm:$0xff]
        %v3075 = vperm.slane %v2991, 0
        %v3078 = vsel %vm1314, %v2985, 0
        %v3081 = vsel %vm1314, %v2986, 0
        %3083 = vmatpush.msra.mxu0 0.0
        %3084 = vmatpush.msra.mxu0 0.0
        %3085 = vmatpush.msra.mxu0 0.0
        %3086 = vmatpush.msra.mxu0 0.0
        %3087 = vmatpush.msra.mxu0 0.0
        %3088 = vmatpush.msra.mxu0 0.0
        %3089 = vmatpush.msra.mxu0 0.0
        %3090 = vmatpush.msra.mxu0 0.0
        %3091 = vmatpush.msra.mxu0 0.0
        %3092 = vmatpush.msra.mxu0 0.0
        %3093 = vmatpush.msra.mxu0 0.0
        %3094 = vmatpush.msra.mxu0 0.0
        %3095 = vmatpush.msra.mxu0 %v2990
        %3096 = vmatpush.msra.mxu0 %v2989
        %3097 = vmatpush.msra.mxu0 %v2988
        %3098 = vmatpush.msra.mxu0 %v2987
        %3099 = vmatmul.f32.gmra.mxu0 %v3078
        %v3100 = vpop.f32.mrf.mxu0
        %v3101 = vadd.f32 %v3075, %v3100
        %3102 = vmatmul.f32.gmra.mxu0 %v3081
        %v3103 = vpop.f32.mrf.mxu0
        %v3104 = vadd.f32 %v3075, %v3103
        %3105 = vdwg.mxu0
        %v3106 = vsel %vm1240, %v3101, -inf
        %3107 = vmax.xlane.f32.xlu0 %v3106
        %v3108 = vpop.xlane.xlu0 %3107
        %v3109 = vsel %vm1242, %v3104, -inf
        %3110 = vmax.xlane.f32.xlu0 %v3109
        %v3111 = vpop.xlane.xlu0 %3110
        %v3112 = vsub.f32 %v3101, %v3108
        %v3113 = vsub.f32 %v3104, %v3111
        %v3114 = vmul.f32 %v3112, 1.442695
        %v3115 = vpow.pop %v3114
        %v3116 = vmul.f32 %v3113, 1.442695
        %v3117 = vpow.pop %v3116
        %v3118 = vsel %vm1240, %v3115, 0.0
        %3119 = vadd.xlane.f32.xlu0 %v3118
        %v3120 = vpop.xlane.xlu0 %3119
        %v3121 = vsel %vm1242, %v3117, 0.0
        %3122 = vadd.xlane.f32.xlu0 %v3121
        %v3123 = vpop.xlane.xlu0 %3122
        %v3124 = vrcp.pop %v3120
        %v3125 = vrcp.pop %v3123
        %v3126 = vmul.f32 %v3115, %v3124
        %v3127 = vmul.f32 %v3117, %v3125
        %v3129 = vperm.slane %v3008, 0
        %v3130 = vperm.slane %v3008, 1
        %v3131 = vperm.slane %v3008, 2
        %v3132 = vperm.slane %v3008, 3
        %3137 = vmatpush.msra.mxu0 0.0
        %3138 = vmatpush.msra.mxu0 0.0
        %3139 = vmatpush.msra.mxu0 0.0
        %3140 = vmatpush.msra.mxu0 0.0
        %3141 = vmatpush.msra.mxu0 0.0
        %3142 = vmatpush.msra.mxu0 0.0
        %3143 = vmatpush.msra.mxu0 0.0
        %3144 = vmatpush.msra.mxu0 0.0
        %3145 = vmatpush.msra.mxu0 0.0
        %3146 = vmatpush.msra.mxu0 0.0
        %3147 = vmatpush.msra.mxu0 0.0
        %3148 = vmatpush.msra.mxu0 0.0
        %3149 = vmatpush.msra.mxu0 %v3004
        %3150 = vmatpush.msra.mxu0 %v3000
        %3151 = vmatpush.msra.mxu0 %v2996
        %3152 = vmatpush.msra.mxu0 %v2992
        %3153 = vmatmul.f32.gmra.mxu0 %v3078
        %v3154 = vpop.f32.mrf.mxu0
        %v3155 = vadd.f32 %v3129, %v3154
        %3156 = vmatmul.f32.gmra.mxu0 %v3081
        %v3157 = vpop.f32.mrf.mxu0
        %v3158 = vadd.f32 %v3129, %v3157
        %3159 = vdwg.mxu0
        %3160 = vmatpush.msra.mxu0 0.0
        %3161 = vmatpush.msra.mxu0 0.0
        %3162 = vmatpush.msra.mxu0 0.0
        %3163 = vmatpush.msra.mxu0 0.0
        %3164 = vmatpush.msra.mxu0 0.0
        %3165 = vmatpush.msra.mxu0 0.0
        %3166 = vmatpush.msra.mxu0 0.0
        %3167 = vmatpush.msra.mxu0 0.0
        %3168 = vmatpush.msra.mxu0 0.0
        %3169 = vmatpush.msra.mxu0 0.0
        %3170 = vmatpush.msra.mxu0 0.0
        %3171 = vmatpush.msra.mxu0 0.0
        %3172 = vmatpush.msra.mxu0 %v3005
        %3173 = vmatpush.msra.mxu0 %v3001
        %3174 = vmatpush.msra.mxu0 %v2997
        %3175 = vmatpush.msra.mxu0 %v2993
        %3176 = vmatmul.f32.gmra.mxu0 %v3078
        %v3177 = vpop.f32.mrf.mxu0
        %v3178 = vadd.f32 %v3130, %v3177
        %3179 = vmatmul.f32.gmra.mxu0 %v3081
        %v3180 = vpop.f32.mrf.mxu0
        %v3181 = vadd.f32 %v3130, %v3180
        %3182 = vdwg.mxu0
        %3183 = vmatpush.msra.mxu0 0.0
        %3184 = vmatpush.msra.mxu0 0.0
        %3185 = vmatpush.msra.mxu0 0.0
        %3186 = vmatpush.msra.mxu0 0.0
        %3187 = vmatpush.msra.mxu0 0.0
        %3188 = vmatpush.msra.mxu0 0.0
        %3189 = vmatpush.msra.mxu0 0.0
        %3190 = vmatpush.msra.mxu0 0.0
        %3191 = vmatpush.msra.mxu0 0.0
        %3192 = vmatpush.msra.mxu0 0.0
        %3193 = vmatpush.msra.mxu0 0.0
        %3194 = vmatpush.msra.mxu0 0.0
        %3195 = vmatpush.msra.mxu0 %v3006
        %3196 = vmatpush.msra.mxu0 %v3002
        %3197 = vmatpush.msra.mxu0 %v2998
        %3198 = vmatpush.msra.mxu0 %v2994
        %3199 = vmatmul.f32.gmra.mxu0 %v3078
        %v3200 = vpop.f32.mrf.mxu0
        %v3201 = vadd.f32 %v3131, %v3200
        %3202 = vmatmul.f32.gmra.mxu0 %v3081
        %v3203 = vpop.f32.mrf.mxu0
        %v3204 = vadd.f32 %v3131, %v3203
        %3205 = vdwg.mxu0
        %3206 = vmatpush.msra.mxu0 0.0
        %3207 = vmatpush.msra.mxu0 0.0
        %3208 = vmatpush.msra.mxu0 0.0
        %3209 = vmatpush.msra.mxu0 0.0
        %3210 = vmatpush.msra.mxu0 0.0
        %3211 = vmatpush.msra.mxu0 0.0
        %3212 = vmatpush.msra.mxu0 0.0
        %3213 = vmatpush.msra.mxu0 0.0
        %3214 = vmatpush.msra.mxu0 0.0
        %3215 = vmatpush.msra.mxu0 0.0
        %3216 = vmatpush.msra.mxu0 0.0
        %3217 = vmatpush.msra.mxu0 0.0
        %3218 = vmatpush.msra.mxu0 %v3007
        %3219 = vmatpush.msra.mxu0 %v3003
        %3220 = vmatpush.msra.mxu0 %v2999
        %3221 = vmatpush.msra.mxu0 %v2995
        %3222 = vmatmul.f32.gmra.mxu0 %v3078
        %v3223 = vpop.f32.mrf.mxu0
        %v3224 = vadd.f32 %v3132, %v3223
        %3225 = vmatmul.f32.gmra.mxu0 %v3081
        %v3226 = vpop.f32.mrf.mxu0
        %v3227 = vadd.f32 %v3132, %v3226
        %3228 = vdwg.mxu0
        %v3229 = vmax.f32 %v3155, 0.0
        %v3230 = vmax.f32 %v3178, 0.0
        %v3231 = vmax.f32 %v3201, 0.0
        %v3232 = vmax.f32 %v3224, 0.0
        %v3233 = vmax.f32 %v3158, 0.0
        %v3234 = vmax.f32 %v3181, 0.0
        %v3235 = vmax.f32 %v3204, 0.0
        %v3236 = vmax.f32 %v3227, 0.0
        %v3238 = vsel %vm1240, %v3126, 0
        %v3241 = vsel %vm1240, %v3127, 0
        %3243 = vmatpush.msra.mxu0 0.0
        %3244 = vmatpush.msra.mxu0 0.0
        %3245 = vmatpush.msra.mxu0 0.0
        %3246 = vmatpush.msra.mxu0 0.0
        %3247 = vmatpush.msra.mxu0 0.0
        %3248 = vmatpush.msra.mxu0 0.0
        %3249 = vmatpush.msra.mxu0 0.0
        %3250 = vmatpush.msra.mxu0 0.0
        %3251 = vmatpush.msra.mxu0 0.0
        %3252 = vmatpush.msra.mxu0 0.0
        %3253 = vmatpush.msra.mxu0 0.0
        %3254 = vmatpush.msra.mxu0 0.0
        %3255 = vmatpush.msra.mxu0 0.0
        %3256 = vmatpush.msra.mxu0 0.0
        %3257 = vmatpush.msra.mxu0 0.0
        %3258 = vmatpush.msra.mxu0 %v1236
        %3259 = vmatmul.f32.gmra.mxu0 %v3238
        %v3260 = vpop.f32.mrf.mxu0
        %v3261 = vadd.f32 0.0, %v3260
        %3262 = vmatmul.f32.gmra.mxu0 %v3241
        %v3263 = vpop.f32.mrf.mxu0
        %v3264 = vadd.f32 0.0, %v3263
        %3265 = vdwg.mxu0
        %3266 = vmatpush.msra.mxu0 0.0
        %3267 = vmatpush.msra.mxu0 0.0
        %3268 = vmatpush.msra.mxu0 0.0
        %3269 = vmatpush.msra.mxu0 0.0
        %3270 = vmatpush.msra.mxu0 0.0
        %3271 = vmatpush.msra.mxu0 0.0
        %3272 = vmatpush.msra.mxu0 0.0
        %3273 = vmatpush.msra.mxu0 0.0
        %3274 = vmatpush.msra.mxu0 0.0
        %3275 = vmatpush.msra.mxu0 0.0
        %3276 = vmatpush.msra.mxu0 0.0
        %3277 = vmatpush.msra.mxu0 0.0
        %3278 = vmatpush.msra.mxu0 0.0
        %3279 = vmatpush.msra.mxu0 0.0
        %3280 = vmatpush.msra.mxu0 0.0
        %3281 = vmatpush.msra.mxu0 %v1237
        %3282 = vmatmul.f32.gmra.mxu0 %v3238
        %v3283 = vpop.f32.mrf.mxu0
        %v3284 = vadd.f32 0.0, %v3283
        %3285 = vmatmul.f32.gmra.mxu0 %v3241
        %v3286 = vpop.f32.mrf.mxu0
        %v3287 = vadd.f32 0.0, %v3286
        %3288 = vdwg.mxu0
        %3289 = vmatpush.msra.mxu0 0.0
        %3290 = vmatpush.msra.mxu0 0.0
        %3291 = vmatpush.msra.mxu0 0.0
        %3292 = vmatpush.msra.mxu0 0.0
        %3293 = vmatpush.msra.mxu0 0.0
        %3294 = vmatpush.msra.mxu0 0.0
        %3295 = vmatpush.msra.mxu0 0.0
        %3296 = vmatpush.msra.mxu0 0.0
        %3297 = vmatpush.msra.mxu0 0.0
        %3298 = vmatpush.msra.mxu0 0.0
        %3299 = vmatpush.msra.mxu0 0.0
        %3300 = vmatpush.msra.mxu0 0.0
        %3301 = vmatpush.msra.mxu0 0.0
        %3302 = vmatpush.msra.mxu0 0.0
        %3303 = vmatpush.msra.mxu0 0.0
        %3304 = vmatpush.msra.mxu0 %v1238
        %3305 = vmatmul.f32.gmra.mxu0 %v3238
        %v3306 = vpop.f32.mrf.mxu0
        %v3307 = vadd.f32 0.0, %v3306
        %3308 = vmatmul.f32.gmra.mxu0 %v3241
        %v3309 = vpop.f32.mrf.mxu0
        %v3310 = vadd.f32 0.0, %v3309
        %3311 = vdwg.mxu0
        %3312 = vmatpush.msra.mxu0 0.0
        %3313 = vmatpush.msra.mxu0 0.0
        %3314 = vmatpush.msra.mxu0 0.0
        %3315 = vmatpush.msra.mxu0 0.0
        %3316 = vmatpush.msra.mxu0 0.0
        %3317 = vmatpush.msra.mxu0 0.0
        %3318 = vmatpush.msra.mxu0 0.0
        %3319 = vmatpush.msra.mxu0 0.0
        %3320 = vmatpush.msra.mxu0 0.0
        %3321 = vmatpush.msra.mxu0 0.0
        %3322 = vmatpush.msra.mxu0 0.0
        %3323 = vmatpush.msra.mxu0 0.0
        %3324 = vmatpush.msra.mxu0 0.0
        %3325 = vmatpush.msra.mxu0 0.0
        %3326 = vmatpush.msra.mxu0 0.0
        %3327 = vmatpush.msra.mxu0 %v1239
        %3328 = vmatmul.f32.gmra.mxu0 %v3238
        %v3329 = vpop.f32.mrf.mxu0
        %v3330 = vadd.f32 0.0, %v3329
        %3331 = vmatmul.f32.gmra.mxu0 %v3241
        %v3332 = vpop.f32.mrf.mxu0
        %v3333 = vadd.f32 0.0, %v3332
        %3334 = vdwg.mxu0
        %v3335 = vmul.f32 %v3229, %v3261
        %v3336 = vmul.f32 %v3230, %v3284
        %v3337 = vmul.f32 %v3231, %v3307
        %v3338 = vmul.f32 %v3232, %v3330
        %v3339 = vmul.f32 %v3233, %v3264
        %v3340 = vmul.f32 %v3234, %v3287
        %v3341 = vmul.f32 %v3235, %v3310
        %v3342 = vmul.f32 %v3236, %v3333
        %3343 = vmatpush.msra.mxu0 0.0
        %3344 = vmatpush.msra.mxu0 0.0
        %3345 = vmatpush.msra.mxu0 0.0
        %3346 = vmatpush.msra.mxu0 0.0
        %3347 = vmatpush.msra.mxu0 0.0
        %3348 = vmatpush.msra.mxu0 0.0
        %3349 = vmatpush.msra.mxu0 0.0
        %3350 = vmatpush.msra.mxu0 0.0
        %3351 = vmatpush.msra.mxu0 0.0
        %3352 = vmatpush.msra.mxu0 0.0
        %3353 = vmatpush.msra.mxu0 0.0
        %3354 = vmatpush.msra.mxu0 0.0
        %3355 = vmatpush.msra.mxu0 0.0
        %3356 = vmatpush.msra.mxu0 0.0
        %3357 = vmatpush.msra.mxu0 0.0
        %3358 = vmatpush.msra.mxu0 %v3073
        %3359 = vmatmul.f32.gmra.mxu0 %v3238
        %v3360 = vpop.f32.mrf.mxu0
        %v3361 = vadd.f32 0.0, %v3360
        %3362 = vmatmul.f32.gmra.mxu0 %v3241
        %v3363 = vpop.f32.mrf.mxu0
        %v3364 = vadd.f32 0.0, %v3363
        %3365 = vdwg.mxu0
        %3366 = vmatpush.msra.mxu0 %v3024
        %3367 = vmatpush.msra.mxu0 %v3023
        %3368 = vmatpush.msra.mxu0 %v3022
        %3369 = vmatpush.msra.mxu0 %v3021
        %3370 = vmatpush.msra.mxu0 %v3020
        %3371 = vmatpush.msra.mxu0 %v3019
        %3372 = vmatpush.msra.mxu0 %v3018
        %3373 = vmatpush.msra.mxu0 %v3017
        %3374 = vmatpush.msra.mxu0 %v3016
        %3375 = vmatpush.msra.mxu0 %v3015
        %3376 = vmatpush.msra.mxu0 %v3014
        %3377 = vmatpush.msra.mxu0 %v3013
        %3378 = vmatpush.msra.mxu0 %v3012
        %3379 = vmatpush.msra.mxu0 %v3011
        %3380 = vmatpush.msra.mxu0 %v3010
        %3381 = vmatpush.msra.mxu0 %v3009
        %3382 = vmatmul.f32.gmra.mxu0 %v3335
        %v3383 = vpop.f32.mrf.mxu0
        %v3384 = vadd.f32 %v3361, %v3383
        %3385 = vmatmul.f32.gmra.mxu0 %v3339
        %v3386 = vpop.f32.mrf.mxu0
        %v3387 = vadd.f32 %v3364, %v3386
        %3388 = vdwg.mxu0
        %3389 = vmatpush.msra.mxu0 %v3040
        %3390 = vmatpush.msra.mxu0 %v3039
        %3391 = vmatpush.msra.mxu0 %v3038
        %3392 = vmatpush.msra.mxu0 %v3037
        %3393 = vmatpush.msra.mxu0 %v3036
        %3394 = vmatpush.msra.mxu0 %v3035
        %3395 = vmatpush.msra.mxu0 %v3034
        %3396 = vmatpush.msra.mxu0 %v3033
        %3397 = vmatpush.msra.mxu0 %v3032
        %3398 = vmatpush.msra.mxu0 %v3031
        %3399 = vmatpush.msra.mxu0 %v3030
        %3400 = vmatpush.msra.mxu0 %v3029
        %3401 = vmatpush.msra.mxu0 %v3028
        %3402 = vmatpush.msra.mxu0 %v3027
        %3403 = vmatpush.msra.mxu0 %v3026
        %3404 = vmatpush.msra.mxu0 %v3025
        %3405 = vmatmul.f32.gmra.mxu0 %v3336
        %v3406 = vpop.f32.mrf.mxu0
        %v3407 = vadd.f32 %v3384, %v3406
        %3408 = vmatmul.f32.gmra.mxu0 %v3340
        %v3409 = vpop.f32.mrf.mxu0
        %v3410 = vadd.f32 %v3387, %v3409
        %3411 = vdwg.mxu0
        %3412 = vmatpush.msra.mxu0 %v3056
        %3413 = vmatpush.msra.mxu0 %v3055
        %3414 = vmatpush.msra.mxu0 %v3054
        %3415 = vmatpush.msra.mxu0 %v3053
        %3416 = vmatpush.msra.mxu0 %v3052
        %3417 = vmatpush.msra.mxu0 %v3051
        %3418 = vmatpush.msra.mxu0 %v3050
        %3419 = vmatpush.msra.mxu0 %v3049
        %3420 = vmatpush.msra.mxu0 %v3048
        %3421 = vmatpush.msra.mxu0 %v3047
        %3422 = vmatpush.msra.mxu0 %v3046
        %3423 = vmatpush.msra.mxu0 %v3045
        %3424 = vmatpush.msra.mxu0 %v3044
        %3425 = vmatpush.msra.mxu0 %v3043
        %3426 = vmatpush.msra.mxu0 %v3042
        %3427 = vmatpush.msra.mxu0 %v3041
        %3428 = vmatmul.f32.gmra.mxu0 %v3337
        %v3429 = vpop.f32.mrf.mxu0
        %v3430 = vadd.f32 %v3407, %v3429
        %3431 = vmatmul.f32.gmra.mxu0 %v3341
        %v3432 = vpop.f32.mrf.mxu0
        %v3433 = vadd.f32 %v3410, %v3432
        %3434 = vdwg.mxu0
        %3435 = vmatpush.msra.mxu0 %v3072
        %3436 = vmatpush.msra.mxu0 %v3071
        %3437 = vmatpush.msra.mxu0 %v3070
        %3438 = vmatpush.msra.mxu0 %v3069
        %3439 = vmatpush.msra.mxu0 %v3068
        %3440 = vmatpush.msra.mxu0 %v3067
        %3441 = vmatpush.msra.mxu0 %v3066
        %3442 = vmatpush.msra.mxu0 %v3065
        %3443 = vmatpush.msra.mxu0 %v3064
        %3444 = vmatpush.msra.mxu0 %v3063
        %3445 = vmatpush.msra.mxu0 %v3062
        %3446 = vmatpush.msra.mxu0 %v3061
        %3447 = vmatpush.msra.mxu0 %v3060
        %3448 = vmatpush.msra.mxu0 %v3059
        %3449 = vmatpush.msra.mxu0 %v3058
        %3450 = vmatpush.msra.mxu0 %v3057
        %3451 = vmatmul.f32.gmra.mxu0 %v3338
        %v3452 = vpop.f32.mrf.mxu0
        %v3453 = vadd.f32 %v3430, %v3452
        %3454 = vmatmul.f32.gmra.mxu0 %v3342
        %v3455 = vpop.f32.mrf.mxu0
        %v3456 = vadd.f32 %v3433, %v3455
        %3457 = vdwg.mxu0
        %v3458 = vadd.f32 %v2985, %v3453
        %v3459 = vadd.f32 %v2986, %v3456
        %v3460 = vld [vmem:[%s31] sm:$0x1]
        %v3461 = vld [vmem:[%s33] sm:$0x1]
        %v3462 = vsel %vm1314, %v3458, 0.0
        %3463 = vadd.xlane.f32.xlu0 %v3462
        %v3464 = vpop.xlane.xlu0 %3463
        %v3465 = vsel %vm2935, %v3459, 0.0
        %3466 = vadd.xlane.f32.xlu0 %v3465
        %v3467 = vpop.xlane.xlu0 %3466
        %v3468 = vmul.f32 %v3464, %v1815
        %v3469 = vmul.f32 %v3467, %v1815
        %v3470 = vsub.f32 %v3458, %v3468
        %v3471 = vsub.f32 %v3459, %v3469
        %v3472 = vmul.f32 %v3470, %v3470
        %v3473 = vmul.f32 %v3471, %v3471
        %v3474 = vsel %vm1314, %v3472, 0.0
        %3475 = vadd.xlane.f32.xlu0 %v3474
        %v3476 = vpop.xlane.xlu0 %3475
        %v3477 = vsel %vm2935, %v3473, 0.0
        %3478 = vadd.xlane.f32.xlu0 %v3477
        %v3479 = vpop.xlane.xlu0 %3478
        %v3480 = vmul.f32 %v3476, %v1815
        %v3481 = vmul.f32 %v3479, %v1815
        %v3482 = vadd.f32 %v3480, 1e-05
        %v3483 = vadd.f32 %v3481, 1e-05
        %v3484 = vrsqrt.pop %v3482
        %v3485 = vmul.f32 %v3484, %v3482
        %v3486 = vmul.f32 %v3485, %v3484
        %v3487 = vmul.f32 0.5, %v3486
        %v3488 = vsub.f32 1.5, %v3487
        %v3489 = vmul.f32 %v3484, %v3488
        %vm3490 = vweird.f32 %v3482
        %vm3491 = vweird.f32 %v3484
        %vm3492 = vmor %vm3490, %vm3491
        %v3493 = vsel %vm3492, %v3484, %v3489
        %v3494 = vrsqrt.pop %v3483
        %v3495 = vmul.f32 %v3494, %v3483
        %v3496 = vmul.f32 %v3495, %v3494
        %v3497 = vmul.f32 0.5, %v3496
        %v3498 = vsub.f32 1.5, %v3497
        %v3499 = vmul.f32 %v3494, %v3498
        %vm3500 = vweird.f32 %v3483
        %vm3501 = vweird.f32 %v3494
        %vm3502 = vmor %vm3500, %vm3501
        %v3503 = vsel %vm3502, %v3494, %v3499
        %v3504 = vmul.f32 %v3470, %v3493
        %v3505 = vmul.f32 %v3471, %v3503
        %v3507 = vperm.slane %v3460, 0
        %v3509 = vmul.f32 %v3504, %v3507
        %v3510 = vmul.f32 %v3505, %v3507
        %v3512 = vperm.slane %v3461, 0
        %v3514 = vadd.f32 %v3509, %v3512
        %v3515 = vadd.f32 %v3510, %v3512
        %3516 = vst.msk [vmem:[%s1230] sm:$0xff] %vm1314, %v3514
        %3517 = vst.msk [vmem:[%s1230 + $0x8] sm:$0xf] %vm2935, %v3515
        %s3518 = sand.u32 %s915, 1
        %s3519 = scalar_lea.sflag [#allocation3], %s3518
        %s3520 = sand.u32 %s915, 1
        %s3521 = smul.addr %s3520, 8
        %s3522 = scalar_lea.vmem [#allocation2], %s3521
        %p3523 = scmp.lt.s32.totalorder %s94, 1
        %s3524 = scalar_select %p3523, %s94, 1
        %s3525 = smul.addr %s3524, 2
        %s3526 = smul.addr %s3525, 8
        %s3527 = scalar_lea.vmem %s79, %s3526
        // Predicated region
        $region173: #{tpu_custom_call.1} parent=171 // pred_check
          %p3528 = pneg %p925
        $region174: #{tpu_custom_call.1} parent=171 // pred_check_branch
          %3530 = sbr.rel (%p3528) target = $region176
        $region175: #{tpu_custom_call.1} parent=171 // pred_region
          %3532 = vsyncadd %s3519, 0
          %s3533 = smul.addr %s94, 8
          %s3534 = scalar_lea.hbm %s77, %s3533
          %s3536 = sshll.u32 %s3522, 4
          %s3537 = int_to_ptr.vmem [resolvable:$true] %s3536
          %s3538 = sshll.u32 %s3534, 4
          %s3539 = int_to_ptr.hbm [resolvable:$true] %s3538
          %3541 = dma.vmem_to_hbm [thread:$0]  %s3537, 128, %s3539, %s3519
        $region176: #{tpu_custom_call.1} parent=171 // pred_fallthru
          _
        // Predicated region
        $region177: #{tpu_custom_call.1} parent=171 // pred_check
          %p3542 = pneg %p951
        $region178: #{tpu_custom_call.1} parent=171 // pred_check_branch
          %3544 = sbr.rel (%p3542) target = $region180
        $region179: #{tpu_custom_call.1} parent=171 // pred_region
          _
        $region180: #{tpu_custom_call.1} parent=171 // pred_fallthru
          _
      $region172: #{tpu_custom_call.1} parent=5 // pred_fallthru
        _
      %p3545 = scmp.le.s32.totalorder 2, %s89
      // Predicated region
      $region181: #{tpu_custom_call.1} parent=5 // pred_check
        %p3546 = pneg %p3545
      $region182: #{tpu_custom_call.1} parent=5 // pred_check_branch
        %3548 = sbr.rel (%p3546) target = $region184
      $region183: #{tpu_custom_call.1} parent=5 // pred_region
        %s3549 = ssub.s32 %s89, 2
        // Predicated region
        $region185: #{tpu_custom_call.1} parent=183 // pred_check
          %p3550 = pneg %p931
        $region186: #{tpu_custom_call.1} parent=183 // pred_check_branch
          %3552 = sbr.rel (%p3550) target = $region188
        $region187: #{tpu_custom_call.1} parent=183 // pred_region
          %s3553 = sand.u32 %s916, 1
          %s3554 = scalar_lea.sflag [#allocation3], %s3553
          %s3555 = sand.u32 %s916, 1
          %s3556 = smul.addr %s3555, 8
          %s3557 = scalar_lea.vmem [#allocation2], %s3556
          %3559 = dma.done %s3554, 128
        $region188: #{tpu_custom_call.1} parent=183 // pred_fallthru
          _
        // Predicated region
        $region189: #{tpu_custom_call.1} parent=183 // pred_check
          %p3560 = pneg %p957
        $region190: #{tpu_custom_call.1} parent=183 // pred_check_branch
          %3562 = sbr.rel (%p3560) target = $region192
        $region191: #{tpu_custom_call.1} parent=183 // pred_region
          %p3563 = scmp.lt.s32.totalorder %s95, 1
          %s3564 = scalar_select %p3563, %s95, 1
          %s3565 = smul.addr %s3564, 2
          %s3566 = smul.addr %s3565, 8
          %s3567 = scalar_lea.vmem %s79, %s3566
        $region192: #{tpu_custom_call.1} parent=183 // pred_fallthru
          _
      $region184: #{tpu_custom_call.1} parent=5 // pred_fallthru
        _
    $region6: #{tpu_custom_call.1} parent=1 // loop_footer
      %s93 = sadd.s32 1, %s89
    $region7: #{tpu_custom_call.1} parent=1 // loop_footer_branch
      %88 = sbr.rel target = $region3
    $region8: #{tpu_custom_call.1} parent=1 // loop_exit
      _
    %3568 = vsyncpa [#allocation3], 1
    %s3569 = scalar_lea.sflag [#allocation3], 1
    %3570 = vsyncpa %s3569, 1

</llo_original>
